<compile_context>
chip_gen: v5e
topology: v5e:2x2
jax: 0.10.0
libtpu: 0.0.40
codegen_flags: <defaults>
</compile_context>

<pallas_src>
import jax
import jax.numpy as jnp
from jax.experimental import pallas as pl
from jax.experimental.pallas import tpu as pltpu

LANE = 128  # TPU lane width; output channels are padded to a multiple of this.


def _round_up(n: int, m: int) -> int:
    return ((n + m - 1) // m) * m


# --------------------------------------------------------------------------
# Fused ConvBlock kernel (one batch image per grid step)
# --------------------------------------------------------------------------
def conv_block_kernel(x_ref, w_ref, bias_ref, o_ref, xp_ref):
    """Fused Conv3x3(pad=1) + folded BatchNorm(eval) + ReLU + MaxPool2d(2).

    x_ref:    (1, H, W, Cin)        bf16 NHWC input block (one image)
    w_ref:    (9, Cin, Coutp)       bf16 conv taps with BN scale folded in
    bias_ref: (1, Coutp)            f32  scale*(conv_bias - mean) + beta (0 in pad lanes)
    o_ref:    (1, H//2, W//2, Coutp) f32 lane-dense pooled output block
    xp_ref:   (H+2, Wp, Cin)        bf16 VMEM halo scratch, Wp = roundup(W+2, 8)
    """
    _, H, W, Cin = x_ref.shape
    Coutp = w_ref.shape[-1]
    Wp = xp_ref.shape[1]
    Hh, Wh = H // 2, W // 2

    # ---- Zero only the 1-pixel halo ring, then copy the interior (bf16, no cast) ----
    zrow = jnp.zeros((1, Wp, Cin), xp_ref.dtype)
    xp_ref[0:1, :, :] = zrow
    xp_ref[H + 1:H + 2, :, :] = zrow
    zcol = jnp.zeros((H, 1, Cin), xp_ref.dtype)
    xp_ref[1:H + 1, 0:1, :] = zcol
    xp_ref[1:H + 1, W + 1:W + 2, :] = zcol
    xp_ref[1:H + 1, 1:W + 1, :] = x_ref[0]

    # ---- Conv: 9 accumulating MXU matmuls with K = Cin (no K padding, no im2col buffer) ----
    acc = jnp.zeros((H * W, Coutp), jnp.float32)
    for di in range(3):
        for dj in range(3):
            tap = xp_ref[di:di + H, dj:dj + W, :].reshape(H * W, Cin)
            acc = acc + jnp.dot(tap, w_ref[di * 3 + dj],
                                preferred_element_type=jnp.float32)

    # ---- Epilogue: bias (BN scale already folded into weights) + ReLU ----
    y = jnp.maximum(acc + bias_ref[...], 0.0)

    # ---- MaxPool2d(2): pool along W, then along H.  Row index is h*W + w ----
    y = jnp.max(y.reshape(H * Wh, 2, Coutp), axis=1)   # pool W (pairs w=2k,2k+1)
    y = jnp.max(y.reshape(Hh, 2, Wh, Coutp), axis=1)   # pool H (pairs h=2k,2k+1)
    o_ref[0] = y.astype(o_ref.dtype)


# --------------------------------------------------------------------------
# Wrapper (param folding, layout plumbing, pallas_call glue)
# --------------------------------------------------------------------------
def conv_block_forward(x_nchw, conv_w, conv_b, gamma, beta,
                       running_mean, running_var, eps=1e-5):
    """ConvBlock forward. x_nchw: (B, Cin, H, W). Returns (B, Cout, H//2, W//2) f32."""
    B, Cin, H, W = x_nchw.shape
    Cout = conv_w.shape[0]
    assert H % 2 == 0 and W % 2 == 0, "MaxPool2d(2) needs even spatial dims"

    cout_p = _round_up(Cout, LANE)
    w_pad = _round_up(W + 2, 8)          # sublane-aligned halo scratch width

    # Fold BatchNorm (eval) into a per-output-channel affine, and fold the scale
    # directly into the conv weights so the kernel epilogue is bias + ReLU only.
    scale = gamma / jnp.sqrt(running_var + eps)                       # (Cout,)
    bias = (scale * (conv_b - running_mean) + beta).astype(jnp.float32)

    w_folded = conv_w.astype(jnp.float32) * scale[:, None, None, None]  # (Cout,Cin,3,3)
    w_taps = jnp.transpose(w_folded, (2, 3, 1, 0))                      # (3,3,Cin,Cout)
    w_taps = jnp.pad(w_taps, ((0, 0), (0, 0), (0, 0), (0, cout_p - Cout)))
    w_taps = w_taps.reshape(9, Cin, cout_p).astype(jnp.bfloat16)        # (9,Cin,Coutp)

    bias_p = jnp.pad(bias, (0, cout_p - Cout)).reshape(1, cout_p)       # (1,Coutp) f32

    # NCHW (torch) -> NHWC (channels on lanes), bf16 to halve the HBM read.
    x_nhwc = jnp.transpose(x_nchw, (0, 2, 3, 1)).astype(jnp.bfloat16)

    flops = 2 * B * H * W * 9 * Cin * cout_p
    bytes_accessed = (x_nhwc.size * 2 + w_taps.size * 2 + cout_p * 4
                      + B * (H // 2) * (W // 2) * cout_p * 4)

    out = pl.pallas_call(
        conv_block_kernel,
        out_shape=jax.ShapeDtypeStruct((B, H // 2, W // 2, cout_p), jnp.float32),
        grid_spec=pltpu.PrefetchScalarGridSpec(
            num_scalar_prefetch=0,
            grid=(B,),
            in_specs=[
                pl.BlockSpec((1, H, W, Cin), lambda b: (b, 0, 0, 0)),     # x (per image)
                pl.BlockSpec((9, Cin, cout_p), lambda b: (0, 0, 0)),      # weights (resident)
                pl.BlockSpec((1, cout_p), lambda b: (0, 0)),              # bias (resident)
            ],
            out_specs=pl.BlockSpec((1, H // 2, W // 2, cout_p),
                                   lambda b: (b, 0, 0, 0)),
            scratch_shapes=[pltpu.VMEM((H + 2, w_pad, Cin), jnp.bfloat16)],
        ),
        compiler_params=pltpu.CompilerParams(
            dimension_semantics=("parallel",),
            vmem_limit_bytes=32 * 1024 * 1024,
        ),
        cost_estimate=pl.CostEstimate(flops=flops, transcendentals=0,
                                      bytes_accessed=bytes_accessed),
    )(x_nhwc, w_taps, bias_p)

    # Drop Cout lane padding and return NCHW like the torch module.
    return jnp.transpose(out[..., :Cout], (0, 3, 1, 2))


# --------------------------------------------------------------------------
# Pure-JAX reference (sanity check against the Pallas kernel)
# --------------------------------------------------------------------------
def _reference(x, conv_w, conv_b, gamma, beta, mean, var, eps=1e-5):
    y = jax.lax.conv_general_dilated(
        x, conv_w, window_strides=(1, 1), padding=((1, 1), (1, 1)),
        dimension_numbers=("NCHW", "OIHW", "NCHW"))
    y = y + conv_b.reshape(1, -1, 1, 1)
    y = (y - mean.reshape(1, -1, 1, 1)) / jnp.sqrt(var.reshape(1, -1, 1, 1) + eps)
    y = y * gamma.reshape(1, -1, 1, 1) + beta.reshape(1, -1, 1, 1)
    y = jnp.maximum(y, 0.0)
    return jax.lax.reduce_window(
        y, -jnp.inf, jax.lax.max,
        window_dimensions=(1, 1, 2, 2), window_strides=(1, 1, 2, 2),
        padding="VALID")


# --------------------------------------------------------------------------
if __name__ == "__main__":
    key = jax.random.PRNGKey(0)
    kx, kw, kb, kg, kbe, km, kv = jax.random.split(key, 7)

    B, CIN, H, W = 2, 4, 16, 16
    COUT = 32

    x = jax.random.normal(kx, (B, CIN, H, W), jnp.float32)
    conv_w = jax.random.normal(kw, (COUT, CIN, 3, 3), jnp.float32) * 0.2
    conv_b = jax.random.normal(kb, (COUT,), jnp.float32) * 0.1
    gamma = 1.0 + 0.1 * jax.random.normal(kg, (COUT,), jnp.float32)
    beta = 0.1 * jax.random.normal(kbe, (COUT,), jnp.float32)
    running_mean = 0.1 * jax.random.normal(km, (COUT,), jnp.float32)
    running_var = 1.0 + 0.1 * jax.random.uniform(kv, (COUT,), jnp.float32)

    fwd = jax.jit(conv_block_forward)
    out = fwd(x, conv_w, conv_b, gamma, beta, running_mean, running_var)
    jax.block_until_ready(out)

    assert out.shape == (B, COUT, H // 2, W // 2) and out.dtype == jnp.float32

    ref = _reference(x, conv_w, conv_b, gamma, beta, running_mean, running_var)
    max_err = float(jnp.max(jnp.abs(out - ref)))
    # NOTE: bf16 activations/weights in the matmul -> documented precision
    # deviation from the f32 torch module; 5e-2 abs tolerance covers it.
    assert max_err < 5e-2, f"max abs error too large: {max_err}"

    print("KERNEL_OK")
</pallas_src>

<mosaic_0001>
module attributes {stable_mosaic.version = 11 : i64} {
  func.func @conv_block_kernel(%arg0: i32, %arg1: memref<1x16x16x4xbf16, #tpu.memory_space<vmem>>, %arg2: memref<9x4x128xbf16, #tpu.memory_space<vmem>>, %arg3: memref<1x128xf32, #tpu.memory_space<vmem>>, %arg4: memref<1x8x8x128xf32, #tpu.memory_space<vmem>>, %arg5: memref<18x24x4xbf16, #tpu.memory_space<vmem>>) attributes {dimension_semantics = [#tpu.dimension_semantics<parallel>], iteration_bounds = array<i64: 2>, scalar_prefetch = 0 : i64, scratch_operands = 1 : i64, tpu.core_type = #tpu.core_type<tc>, window_params = [{transform_indices = @transform_0, window_bounds = array<i64: 1, 16, 16, 4>}, {pipeline_mode = #tpu.pipeline_mode<synchronous>, transform_indices = @transform_1, window_bounds = array<i64: 9, 4, 128>}, {pipeline_mode = #tpu.pipeline_mode<synchronous>, transform_indices = @transform_2, window_bounds = array<i64: 1, 128>}, {transform_indices = @transform_3, window_bounds = array<i64: 1, 8, 8, 128>}]} {
    %cst = arith.constant 0.000000e+00 : bf16
    %0 = vector.broadcast %cst : bf16 to vector<1x24x4xbf16>
    %c0 = arith.constant 0 : index
    %c0_0 = arith.constant 0 : index
    %c0_1 = arith.constant 0 : index
    %1 = vector.load %arg5[%c0, %c0_0, %c0_1] : memref<18x24x4xbf16, #tpu.memory_space<vmem>>, vector<1x24x4xbf16>
    tpu.vector_store %arg5[%c0, %c0_0, %c0_1], %0 {strides = array<i32>} : memref<18x24x4xbf16, #tpu.memory_space<vmem>>, vector<1x24x4xbf16>,
    %c17 = arith.constant 17 : index
    %c0_2 = arith.constant 0 : index
    %c0_3 = arith.constant 0 : index
    %2 = vector.load %arg5[%c17, %c0_2, %c0_3] : memref<18x24x4xbf16, #tpu.memory_space<vmem>>, vector<1x24x4xbf16>
    tpu.vector_store %arg5[%c17, %c0_2, %c0_3], %0 {strides = array<i32>} : memref<18x24x4xbf16, #tpu.memory_space<vmem>>, vector<1x24x4xbf16>,
    %cst_4 = arith.constant 0.000000e+00 : bf16
    %3 = vector.broadcast %cst_4 : bf16 to vector<16x1x4xbf16>
    %c1 = arith.constant 1 : index
    %c0_5 = arith.constant 0 : index
    %c0_6 = arith.constant 0 : index
    %4 = vector.load %arg5[%c1, %c0_5, %c0_6] : memref<18x24x4xbf16, #tpu.memory_space<vmem>>, vector<16x1x4xbf16>
    tpu.vector_store %arg5[%c1, %c0_5, %c0_6], %3 {strides = array<i32>} : memref<18x24x4xbf16, #tpu.memory_space<vmem>>, vector<16x1x4xbf16>,
    %c1_7 = arith.constant 1 : index
    %c17_8 = arith.constant 17 : index
    %c0_9 = arith.constant 0 : index
    %5 = vector.load %arg5[%c1_7, %c17_8, %c0_9] : memref<18x24x4xbf16, #tpu.memory_space<vmem>>, vector<16x1x4xbf16>
    tpu.vector_store %arg5[%c1_7, %c17_8, %c0_9], %3 {strides = array<i32>} : memref<18x24x4xbf16, #tpu.memory_space<vmem>>, vector<16x1x4xbf16>,
    %c0_10 = arith.constant 0 : index
    %c0_11 = arith.constant 0 : index
    %c0_12 = arith.constant 0 : index
    %c0_13 = arith.constant 0 : index
    %6 = vector.load %arg1[%c0_10, %c0_11, %c0_12, %c0_13] : memref<1x16x16x4xbf16, #tpu.memory_space<vmem>>, vector<1x16x16x4xbf16>
    %7 = vector.shape_cast %6 : vector<1x16x16x4xbf16> to vector<16x16x4xbf16>
    %c1_14 = arith.constant 1 : index
    %c1_15 = arith.constant 1 : index
    %c0_16 = arith.constant 0 : index
    %8 = vector.load %arg5[%c1_14, %c1_15, %c0_16] : memref<18x24x4xbf16, #tpu.memory_space<vmem>>, vector<16x16x4xbf16>
    tpu.vector_store %arg5[%c1_14, %c1_15, %c0_16], %7 {strides = array<i32>} : memref<18x24x4xbf16, #tpu.memory_space<vmem>>, vector<16x16x4xbf16>,
    %cst_17 = arith.constant 0.000000e+00 : f32
    %9 = vector.broadcast %cst_17 : f32 to vector<256x128xf32>
    %c0_18 = arith.constant 0 : index
    %c0_19 = arith.constant 0 : index
    %c0_20 = arith.constant 0 : index
    %10 = vector.load %arg5[%c0_18, %c0_19, %c0_20] : memref<18x24x4xbf16, #tpu.memory_space<vmem>>, vector<16x16x4xbf16>
    %11 = vector.shape_cast %10 : vector<16x16x4xbf16> to vector<256x4xbf16>
    %c0_21 = arith.constant 0 : index
    %c0_22 = arith.constant 0 : index
    %c0_23 = arith.constant 0 : index
    %12 = vector.load %arg2[%c0_21, %c0_22, %c0_23] : memref<9x4x128xbf16, #tpu.memory_space<vmem>>, vector<1x4x128xbf16>
    %13 = vector.shape_cast %12 : vector<1x4x128xbf16> to vector<4x128xbf16>
    %cst_24 = arith.constant dense<0.000000e+00> : vector<256x128xf32>
    %14 = tpu.matmul %11, %13, %cst_24 {dimension_numbers = #tpu.dot_dimension_numbers<[1], [0], [0], [1], [0, 0, 1, 1], [], []>} : vector<256x4xbf16>, vector<4x128xbf16>, vector<256x128xf32> -> vector<256x128xf32>
    %15 = arith.addf %9, %14 : vector<256x128xf32>
    %c0_25 = arith.constant 0 : index
    %c1_26 = arith.constant 1 : index
    %c0_27 = arith.constant 0 : index
    %16 = vector.load %arg5[%c0_25, %c1_26, %c0_27] : memref<18x24x4xbf16, #tpu.memory_space<vmem>>, vector<16x16x4xbf16>
    %17 = vector.shape_cast %16 : vector<16x16x4xbf16> to vector<256x4xbf16>
    %c1_28 = arith.constant 1 : index
    %c0_29 = arith.constant 0 : index
    %c0_30 = arith.constant 0 : index
    %18 = vector.load %arg2[%c1_28, %c0_29, %c0_30] : memref<9x4x128xbf16, #tpu.memory_space<vmem>>, vector<1x4x128xbf16>
    %19 = vector.shape_cast %18 : vector<1x4x128xbf16> to vector<4x128xbf16>
    %cst_31 = arith.constant dense<0.000000e+00> : vector<256x128xf32>
    %20 = tpu.matmul %17, %19, %cst_31 {dimension_numbers = #tpu.dot_dimension_numbers<[1], [0], [0], [1], [0, 0, 1, 1], [], []>} : vector<256x4xbf16>, vector<4x128xbf16>, vector<256x128xf32> -> vector<256x128xf32>
    %21 = arith.addf %15, %20 : vector<256x128xf32>
    %c0_32 = arith.constant 0 : index
    %c2 = arith.constant 2 : index
    %c0_33 = arith.constant 0 : index
    %22 = vector.load %arg5[%c0_32, %c2, %c0_33] : memref<18x24x4xbf16, #tpu.memory_space<vmem>>, vector<16x16x4xbf16>
    %23 = vector.shape_cast %22 : vector<16x16x4xbf16> to vector<256x4xbf16>
    %c2_34 = arith.constant 2 : index
    %c0_35 = arith.constant 0 : index
    %c0_36 = arith.constant 0 : index
    %24 = vector.load %arg2[%c2_34, %c0_35, %c0_36] : memref<9x4x128xbf16, #tpu.memory_space<vmem>>, vector<1x4x128xbf16>
    %25 = vector.shape_cast %24 : vector<1x4x128xbf16> to vector<4x128xbf16>
    %cst_37 = arith.constant dense<0.000000e+00> : vector<256x128xf32>
    %26 = tpu.matmul %23, %25, %cst_37 {dimension_numbers = #tpu.dot_dimension_numbers<[1], [0], [0], [1], [0, 0, 1, 1], [], []>} : vector<256x4xbf16>, vector<4x128xbf16>, vector<256x128xf32> -> vector<256x128xf32>
    %27 = arith.addf %21, %26 : vector<256x128xf32>
    %c1_38 = arith.constant 1 : index
    %c0_39 = arith.constant 0 : index
    %c0_40 = arith.constant 0 : index
    %28 = vector.load %arg5[%c1_38, %c0_39, %c0_40] : memref<18x24x4xbf16, #tpu.memory_space<vmem>>, vector<16x16x4xbf16>
    %29 = vector.shape_cast %28 : vector<16x16x4xbf16> to vector<256x4xbf16>
    %c3 = arith.constant 3 : index
    %c0_41 = arith.constant 0 : index
    %c0_42 = arith.constant 0 : index
    %30 = vector.load %arg2[%c3, %c0_41, %c0_42] : memref<9x4x128xbf16, #tpu.memory_space<vmem>>, vector<1x4x128xbf16>
    %31 = vector.shape_cast %30 : vector<1x4x128xbf16> to vector<4x128xbf16>
    %cst_43 = arith.constant dense<0.000000e+00> : vector<256x128xf32>
    %32 = tpu.matmul %29, %31, %cst_43 {dimension_numbers = #tpu.dot_dimension_numbers<[1], [0], [0], [1], [0, 0, 1, 1], [], []>} : vector<256x4xbf16>, vector<4x128xbf16>, vector<256x128xf32> -> vector<256x128xf32>
    %33 = arith.addf %27, %32 : vector<256x128xf32>
    %c1_44 = arith.constant 1 : index
    %c1_45 = arith.constant 1 : index
    %c0_46 = arith.constant 0 : index
    %34 = vector.load %arg5[%c1_44, %c1_45, %c0_46] : memref<18x24x4xbf16, #tpu.memory_space<vmem>>, vector<16x16x4xbf16>
    %35 = vector.shape_cast %34 : vector<16x16x4xbf16> to vector<256x4xbf16>
    %c4 = arith.constant 4 : index
    %c0_47 = arith.constant 0 : index
    %c0_48 = arith.constant 0 : index
    %36 = vector.load %arg2[%c4, %c0_47, %c0_48] : memref<9x4x128xbf16, #tpu.memory_space<vmem>>, vector<1x4x128xbf16>
    %37 = vector.shape_cast %36 : vector<1x4x128xbf16> to vector<4x128xbf16>
    %cst_49 = arith.constant dense<0.000000e+00> : vector<256x128xf32>
    %38 = tpu.matmul %35, %37, %cst_49 {dimension_numbers = #tpu.dot_dimension_numbers<[1], [0], [0], [1], [0, 0, 1, 1], [], []>} : vector<256x4xbf16>, vector<4x128xbf16>, vector<256x128xf32> -> vector<256x128xf32>
    %39 = arith.addf %33, %38 : vector<256x128xf32>
    %c1_50 = arith.constant 1 : index
    %c2_51 = arith.constant 2 : index
    %c0_52 = arith.constant 0 : index
    %40 = vector.load %arg5[%c1_50, %c2_51, %c0_52] : memref<18x24x4xbf16, #tpu.memory_space<vmem>>, vector<16x16x4xbf16>
    %41 = vector.shape_cast %40 : vector<16x16x4xbf16> to vector<256x4xbf16>
    %c5 = arith.constant 5 : index
    %c0_53 = arith.constant 0 : index
    %c0_54 = arith.constant 0 : index
    %42 = vector.load %arg2[%c5, %c0_53, %c0_54] : memref<9x4x128xbf16, #tpu.memory_space<vmem>>, vector<1x4x128xbf16>
    %43 = vector.shape_cast %42 : vector<1x4x128xbf16> to vector<4x128xbf16>
    %cst_55 = arith.constant dense<0.000000e+00> : vector<256x128xf32>
    %44 = tpu.matmul %41, %43, %cst_55 {dimension_numbers = #tpu.dot_dimension_numbers<[1], [0], [0], [1], [0, 0, 1, 1], [], []>} : vector<256x4xbf16>, vector<4x128xbf16>, vector<256x128xf32> -> vector<256x128xf32>
    %45 = arith.addf %39, %44 : vector<256x128xf32>
    %c2_56 = arith.constant 2 : index
    %c0_57 = arith.constant 0 : index
    %c0_58 = arith.constant 0 : index
    %46 = vector.load %arg5[%c2_56, %c0_57, %c0_58] : memref<18x24x4xbf16, #tpu.memory_space<vmem>>, vector<16x16x4xbf16>
    %47 = vector.shape_cast %46 : vector<16x16x4xbf16> to vector<256x4xbf16>
    %c6 = arith.constant 6 : index
    %c0_59 = arith.constant 0 : index
    %c0_60 = arith.constant 0 : index
    %48 = vector.load %arg2[%c6, %c0_59, %c0_60] : memref<9x4x128xbf16, #tpu.memory_space<vmem>>, vector<1x4x128xbf16>
    %49 = vector.shape_cast %48 : vector<1x4x128xbf16> to vector<4x128xbf16>
    %cst_61 = arith.constant dense<0.000000e+00> : vector<256x128xf32>
    %50 = tpu.matmul %47, %49, %cst_61 {dimension_numbers = #tpu.dot_dimension_numbers<[1], [0], [0], [1], [0, 0, 1, 1], [], []>} : vector<256x4xbf16>, vector<4x128xbf16>, vector<256x128xf32> -> vector<256x128xf32>
    %51 = arith.addf %45, %50 : vector<256x128xf32>
    %c2_62 = arith.constant 2 : index
    %c1_63 = arith.constant 1 : index
    %c0_64 = arith.constant 0 : index
    %52 = vector.load %arg5[%c2_62, %c1_63, %c0_64] : memref<18x24x4xbf16, #tpu.memory_space<vmem>>, vector<16x16x4xbf16>
    %53 = vector.shape_cast %52 : vector<16x16x4xbf16> to vector<256x4xbf16>
    %c7 = arith.constant 7 : index
    %c0_65 = arith.constant 0 : index
    %c0_66 = arith.constant 0 : index
    %54 = vector.load %arg2[%c7, %c0_65, %c0_66] : memref<9x4x128xbf16, #tpu.memory_space<vmem>>, vector<1x4x128xbf16>
    %55 = vector.shape_cast %54 : vector<1x4x128xbf16> to vector<4x128xbf16>
    %cst_67 = arith.constant dense<0.000000e+00> : vector<256x128xf32>
    %56 = tpu.matmul %53, %55, %cst_67 {dimension_numbers = #tpu.dot_dimension_numbers<[1], [0], [0], [1], [0, 0, 1, 1], [], []>} : vector<256x4xbf16>, vector<4x128xbf16>, vector<256x128xf32> -> vector<256x128xf32>
    %57 = arith.addf %51, %56 : vector<256x128xf32>
    %c2_68 = arith.constant 2 : index
    %c2_69 = arith.constant 2 : index
    %c0_70 = arith.constant 0 : index
    %58 = vector.load %arg5[%c2_68, %c2_69, %c0_70] : memref<18x24x4xbf16, #tpu.memory_space<vmem>>, vector<16x16x4xbf16>
    %59 = vector.shape_cast %58 : vector<16x16x4xbf16> to vector<256x4xbf16>
    %c8 = arith.constant 8 : index
    %c0_71 = arith.constant 0 : index
    %c0_72 = arith.constant 0 : index
    %60 = vector.load %arg2[%c8, %c0_71, %c0_72] : memref<9x4x128xbf16, #tpu.memory_space<vmem>>, vector<1x4x128xbf16>
    %61 = vector.shape_cast %60 : vector<1x4x128xbf16> to vector<4x128xbf16>
    %cst_73 = arith.constant dense<0.000000e+00> : vector<256x128xf32>
    %62 = tpu.matmul %59, %61, %cst_73 {dimension_numbers = #tpu.dot_dimension_numbers<[1], [0], [0], [1], [0, 0, 1, 1], [], []>} : vector<256x4xbf16>, vector<4x128xbf16>, vector<256x128xf32> -> vector<256x128xf32>
    %63 = arith.addf %57, %62 : vector<256x128xf32>
    %c0_74 = arith.constant 0 : index
    %c0_75 = arith.constant 0 : index
    %64 = vector.load %arg3[%c0_74, %c0_75] : memref<1x128xf32, #tpu.memory_space<vmem>>, vector<1x128xf32>
    %65 = vector.broadcast %64 : vector<1x128xf32> to vector<256x128xf32>
    %66 = arith.addf %63, %65 : vector<256x128xf32>
    %cst_76 = arith.constant 0.000000e+00 : f32
    %67 = vector.broadcast %cst_76 : f32 to vector<256x128xf32>
    %68 = arith.maximumf %66, %67 : vector<256x128xf32>
    %69 = vector.shape_cast %68 : vector<256x128xf32> to vector<128x2x128xf32>
    %cst_77 = arith.constant dense<0xFF800000> : vector<128x128xf32>
    %70 = vector.multi_reduction <maximumf>, %69, %cst_77 [1] : vector<128x2x128xf32> to vector<128x128xf32>
    %71 = vector.shape_cast %70 : vector<128x128xf32> to vector<8x2x8x128xf32>
    %cst_78 = arith.constant dense<0xFF800000> : vector<8x8x128xf32>
    %72 = vector.multi_reduction <maximumf>, %71, %cst_78 [1] : vector<8x2x8x128xf32> to vector<8x8x128xf32>
    %c0_79 = arith.constant 0 : index
    %c0_80 = arith.constant 0 : index
    %c0_81 = arith.constant 0 : index
    %c0_82 = arith.constant 0 : index
    %73 = vector.load %arg4[%c0_79, %c0_80, %c0_81, %c0_82] : memref<1x8x8x128xf32, #tpu.memory_space<vmem>>, vector<1x8x8x128xf32>
    %74 = vector.shape_cast %73 : vector<1x8x8x128xf32> to vector<8x8x128xf32>
    %75 = vector.shape_cast %72 : vector<8x8x128xf32> to vector<1x8x8x128xf32>
    tpu.vector_store %arg4[%c0_79, %c0_80, %c0_81, %c0_82], %75 {strides = array<i32>} : memref<1x8x8x128xf32, #tpu.memory_space<vmem>>, vector<1x8x8x128xf32>,
    return
  }
  func.func @transform_0(%arg0: i32) -> (i32, i32, i32, i32) {
    %c0_i32 = arith.constant 0 : i32
    %c0_i32_0 = arith.constant 0 : i32
    %c0_i32_1 = arith.constant 0 : i32
    %c0_i32_2 = arith.constant 0 : i32
    return %arg0, %c0_i32, %c0_i32_0, %c0_i32_1 : i32, i32, i32, i32
  }
  func.func @transform_1(%arg0: i32) -> (i32, i32, i32) {
    %c0_i32 = arith.constant 0 : i32
    %c0_i32_0 = arith.constant 0 : i32
    %c0_i32_1 = arith.constant 0 : i32
    %c0_i32_2 = arith.constant 0 : i32
    return %c0_i32, %c0_i32_0, %c0_i32_1 : i32, i32, i32
  }
  func.func @transform_2(%arg0: i32) -> (i32, i32) {
    %c0_i32 = arith.constant 0 : i32
    %c0_i32_0 = arith.constant 0 : i32
    %c0_i32_1 = arith.constant 0 : i32
    return %c0_i32, %c0_i32_0 : i32, i32
  }
  func.func @transform_3(%arg0: i32) -> (i32, i32, i32, i32) {
    %c0_i32 = arith.constant 0 : i32
    %c0_i32_0 = arith.constant 0 : i32
    %c0_i32_1 = arith.constant 0 : i32
    %c0_i32_2 = arith.constant 0 : i32
    return %arg0, %c0_i32, %c0_i32_0, %c0_i32_1 : i32, i32, i32, i32
  }
}

</mosaic_0001>

<llo_original>
// kernel: conv_block_forward.1
$region0: #{conv_block_forward.1}
  #allocation0 [shape = 'u32[]', space=smem, size = 0x4, offset = 0x4, fixed_abs, tag = 'smem constant byte address 0x4 - core index']
  #allocation1 [shape = 'u32[72,128]{1,0:T(1,128)}', space=vmem, size = 0x9000, scoped, tag = 'internal scratch']
  #allocation2 [shape = 'bf16[18,24,4]{2,1,0:T(8,128)(2,1)}', space=vmem, size = 0x1b000, scoped, tag = 'scratch operand']
  %s0 = inlined_call_operand.vmem [shape: bf16[2,16,16,4], index: 0, kind: input, shape index: {}]
  %s1 = inlined_call_operand.vmem [shape: bf16[9,4,128], index: 1, kind: input, shape index: {}]
  %s2 = inlined_call_operand.vmem [shape: f32[1,128], index: 2, kind: input, shape index: {}]
  %s3 = inlined_call_operand.vmem [shape: f32[2,8,8,128], index: 3, kind: output, shape index: {}]
  %s4 = sld [smem:[#allocation0]]
  $region45: #{conv_block_forward.1} parent=0
    _
  %s6 = ssub.s32 1, %s4
  %s7 = scalar_select 0, %s6, %s4
  loop: start=0, step=1, limit=4
  $region2: #{conv_block_forward.1} parent=0 // loop_pre_header
    _
  $region3: #{conv_block_forward.1} parent=0 // loop_header
    %s9 = sphi 0, %s13
    %p10 = scmp.ge.s32.totalorder %s9, 4
    %s19 = sphi 0, %s21
    %s22 = sphi 0, %s19
    %s23 = sphi 0, %s22
    %s39 = sphi 0, %s23
    %s43 = sphi 0, %s43
    %s45 = sphi 0, %s43
    %s46 = sphi 0, %s45
    %s60 = sphi 0, %s46
    %s64 = sphi 0, %s64
    %s66 = sphi 0, %s64
    %s67 = sphi 0, %s66
    %s81 = sphi 0, %s67
    %s87 = sphi 0, %s89
    %s90 = sphi 0, %s87
    %s91 = sphi 0, %s90
    %s107 = sphi 0, %s91
  $region4: #{conv_block_forward.1} parent=0 // loop_header_branch
    %12 = sbr.rel (%p10) target = $region8
  $region5: #{conv_block_forward.1} parent=0 // loop_body
    %s14 = ssub.s32 %s9, 1
    %s15 = ssub.s32 %s9, 2
    %s16 = sadd.s32 %s9, 1
    %s17 = ssub.s32 %s9, %s16
    %p18 = scmp.eq.s32.totalorder %s17, 0
    %s20 = sadd.s32 %s19, 1
    %s21 = scalar_select %p18, %s19, %s20
    %p24 = pneg %p18
    %p25 = scmp.eq.s32.totalorder %s9, 1
    %p26 = por %p24, %p25
    %p27 = scmp.ne.s32.totalorder %s19, %s22
    %p28 = scmp.eq.s32.totalorder %s9, 0
    %p29 = por %p27, %p28
    %p30 = scmp.ne.s32.totalorder %s19, %s22
    %p31 = scmp.eq.s32.totalorder %s14, 1
    %p32 = por %p30, %p31
    %p33 = scmp.ne.s32.totalorder %s22, %s23
    %p34 = scmp.eq.s32.totalorder %s14, 0
    %p35 = por %p33, %p34
    %p36 = scmp.ne.s32.totalorder %s22, %s23
    %p37 = scmp.eq.s32.totalorder %s15, 1
    %p38 = por %p36, %p37
    %p40 = scmp.ne.s32.totalorder %s23, %s39
    %p41 = scmp.eq.s32.totalorder %s15, 0
    %p42 = por %p40, %p41
    %s44 = sadd.s32 %s43, 1
    %p47 = scmp.eq.s32.totalorder %s9, 1
    %p48 = scmp.ne.s32.totalorder %s43, %s45
    %p49 = scmp.eq.s32.totalorder %s9, 0
    %p50 = por %p48, %p49
    %p51 = scmp.ne.s32.totalorder %s43, %s45
    %p52 = scmp.eq.s32.totalorder %s14, 1
    %p53 = por %p51, %p52
    %p54 = scmp.ne.s32.totalorder %s45, %s46
    %p55 = scmp.eq.s32.totalorder %s14, 0
    %p56 = por %p54, %p55
    %p57 = scmp.ne.s32.totalorder %s45, %s46
    %p58 = scmp.eq.s32.totalorder %s15, 1
    %p59 = por %p57, %p58
    %p61 = scmp.ne.s32.totalorder %s46, %s60
    %p62 = scmp.eq.s32.totalorder %s15, 0
    %p63 = por %p61, %p62
    %s65 = sadd.s32 %s64, 1
    %p68 = scmp.eq.s32.totalorder %s9, 1
    %p69 = scmp.ne.s32.totalorder %s64, %s66
    %p70 = scmp.eq.s32.totalorder %s9, 0
    %p71 = por %p69, %p70
    %p72 = scmp.ne.s32.totalorder %s64, %s66
    %p73 = scmp.eq.s32.totalorder %s14, 1
    %p74 = por %p72, %p73
    %p75 = scmp.ne.s32.totalorder %s66, %s67
    %p76 = scmp.eq.s32.totalorder %s14, 0
    %p77 = por %p75, %p76
    %p78 = scmp.ne.s32.totalorder %s66, %s67
    %p79 = scmp.eq.s32.totalorder %s15, 1
    %p80 = por %p78, %p79
    %p82 = scmp.ne.s32.totalorder %s67, %s81
    %p83 = scmp.eq.s32.totalorder %s15, 0
    %p84 = por %p82, %p83
    %s85 = ssub.s32 %s9, %s16
    %p86 = scmp.eq.s32.totalorder %s85, 0
    %s88 = sadd.s32 %s87, 1
    %s89 = scalar_select %p86, %s87, %s88
    %p92 = pneg %p86
    %p93 = scmp.eq.s32.totalorder %s9, 1
    %p94 = por %p92, %p93
    %p95 = scmp.ne.s32.totalorder %s87, %s90
    %p96 = scmp.eq.s32.totalorder %s9, 0
    %p97 = por %p95, %p96
    %p98 = scmp.ne.s32.totalorder %s87, %s90
    %p99 = scmp.eq.s32.totalorder %s14, 1
    %p100 = por %p98, %p99
    %p101 = scmp.ne.s32.totalorder %s90, %s91
    %p102 = scmp.eq.s32.totalorder %s14, 0
    %p103 = por %p101, %p102
    %p104 = scmp.ne.s32.totalorder %s90, %s91
    %p105 = scmp.eq.s32.totalorder %s15, 1
    %p106 = por %p104, %p105
    %p108 = scmp.ne.s32.totalorder %s91, %s107
    %p109 = scmp.eq.s32.totalorder %s15, 0
    %p110 = por %p108, %p109
    %p111 = scmp.le.s32.totalorder 1, %s9
    %p112 = scmp.lt.s32.totalorder %s9, 3
    %p113 = pnand %p111, %p112
    %p114 = pneg %p113
    // Predicated region
    $region9: #{conv_block_forward.1} parent=5 // pred_check
      _
    $region10: #{conv_block_forward.1} parent=5 // pred_check_branch
      %116 = sbr.rel (%p113) target = $region12
    $region11: #{conv_block_forward.1} parent=5 // pred_region
      %s117 = ssub.s32 %s9, 1
      // Predicated region
      $region13: #{conv_block_forward.1} parent=11 // pred_check
        %p118 = pneg %p56
      $region14: #{conv_block_forward.1} parent=11 // pred_check_branch
        %120 = sbr.rel (%p118) target = $region16
      $region15: #{conv_block_forward.1} parent=11 // pred_region
        _
      $region16: #{conv_block_forward.1} parent=11 // pred_fallthru
        _
      // Predicated region
      $region17: #{conv_block_forward.1} parent=11 // pred_check
        %p121 = pneg %p77
      $region18: #{conv_block_forward.1} parent=11 // pred_check_branch
        %123 = sbr.rel (%p121) target = $region20
      $region19: #{conv_block_forward.1} parent=11 // pred_region
        _
      $region20: #{conv_block_forward.1} parent=11 // pred_fallthru
        _
    $region12: #{conv_block_forward.1} parent=5 // pred_fallthru
      _
    %p124 = scmp.lt.s32.totalorder %s9, 2
    // Predicated region
    $region21: #{conv_block_forward.1} parent=5 // pred_check
      %p125 = pneg %p124
    $region22: #{conv_block_forward.1} parent=5 // pred_check_branch
      %127 = sbr.rel (%p125) target = $region24
    $region23: #{conv_block_forward.1} parent=5 // pred_region
      // Predicated region
      $region25: #{conv_block_forward.1} parent=23 // pred_check
        %p128 = pneg %p29
      $region26: #{conv_block_forward.1} parent=23 // pred_check_branch
        %130 = sbr.rel (%p128) target = $region28
      $region27: #{conv_block_forward.1} parent=23 // pred_region
        %p131 = scmp.lt.s32.totalorder %s9, 1
        %s132 = scalar_select %p131, %s9, 1
        %s133 = smul.addr %s132, 32
        %s134 = smul.addr %s133, 4
        %s135 = scalar_lea.vmem %s0, %s134
      $region28: #{conv_block_forward.1} parent=23 // pred_fallthru
        _
    $region24: #{conv_block_forward.1} parent=5 // pred_fallthru
      _
    %p136 = scmp.le.s32.totalorder 1, %s9
    %p137 = scmp.lt.s32.totalorder %s9, 3
    %p138 = pnand %p136, %p137
    %p139 = pneg %p138
    // Predicated region
    $region29: #{conv_block_forward.1} parent=5 // pred_check
      _
    $region30: #{conv_block_forward.1} parent=5 // pred_check_branch
      %141 = sbr.rel (%p138) target = $region32
    $region31: #{conv_block_forward.1} parent=5 // pred_region
      %s142 = ssub.s32 %s9, 1
      %p143 = scmp.lt.s32.totalorder %s14, 1
      %s144 = scalar_select %p143, %s14, 1
      %s145 = smul.addr %s144, 32
      %s146 = smul.addr %s145, 4
      %s147 = scalar_lea.vmem %s0, %s146
      %p148 = pneg %p35
      %p149 = pneg %p32
      %p150 = pneg %p56
      %p151 = pneg %p53
      %p152 = pneg %p77
      %p153 = pneg %p74
      %p154 = pneg %p103
      %p155 = pneg %p100
      %p156 = scmp.lt.s32.totalorder %s14, 1
      %s157 = scalar_select %p156, %s14, 1
      %s158 = smul.addr %s157, 8
      %s159 = smul.addr %s158, 8
      %s160 = scalar_lea.vmem %s3, %s159
      %p161 = scmp.lt.s32.totalorder %s14, 1
      %s162 = scalar_select %p161, %s14, 1
      %s163 = smul.addr %s162, 32
      %s164 = smul.addr %s163, 4
      %s165 = scalar_lea.vmem %s0, %s164
      %p166 = scmp.lt.s32.totalorder %s14, 1
      %s167 = scalar_select %p166, %s14, 1
      %s168 = smul.addr %s167, 8
      %s169 = smul.addr %s168, 8
      %s170 = scalar_lea.vmem %s3, %s169
      %vm172 = vcmask 27648
      %173 = vst.msk [vmem:[#allocation2] sm:$0xf] %vm172, 0
      %174 = vst.msk [vmem:[#allocation2 + $0x4] sm:$0xf] %vm172, 0
      %175 = vst.msk [vmem:[#allocation2 + $0x8] sm:$0xf] %vm172, 0
      %s176 = scalar_lea.vmem [#allocation2], 204
      %177 = vst.msk [vmem:[%s176] sm:$0xf] %vm172, 0
      %178 = vst.msk [vmem:[%s176 + $0x4] sm:$0xf] %vm172, 0
      %179 = vst.msk [vmem:[%s176 + $0x8] sm:$0xf] %vm172, 0
      %s180 = scalar_lea.vmem [#allocation2], 12
      %vm181 = vcmask 24576
      %vm182 = vsmask.f32 256
      %vm183 = vmand %vm181, %vm182
      %v184 = vld [vmem:[%s180] sm:$0x1]
      %v185 = vsel %vm183, 0, %v184
      %186 = vst [vmem:[%s180] sm:$0x1] %v185
      %v187 = vld [vmem:[%s180 + $0xc] sm:$0x1]
      %v188 = vsel %vm183, 0, %v187
      %189 = vst [vmem:[%s180 + $0xc] sm:$0x1] %v188
      %v190 = vld [vmem:[%s180 + $0x18] sm:$0x1]
      %v191 = vsel %vm183, 0, %v190
      %192 = vst [vmem:[%s180 + $0x18] sm:$0x1] %v191
      %v193 = vld [vmem:[%s180 + $0x24] sm:$0x1]
      %v194 = vsel %vm183, 0, %v193
      %195 = vst [vmem:[%s180 + $0x24] sm:$0x1] %v194
      %v196 = vld [vmem:[%s180 + $0x30] sm:$0x1]
      %v197 = vsel %vm183, 0, %v196
      %198 = vst [vmem:[%s180 + $0x30] sm:$0x1] %v197
      %v199 = vld [vmem:[%s180 + $0x3c] sm:$0x1]
      %v200 = vsel %vm183, 0, %v199
      %201 = vst [vmem:[%s180 + $0x3c] sm:$0x1] %v200
      %v202 = vld [vmem:[%s180 + $0x48] sm:$0x1]
      %v203 = vsel %vm183, 0, %v202
      %204 = vst [vmem:[%s180 + $0x48] sm:$0x1] %v203
      %v205 = vld [vmem:[%s180 + $0x54] sm:$0x1]
      %v206 = vsel %vm183, 0, %v205
      %207 = vst [vmem:[%s180 + $0x54] sm:$0x1] %v206
      %v208 = vld [vmem:[%s180 + $0x60] sm:$0x1]
      %v209 = vsel %vm183, 0, %v208
      %210 = vst [vmem:[%s180 + $0x60] sm:$0x1] %v209
      %v211 = vld [vmem:[%s180 + $0x6c] sm:$0x1]
      %v212 = vsel %vm183, 0, %v211
      %213 = vst [vmem:[%s180 + $0x6c] sm:$0x1] %v212
      %v214 = vld [vmem:[%s180 + $0x78] sm:$0x1]
      %v215 = vsel %vm183, 0, %v214
      %216 = vst [vmem:[%s180 + $0x78] sm:$0x1] %v215
      %v217 = vld [vmem:[%s180 + $0x84] sm:$0x1]
      %v218 = vsel %vm183, 0, %v217
      %219 = vst [vmem:[%s180 + $0x84] sm:$0x1] %v218
      %v220 = vld [vmem:[%s180 + $0x90] sm:$0x1]
      %v221 = vsel %vm183, 0, %v220
      %222 = vst [vmem:[%s180 + $0x90] sm:$0x1] %v221
      %v223 = vld [vmem:[%s180 + $0x9c] sm:$0x1]
      %v224 = vsel %vm183, 0, %v223
      %225 = vst [vmem:[%s180 + $0x9c] sm:$0x1] %v224
      %v226 = vld [vmem:[%s180 + $0xa8] sm:$0x1]
      %v227 = vsel %vm183, 0, %v226
      %228 = vst [vmem:[%s180 + $0xa8] sm:$0x1] %v227
      %v229 = vld [vmem:[%s180 + $0xb4] sm:$0x1]
      %v230 = vsel %vm183, 0, %v229
      %231 = vst [vmem:[%s180 + $0xb4] sm:$0x1] %v230
      %vm232 = vsmask.f32 7938
      %vm233 = vmand %vm181, %vm232
      %v234 = vld [vmem:[%s180 + $0x8] sm:$0x1]
      %v235 = vsel %vm233, 0, %v234
      %236 = vst [vmem:[%s180 + $0x8] sm:$0x1] %v235
      %v237 = vld [vmem:[%s180 + $0x14] sm:$0x1]
      %v238 = vsel %vm233, 0, %v237
      %239 = vst [vmem:[%s180 + $0x14] sm:$0x1] %v238
      %v240 = vld [vmem:[%s180 + $0x20] sm:$0x1]
      %v241 = vsel %vm233, 0, %v240
      %242 = vst [vmem:[%s180 + $0x20] sm:$0x1] %v241
      %v243 = vld [vmem:[%s180 + $0x2c] sm:$0x1]
      %v244 = vsel %vm233, 0, %v243
      %245 = vst [vmem:[%s180 + $0x2c] sm:$0x1] %v244
      %v246 = vld [vmem:[%s180 + $0x38] sm:$0x1]
      %v247 = vsel %vm233, 0, %v246
      %248 = vst [vmem:[%s180 + $0x38] sm:$0x1] %v247
      %v249 = vld [vmem:[%s180 + $0x44] sm:$0x1]
      %v250 = vsel %vm233, 0, %v249
      %251 = vst [vmem:[%s180 + $0x44] sm:$0x1] %v250
      %v252 = vld [vmem:[%s180 + $0x50] sm:$0x1]
      %v253 = vsel %vm233, 0, %v252
      %254 = vst [vmem:[%s180 + $0x50] sm:$0x1] %v253
      %v255 = vld [vmem:[%s180 + $0x5c] sm:$0x1]
      %v256 = vsel %vm233, 0, %v255
      %257 = vst [vmem:[%s180 + $0x5c] sm:$0x1] %v256
      %v258 = vld [vmem:[%s180 + $0x68] sm:$0x1]
      %v259 = vsel %vm233, 0, %v258
      %260 = vst [vmem:[%s180 + $0x68] sm:$0x1] %v259
      %v261 = vld [vmem:[%s180 + $0x74] sm:$0x1]
      %v262 = vsel %vm233, 0, %v261
      %263 = vst [vmem:[%s180 + $0x74] sm:$0x1] %v262
      %v264 = vld [vmem:[%s180 + $0x80] sm:$0x1]
      %v265 = vsel %vm233, 0, %v264
      %266 = vst [vmem:[%s180 + $0x80] sm:$0x1] %v265
      %v267 = vld [vmem:[%s180 + $0x8c] sm:$0x1]
      %v268 = vsel %vm233, 0, %v267
      %269 = vst [vmem:[%s180 + $0x8c] sm:$0x1] %v268
      %v270 = vld [vmem:[%s180 + $0x98] sm:$0x1]
      %v271 = vsel %vm233, 0, %v270
      %272 = vst [vmem:[%s180 + $0x98] sm:$0x1] %v271
      %v273 = vld [vmem:[%s180 + $0xa4] sm:$0x1]
      %v274 = vsel %vm233, 0, %v273
      %275 = vst [vmem:[%s180 + $0xa4] sm:$0x1] %v274
      %v276 = vld [vmem:[%s180 + $0xb0] sm:$0x1]
      %v277 = vsel %vm233, 0, %v276
      %278 = vst [vmem:[%s180 + $0xb0] sm:$0x1] %v277
      %v279 = vld [vmem:[%s180 + $0xbc] sm:$0x1]
      %v280 = vsel %vm233, 0, %v279
      %281 = vst [vmem:[%s180 + $0xbc] sm:$0x1] %v280
      %v282 = vld [vmem:[%s165] sm:$0xf]
      %v283 = vld [vmem:[%s165 + $0x4] sm:$0xf]
      %v284 = vld [vmem:[%s165 + $0x8] sm:$0xf]
      %v285 = vld [vmem:[%s165 + $0xc] sm:$0xf]
      %v286 = vld [vmem:[%s165 + $0x10] sm:$0xf]
      %v287 = vld [vmem:[%s165 + $0x14] sm:$0xf]
      %v288 = vld [vmem:[%s165 + $0x18] sm:$0xf]
      %v289 = vld [vmem:[%s165 + $0x1c] sm:$0xf]
      %v290 = vld [vmem:[%s165 + $0x20] sm:$0xf]
      %v291 = vld [vmem:[%s165 + $0x24] sm:$0xf]
      %v292 = vld [vmem:[%s165 + $0x28] sm:$0xf]
      %v293 = vld [vmem:[%s165 + $0x2c] sm:$0xf]
      %v294 = vld [vmem:[%s165 + $0x30] sm:$0xf]
      %v295 = vld [vmem:[%s165 + $0x34] sm:$0xf]
      %v296 = vld [vmem:[%s165 + $0x38] sm:$0xf]
      %v297 = vld [vmem:[%s165 + $0x3c] sm:$0xf]
      %v298 = vld [vmem:[%s165 + $0x40] sm:$0xf]
      %v299 = vld [vmem:[%s165 + $0x44] sm:$0xf]
      %v300 = vld [vmem:[%s165 + $0x48] sm:$0xf]
      %v301 = vld [vmem:[%s165 + $0x4c] sm:$0xf]
      %v302 = vld [vmem:[%s165 + $0x50] sm:$0xf]
      %v303 = vld [vmem:[%s165 + $0x54] sm:$0xf]
      %v304 = vld [vmem:[%s165 + $0x58] sm:$0xf]
      %v305 = vld [vmem:[%s165 + $0x5c] sm:$0xf]
      %v306 = vld [vmem:[%s165 + $0x60] sm:$0xf]
      %v307 = vld [vmem:[%s165 + $0x64] sm:$0xf]
      %v308 = vld [vmem:[%s165 + $0x68] sm:$0xf]
      %v309 = vld [vmem:[%s165 + $0x6c] sm:$0xf]
      %v310 = vld [vmem:[%s165 + $0x70] sm:$0xf]
      %v311 = vld [vmem:[%s165 + $0x74] sm:$0xf]
      %v312 = vld [vmem:[%s165 + $0x78] sm:$0xf]
      %v313 = vld [vmem:[%s165 + $0x7c] sm:$0xf]
      %vm314 = vsmask.f32 4368
      %vm315 = vmor %vm182, %vm314
      %v317 = vshrl.u32 %v282, 16
      %v319 = vrot.slane %v317, 7
      %v320 = vshll.u32 %v282, 16
      %v322 = vor.u32 %v319, %v320
      %v323 = vrot.slane %v319, 4
      %v325 = vshrl.u32 %v283, 16
      %v327 = vrot.slane %v325, 7
      %v328 = vshll.u32 %v283, 16
      %v330 = vor.u32 %v327, %v328
      %v331 = vsel %vm315, %v323, %v330
      %v332 = vrot.slane %v327, 4
      %v334 = vshrl.u32 %v284, 16
      %v336 = vrot.slane %v334, 7
      %v337 = vshll.u32 %v284, 16
      %v339 = vor.u32 %v336, %v337
      %v340 = vrot.slane %v336, 4
      %v342 = vshrl.u32 %v285, 16
      %v344 = vrot.slane %v342, 7
      %v345 = vshll.u32 %v285, 16
      %v347 = vor.u32 %v344, %v345
      %v348 = vsel %vm315, %v340, %v347
      %v349 = vrot.slane %v344, 4
      %v351 = vshrl.u32 %v286, 16
      %v353 = vrot.slane %v351, 7
      %v354 = vshll.u32 %v286, 16
      %v356 = vor.u32 %v353, %v354
      %v357 = vrot.slane %v353, 4
      %v359 = vshrl.u32 %v287, 16
      %v361 = vrot.slane %v359, 7
      %v362 = vshll.u32 %v287, 16
      %v364 = vor.u32 %v361, %v362
      %v365 = vsel %vm315, %v357, %v364
      %v366 = vrot.slane %v361, 4
      %v368 = vshrl.u32 %v288, 16
      %v370 = vrot.slane %v368, 7
      %v371 = vshll.u32 %v288, 16
      %v373 = vor.u32 %v370, %v371
      %v374 = vrot.slane %v370, 4
      %v376 = vshrl.u32 %v289, 16
      %v378 = vrot.slane %v376, 7
      %v379 = vshll.u32 %v289, 16
      %v381 = vor.u32 %v378, %v379
      %v382 = vsel %vm315, %v374, %v381
      %v383 = vrot.slane %v378, 4
      %v385 = vshrl.u32 %v290, 16
      %v387 = vrot.slane %v385, 7
      %v388 = vshll.u32 %v290, 16
      %v390 = vor.u32 %v387, %v388
      %v391 = vrot.slane %v387, 4
      %v393 = vshrl.u32 %v291, 16
      %v395 = vrot.slane %v393, 7
      %v396 = vshll.u32 %v291, 16
      %v398 = vor.u32 %v395, %v396
      %v399 = vsel %vm315, %v391, %v398
      %v400 = vrot.slane %v395, 4
      %v402 = vshrl.u32 %v292, 16
      %v404 = vrot.slane %v402, 7
      %v405 = vshll.u32 %v292, 16
      %v407 = vor.u32 %v404, %v405
      %v408 = vrot.slane %v404, 4
      %v410 = vshrl.u32 %v293, 16
      %v412 = vrot.slane %v410, 7
      %v413 = vshll.u32 %v293, 16
      %v415 = vor.u32 %v412, %v413
      %v416 = vsel %vm315, %v408, %v415
      %v417 = vrot.slane %v412, 4
      %v419 = vshrl.u32 %v294, 16
      %v421 = vrot.slane %v419, 7
      %v422 = vshll.u32 %v294, 16
      %v424 = vor.u32 %v421, %v422
      %v425 = vrot.slane %v421, 4
      %v427 = vshrl.u32 %v295, 16
      %v429 = vrot.slane %v427, 7
      %v430 = vshll.u32 %v295, 16
      %v432 = vor.u32 %v429, %v430
      %v433 = vsel %vm315, %v425, %v432
      %v434 = vrot.slane %v429, 4
      %v436 = vshrl.u32 %v296, 16
      %v438 = vrot.slane %v436, 7
      %v439 = vshll.u32 %v296, 16
      %v441 = vor.u32 %v438, %v439
      %v442 = vrot.slane %v438, 4
      %v444 = vshrl.u32 %v297, 16
      %v446 = vrot.slane %v444, 7
      %v447 = vshll.u32 %v297, 16
      %v449 = vor.u32 %v446, %v447
      %v450 = vsel %vm315, %v442, %v449
      %v451 = vrot.slane %v446, 4
      %v453 = vshrl.u32 %v298, 16
      %v455 = vrot.slane %v453, 7
      %v456 = vshll.u32 %v298, 16
      %v458 = vor.u32 %v455, %v456
      %v459 = vrot.slane %v455, 4
      %v461 = vshrl.u32 %v299, 16
      %v463 = vrot.slane %v461, 7
      %v464 = vshll.u32 %v299, 16
      %v466 = vor.u32 %v463, %v464
      %v467 = vsel %vm315, %v459, %v466
      %v468 = vrot.slane %v463, 4
      %v470 = vshrl.u32 %v300, 16
      %v472 = vrot.slane %v470, 7
      %v473 = vshll.u32 %v300, 16
      %v475 = vor.u32 %v472, %v473
      %v476 = vrot.slane %v472, 4
      %v478 = vshrl.u32 %v301, 16
      %v480 = vrot.slane %v478, 7
      %v481 = vshll.u32 %v301, 16
      %v483 = vor.u32 %v480, %v481
      %v484 = vsel %vm315, %v476, %v483
      %v485 = vrot.slane %v480, 4
      %v487 = vshrl.u32 %v302, 16
      %v489 = vrot.slane %v487, 7
      %v490 = vshll.u32 %v302, 16
      %v492 = vor.u32 %v489, %v490
      %v493 = vrot.slane %v489, 4
      %v495 = vshrl.u32 %v303, 16
      %v497 = vrot.slane %v495, 7
      %v498 = vshll.u32 %v303, 16
      %v500 = vor.u32 %v497, %v498
      %v501 = vsel %vm315, %v493, %v500
      %v502 = vrot.slane %v497, 4
      %v504 = vshrl.u32 %v304, 16
      %v506 = vrot.slane %v504, 7
      %v507 = vshll.u32 %v304, 16
      %v509 = vor.u32 %v506, %v507
      %v510 = vrot.slane %v506, 4
      %v512 = vshrl.u32 %v305, 16
      %v514 = vrot.slane %v512, 7
      %v515 = vshll.u32 %v305, 16
      %v517 = vor.u32 %v514, %v515
      %v518 = vsel %vm315, %v510, %v517
      %v519 = vrot.slane %v514, 4
      %v521 = vshrl.u32 %v306, 16
      %v523 = vrot.slane %v521, 7
      %v524 = vshll.u32 %v306, 16
      %v526 = vor.u32 %v523, %v524
      %v527 = vrot.slane %v523, 4
      %v529 = vshrl.u32 %v307, 16
      %v531 = vrot.slane %v529, 7
      %v532 = vshll.u32 %v307, 16
      %v534 = vor.u32 %v531, %v532
      %v535 = vsel %vm315, %v527, %v534
      %v536 = vrot.slane %v531, 4
      %v538 = vshrl.u32 %v308, 16
      %v540 = vrot.slane %v538, 7
      %v541 = vshll.u32 %v308, 16
      %v543 = vor.u32 %v540, %v541
      %v544 = vrot.slane %v540, 4
      %v546 = vshrl.u32 %v309, 16
      %v548 = vrot.slane %v546, 7
      %v549 = vshll.u32 %v309, 16
      %v551 = vor.u32 %v548, %v549
      %v552 = vsel %vm315, %v544, %v551
      %v553 = vrot.slane %v548, 4
      %v555 = vshrl.u32 %v310, 16
      %v557 = vrot.slane %v555, 7
      %v558 = vshll.u32 %v310, 16
      %v560 = vor.u32 %v557, %v558
      %v561 = vrot.slane %v557, 4
      %v563 = vshrl.u32 %v311, 16
      %v565 = vrot.slane %v563, 7
      %v566 = vshll.u32 %v311, 16
      %v568 = vor.u32 %v565, %v566
      %v569 = vsel %vm315, %v561, %v568
      %v570 = vrot.slane %v565, 4
      %v572 = vshrl.u32 %v312, 16
      %v574 = vrot.slane %v572, 7
      %v575 = vshll.u32 %v312, 16
      %v577 = vor.u32 %v574, %v575
      %v578 = vrot.slane %v574, 4
      %v580 = vshrl.u32 %v313, 16
      %v582 = vrot.slane %v580, 7
      %v583 = vshll.u32 %v313, 16
      %v585 = vor.u32 %v582, %v583
      %v586 = vsel %vm315, %v578, %v585
      %v587 = vrot.slane %v582, 4
      %vm636 = vcmask 27648
      %vm637 = vmand %vm636, %vm232
      %v638 = vld [vmem:[%s180] sm:$0xf]
      %v639 = vsel %vm637, %v322, %v638
      %640 = vst [vmem:[%s180] sm:$0xf] %v639
      %641 = vst.msk [vmem:[%s180 + $0x4] sm:$0xf] %vm172, %v331
      %v642 = vld [vmem:[%s180 + $0x8] sm:$0x1]
      %v643 = vsel %vm183, %v332, %v642
      %644 = vst [vmem:[%s180 + $0x8] sm:$0x1] %v643
      %v645 = vld [vmem:[%s180 + $0xc] sm:$0xf]
      %v646 = vsel %vm637, %v339, %v645
      %647 = vst [vmem:[%s180 + $0xc] sm:$0xf] %v646
      %648 = vst.msk [vmem:[%s180 + $0x10] sm:$0xf] %vm172, %v348
      %v649 = vld [vmem:[%s180 + $0x14] sm:$0x1]
      %v650 = vsel %vm183, %v349, %v649
      %651 = vst [vmem:[%s180 + $0x14] sm:$0x1] %v650
      %v652 = vld [vmem:[%s180 + $0x18] sm:$0xf]
      %v653 = vsel %vm637, %v356, %v652
      %654 = vst [vmem:[%s180 + $0x18] sm:$0xf] %v653
      %655 = vst.msk [vmem:[%s180 + $0x1c] sm:$0xf] %vm172, %v365
      %v656 = vld [vmem:[%s180 + $0x20] sm:$0x1]
      %v657 = vsel %vm183, %v366, %v656
      %658 = vst [vmem:[%s180 + $0x20] sm:$0x1] %v657
      %v659 = vld [vmem:[%s180 + $0x24] sm:$0xf]
      %v660 = vsel %vm637, %v373, %v659
      %661 = vst [vmem:[%s180 + $0x24] sm:$0xf] %v660
      %662 = vst.msk [vmem:[%s180 + $0x28] sm:$0xf] %vm172, %v382
      %v663 = vld [vmem:[%s180 + $0x2c] sm:$0x1]
      %v664 = vsel %vm183, %v383, %v663
      %665 = vst [vmem:[%s180 + $0x2c] sm:$0x1] %v664
      %v666 = vld [vmem:[%s180 + $0x30] sm:$0xf]
      %v667 = vsel %vm637, %v390, %v666
      %668 = vst [vmem:[%s180 + $0x30] sm:$0xf] %v667
      %669 = vst.msk [vmem:[%s180 + $0x34] sm:$0xf] %vm172, %v399
      %v670 = vld [vmem:[%s180 + $0x38] sm:$0x1]
      %v671 = vsel %vm183, %v400, %v670
      %672 = vst [vmem:[%s180 + $0x38] sm:$0x1] %v671
      %v673 = vld [vmem:[%s180 + $0x3c] sm:$0xf]
      %v674 = vsel %vm637, %v407, %v673
      %675 = vst [vmem:[%s180 + $0x3c] sm:$0xf] %v674
      %676 = vst.msk [vmem:[%s180 + $0x40] sm:$0xf] %vm172, %v416
      %v677 = vld [vmem:[%s180 + $0x44] sm:$0x1]
      %v678 = vsel %vm183, %v417, %v677
      %679 = vst [vmem:[%s180 + $0x44] sm:$0x1] %v678
      %v680 = vld [vmem:[%s180 + $0x48] sm:$0xf]
      %v681 = vsel %vm637, %v424, %v680
      %682 = vst [vmem:[%s180 + $0x48] sm:$0xf] %v681
      %683 = vst.msk [vmem:[%s180 + $0x4c] sm:$0xf] %vm172, %v433
      %v684 = vld [vmem:[%s180 + $0x50] sm:$0x1]
      %v685 = vsel %vm183, %v434, %v684
      %686 = vst [vmem:[%s180 + $0x50] sm:$0x1] %v685
      %v687 = vld [vmem:[%s180 + $0x54] sm:$0xf]
      %v688 = vsel %vm637, %v441, %v687
      %689 = vst [vmem:[%s180 + $0x54] sm:$0xf] %v688
      %690 = vst.msk [vmem:[%s180 + $0x58] sm:$0xf] %vm172, %v450
      %v691 = vld [vmem:[%s180 + $0x5c] sm:$0x1]
      %v692 = vsel %vm183, %v451, %v691
      %693 = vst [vmem:[%s180 + $0x5c] sm:$0x1] %v692
      %v694 = vld [vmem:[%s180 + $0x60] sm:$0xf]
      %v695 = vsel %vm637, %v458, %v694
      %696 = vst [vmem:[%s180 + $0x60] sm:$0xf] %v695
      %697 = vst.msk [vmem:[%s180 + $0x64] sm:$0xf] %vm172, %v467
      %v698 = vld [vmem:[%s180 + $0x68] sm:$0x1]
      %v699 = vsel %vm183, %v468, %v698
      %700 = vst [vmem:[%s180 + $0x68] sm:$0x1] %v699
      %v701 = vld [vmem:[%s180 + $0x6c] sm:$0xf]
      %v702 = vsel %vm637, %v475, %v701
      %703 = vst [vmem:[%s180 + $0x6c] sm:$0xf] %v702
      %704 = vst.msk [vmem:[%s180 + $0x70] sm:$0xf] %vm172, %v484
      %v705 = vld [vmem:[%s180 + $0x74] sm:$0x1]
      %v706 = vsel %vm183, %v485, %v705
      %707 = vst [vmem:[%s180 + $0x74] sm:$0x1] %v706
      %v708 = vld [vmem:[%s180 + $0x78] sm:$0xf]
      %v709 = vsel %vm637, %v492, %v708
      %710 = vst [vmem:[%s180 + $0x78] sm:$0xf] %v709
      %711 = vst.msk [vmem:[%s180 + $0x7c] sm:$0xf] %vm172, %v501
      %v712 = vld [vmem:[%s180 + $0x80] sm:$0x1]
      %v713 = vsel %vm183, %v502, %v712
      %714 = vst [vmem:[%s180 + $0x80] sm:$0x1] %v713
      %v715 = vld [vmem:[%s180 + $0x84] sm:$0xf]
      %v716 = vsel %vm637, %v509, %v715
      %717 = vst [vmem:[%s180 + $0x84] sm:$0xf] %v716
      %718 = vst.msk [vmem:[%s180 + $0x88] sm:$0xf] %vm172, %v518
      %v719 = vld [vmem:[%s180 + $0x8c] sm:$0x1]
      %v720 = vsel %vm183, %v519, %v719
      %721 = vst [vmem:[%s180 + $0x8c] sm:$0x1] %v720
      %v722 = vld [vmem:[%s180 + $0x90] sm:$0xf]
      %v723 = vsel %vm637, %v526, %v722
      %724 = vst [vmem:[%s180 + $0x90] sm:$0xf] %v723
      %725 = vst.msk [vmem:[%s180 + $0x94] sm:$0xf] %vm172, %v535
      %v726 = vld [vmem:[%s180 + $0x98] sm:$0x1]
      %v727 = vsel %vm183, %v536, %v726
      %728 = vst [vmem:[%s180 + $0x98] sm:$0x1] %v727
      %v729 = vld [vmem:[%s180 + $0x9c] sm:$0xf]
      %v730 = vsel %vm637, %v543, %v729
      %731 = vst [vmem:[%s180 + $0x9c] sm:$0xf] %v730
      %732 = vst.msk [vmem:[%s180 + $0xa0] sm:$0xf] %vm172, %v552
      %v733 = vld [vmem:[%s180 + $0xa4] sm:$0x1]
      %v734 = vsel %vm183, %v553, %v733
      %735 = vst [vmem:[%s180 + $0xa4] sm:$0x1] %v734
      %v736 = vld [vmem:[%s180 + $0xa8] sm:$0xf]
      %v737 = vsel %vm637, %v560, %v736
      %738 = vst [vmem:[%s180 + $0xa8] sm:$0xf] %v737
      %739 = vst.msk [vmem:[%s180 + $0xac] sm:$0xf] %vm172, %v569
      %v740 = vld [vmem:[%s180 + $0xb0] sm:$0x1]
      %v741 = vsel %vm183, %v570, %v740
      %742 = vst [vmem:[%s180 + $0xb0] sm:$0x1] %v741
      %v743 = vld [vmem:[%s180 + $0xb4] sm:$0xf]
      %v744 = vsel %vm637, %v577, %v743
      %745 = vst [vmem:[%s180 + $0xb4] sm:$0xf] %v744
      %746 = vst.msk [vmem:[%s180 + $0xb8] sm:$0xf] %vm172, %v586
      %v747 = vld [vmem:[%s180 + $0xbc] sm:$0x1]
      %v748 = vsel %vm183, %v587, %v747
      %749 = vst [vmem:[%s180 + $0xbc] sm:$0x1] %v748
      %v750 = vld [vmem:[#allocation2] sm:$0xf]
      %v751 = vld [vmem:[#allocation2 + $0x4] sm:$0xf]
      %v752 = vld [vmem:[#allocation2 + $0xc] sm:$0xf]
      %v753 = vld [vmem:[#allocation2 + $0x10] sm:$0xf]
      %v754 = vld [vmem:[#allocation2 + $0x18] sm:$0xf]
      %v755 = vld [vmem:[#allocation2 + $0x1c] sm:$0xf]
      %v756 = vld [vmem:[#allocation2 + $0x24] sm:$0xf]
      %v757 = vld [vmem:[#allocation2 + $0x28] sm:$0xf]
      %v758 = vld [vmem:[#allocation2 + $0x30] sm:$0xf]
      %v759 = vld [vmem:[#allocation2 + $0x34] sm:$0xf]
      %v760 = vld [vmem:[#allocation2 + $0x3c] sm:$0xf]
      %v761 = vld [vmem:[#allocation2 + $0x40] sm:$0xf]
      %v762 = vld [vmem:[#allocation2 + $0x48] sm:$0xf]
      %v763 = vld [vmem:[#allocation2 + $0x4c] sm:$0xf]
      %v764 = vld [vmem:[#allocation2 + $0x54] sm:$0xf]
      %v765 = vld [vmem:[#allocation2 + $0x58] sm:$0xf]
      %v766 = vld [vmem:[#allocation2 + $0x60] sm:$0xf]
      %v767 = vld [vmem:[#allocation2 + $0x64] sm:$0xf]
      %v768 = vld [vmem:[#allocation2 + $0x6c] sm:$0xf]
      %v769 = vld [vmem:[#allocation2 + $0x70] sm:$0xf]
      %v770 = vld [vmem:[#allocation2 + $0x78] sm:$0xf]
      %v771 = vld [vmem:[#allocation2 + $0x7c] sm:$0xf]
      %v772 = vld [vmem:[#allocation2 + $0x84] sm:$0xf]
      %v773 = vld [vmem:[#allocation2 + $0x88] sm:$0xf]
      %v774 = vld [vmem:[#allocation2 + $0x90] sm:$0xf]
      %v775 = vld [vmem:[#allocation2 + $0x94] sm:$0xf]
      %v776 = vld [vmem:[#allocation2 + $0x9c] sm:$0xf]
      %v777 = vld [vmem:[#allocation2 + $0xa0] sm:$0xf]
      %v778 = vld [vmem:[#allocation2 + $0xa8] sm:$0xf]
      %v779 = vld [vmem:[#allocation2 + $0xac] sm:$0xf]
      %v780 = vld [vmem:[#allocation2 + $0xb4] sm:$0xf]
      %v781 = vld [vmem:[#allocation2 + $0xb8] sm:$0xf]
      %v782 = vld [vmem:[%s1] sm:$0x3]
      %v783 = vld [vmem:[#allocation2 + $0x8] sm:$0x1]
      %v784 = vld [vmem:[#allocation2 + $0x14] sm:$0x1]
      %v785 = vld [vmem:[#allocation2 + $0x20] sm:$0x1]
      %v786 = vld [vmem:[#allocation2 + $0x2c] sm:$0x1]
      %v787 = vld [vmem:[#allocation2 + $0x38] sm:$0x1]
      %v788 = vld [vmem:[#allocation2 + $0x44] sm:$0x1]
      %v789 = vld [vmem:[#allocation2 + $0x50] sm:$0x1]
      %v790 = vld [vmem:[#allocation2 + $0x5c] sm:$0x1]
      %v791 = vld [vmem:[#allocation2 + $0x68] sm:$0x1]
      %v792 = vld [vmem:[#allocation2 + $0x74] sm:$0x1]
      %v793 = vld [vmem:[#allocation2 + $0x80] sm:$0x1]
      %v794 = vld [vmem:[#allocation2 + $0x8c] sm:$0x1]
      %v795 = vld [vmem:[#allocation2 + $0x98] sm:$0x1]
      %v796 = vld [vmem:[#allocation2 + $0xa4] sm:$0x1]
      %v797 = vld [vmem:[#allocation2 + $0xb0] sm:$0x1]
      %v798 = vld [vmem:[#allocation2 + $0xbc] sm:$0x1]
      %vm799 = vsmask.f32 3328
      %vm800 = vsmask.f32 7440
      %vm801 = vmor %vm799, %vm800
      %v803 = vshrl.u32 %v750, 16
      %v805 = vrot.slane %v803, 4
      %v806 = vshll.u32 %v750, 16
      %v808 = vrot.slane %v806, 5
      %v809 = vor.u32 %v805, %v808
      %v810 = vrot.slane %v809, 4
      %v812 = vshll.u32 %v751, 16
      %v814 = vrot.slane %v812, 5
      %v815 = vsel %vm801, %v810, %v814
      %v816 = vshrl.u32 %v751, 16
      %v818 = vrot.slane %v816, 4
      %v819 = vor.u32 %v818, %v814
      %v820 = vrot.slane %v819, 4
      %v822 = vshll.u32 %v783, 16
      %v824 = vrot.slane %v822, 5
      %v825 = vsel %vm801, %v820, %v824
      %v827 = vshrl.u32 %v752, 16
      %v829 = vrot.slane %v827, 4
      %v830 = vshll.u32 %v752, 16
      %v832 = vrot.slane %v830, 5
      %v833 = vor.u32 %v829, %v832
      %v834 = vrot.slane %v833, 4
      %v836 = vshll.u32 %v753, 16
      %v838 = vrot.slane %v836, 5
      %v839 = vsel %vm801, %v834, %v838
      %v840 = vshrl.u32 %v753, 16
      %v842 = vrot.slane %v840, 4
      %v843 = vor.u32 %v842, %v838
      %v844 = vrot.slane %v843, 4
      %v846 = vshll.u32 %v784, 16
      %v848 = vrot.slane %v846, 5
      %v849 = vsel %vm801, %v844, %v848
      %v851 = vshrl.u32 %v754, 16
      %v853 = vrot.slane %v851, 4
      %v854 = vshll.u32 %v754, 16
      %v856 = vrot.slane %v854, 5
      %v857 = vor.u32 %v853, %v856
      %v858 = vrot.slane %v857, 4
      %v860 = vshll.u32 %v755, 16
      %v862 = vrot.slane %v860, 5
      %v863 = vsel %vm801, %v858, %v862
      %v864 = vshrl.u32 %v755, 16
      %v866 = vrot.slane %v864, 4
      %v867 = vor.u32 %v866, %v862
      %v868 = vrot.slane %v867, 4
      %v870 = vshll.u32 %v785, 16
      %v872 = vrot.slane %v870, 5
      %v873 = vsel %vm801, %v868, %v872
      %v875 = vshrl.u32 %v756, 16
      %v877 = vrot.slane %v875, 4
      %v878 = vshll.u32 %v756, 16
      %v880 = vrot.slane %v878, 5
      %v881 = vor.u32 %v877, %v880
      %v882 = vrot.slane %v881, 4
      %v884 = vshll.u32 %v757, 16
      %v886 = vrot.slane %v884, 5
      %v887 = vsel %vm801, %v882, %v886
      %v888 = vshrl.u32 %v757, 16
      %v890 = vrot.slane %v888, 4
      %v891 = vor.u32 %v890, %v886
      %v892 = vrot.slane %v891, 4
      %v894 = vshll.u32 %v786, 16
      %v896 = vrot.slane %v894, 5
      %v897 = vsel %vm801, %v892, %v896
      %v899 = vshrl.u32 %v758, 16
      %v901 = vrot.slane %v899, 4
      %v902 = vshll.u32 %v758, 16
      %v904 = vrot.slane %v902, 5
      %v905 = vor.u32 %v901, %v904
      %v906 = vrot.slane %v905, 4
      %v908 = vshll.u32 %v759, 16
      %v910 = vrot.slane %v908, 5
      %v911 = vsel %vm801, %v906, %v910
      %v912 = vshrl.u32 %v759, 16
      %v914 = vrot.slane %v912, 4
      %v915 = vor.u32 %v914, %v910
      %v916 = vrot.slane %v915, 4
      %v918 = vshll.u32 %v787, 16
      %v920 = vrot.slane %v918, 5
      %v921 = vsel %vm801, %v916, %v920
      %v923 = vshrl.u32 %v760, 16
      %v925 = vrot.slane %v923, 4
      %v926 = vshll.u32 %v760, 16
      %v928 = vrot.slane %v926, 5
      %v929 = vor.u32 %v925, %v928
      %v930 = vrot.slane %v929, 4
      %v932 = vshll.u32 %v761, 16
      %v934 = vrot.slane %v932, 5
      %v935 = vsel %vm801, %v930, %v934
      %v936 = vshrl.u32 %v761, 16
      %v938 = vrot.slane %v936, 4
      %v939 = vor.u32 %v938, %v934
      %v940 = vrot.slane %v939, 4
      %v942 = vshll.u32 %v788, 16
      %v944 = vrot.slane %v942, 5
      %v945 = vsel %vm801, %v940, %v944
      %v947 = vshrl.u32 %v762, 16
      %v949 = vrot.slane %v947, 4
      %v950 = vshll.u32 %v762, 16
      %v952 = vrot.slane %v950, 5
      %v953 = vor.u32 %v949, %v952
      %v954 = vrot.slane %v953, 4
      %v956 = vshll.u32 %v763, 16
      %v958 = vrot.slane %v956, 5
      %v959 = vsel %vm801, %v954, %v958
      %v960 = vshrl.u32 %v763, 16
      %v962 = vrot.slane %v960, 4
      %v963 = vor.u32 %v962, %v958
      %v964 = vrot.slane %v963, 4
      %v966 = vshll.u32 %v789, 16
      %v968 = vrot.slane %v966, 5
      %v969 = vsel %vm801, %v964, %v968
      %v971 = vshrl.u32 %v764, 16
      %v973 = vrot.slane %v971, 4
      %v974 = vshll.u32 %v764, 16
      %v976 = vrot.slane %v974, 5
      %v977 = vor.u32 %v973, %v976
      %v978 = vrot.slane %v977, 4
      %v980 = vshll.u32 %v765, 16
      %v982 = vrot.slane %v980, 5
      %v983 = vsel %vm801, %v978, %v982
      %v984 = vshrl.u32 %v765, 16
      %v986 = vrot.slane %v984, 4
      %v987 = vor.u32 %v986, %v982
      %v988 = vrot.slane %v987, 4
      %v990 = vshll.u32 %v790, 16
      %v992 = vrot.slane %v990, 5
      %v993 = vsel %vm801, %v988, %v992
      %v995 = vshrl.u32 %v766, 16
      %v997 = vrot.slane %v995, 4
      %v998 = vshll.u32 %v766, 16
      %v1000 = vrot.slane %v998, 5
      %v1001 = vor.u32 %v997, %v1000
      %v1002 = vrot.slane %v1001, 4
      %v1004 = vshll.u32 %v767, 16
      %v1006 = vrot.slane %v1004, 5
      %v1007 = vsel %vm801, %v1002, %v1006
      %v1008 = vshrl.u32 %v767, 16
      %v1010 = vrot.slane %v1008, 4
      %v1011 = vor.u32 %v1010, %v1006
      %v1012 = vrot.slane %v1011, 4
      %v1014 = vshll.u32 %v791, 16
      %v1016 = vrot.slane %v1014, 5
      %v1017 = vsel %vm801, %v1012, %v1016
      %v1019 = vshrl.u32 %v768, 16
      %v1021 = vrot.slane %v1019, 4
      %v1022 = vshll.u32 %v768, 16
      %v1024 = vrot.slane %v1022, 5
      %v1025 = vor.u32 %v1021, %v1024
      %v1026 = vrot.slane %v1025, 4
      %v1028 = vshll.u32 %v769, 16
      %v1030 = vrot.slane %v1028, 5
      %v1031 = vsel %vm801, %v1026, %v1030
      %v1032 = vshrl.u32 %v769, 16
      %v1034 = vrot.slane %v1032, 4
      %v1035 = vor.u32 %v1034, %v1030
      %v1036 = vrot.slane %v1035, 4
      %v1038 = vshll.u32 %v792, 16
      %v1040 = vrot.slane %v1038, 5
      %v1041 = vsel %vm801, %v1036, %v1040
      %v1043 = vshrl.u32 %v770, 16
      %v1045 = vrot.slane %v1043, 4
      %v1046 = vshll.u32 %v770, 16
      %v1048 = vrot.slane %v1046, 5
      %v1049 = vor.u32 %v1045, %v1048
      %v1050 = vrot.slane %v1049, 4
      %v1052 = vshll.u32 %v771, 16
      %v1054 = vrot.slane %v1052, 5
      %v1055 = vsel %vm801, %v1050, %v1054
      %v1056 = vshrl.u32 %v771, 16
      %v1058 = vrot.slane %v1056, 4
      %v1059 = vor.u32 %v1058, %v1054
      %v1060 = vrot.slane %v1059, 4
      %v1062 = vshll.u32 %v793, 16
      %v1064 = vrot.slane %v1062, 5
      %v1065 = vsel %vm801, %v1060, %v1064
      %v1067 = vshrl.u32 %v772, 16
      %v1069 = vrot.slane %v1067, 4
      %v1070 = vshll.u32 %v772, 16
      %v1072 = vrot.slane %v1070, 5
      %v1073 = vor.u32 %v1069, %v1072
      %v1074 = vrot.slane %v1073, 4
      %v1076 = vshll.u32 %v773, 16
      %v1078 = vrot.slane %v1076, 5
      %v1079 = vsel %vm801, %v1074, %v1078
      %v1080 = vshrl.u32 %v773, 16
      %v1082 = vrot.slane %v1080, 4
      %v1083 = vor.u32 %v1082, %v1078
      %v1084 = vrot.slane %v1083, 4
      %v1086 = vshll.u32 %v794, 16
      %v1088 = vrot.slane %v1086, 5
      %v1089 = vsel %vm801, %v1084, %v1088
      %v1091 = vshrl.u32 %v774, 16
      %v1093 = vrot.slane %v1091, 4
      %v1094 = vshll.u32 %v774, 16
      %v1096 = vrot.slane %v1094, 5
      %v1097 = vor.u32 %v1093, %v1096
      %v1098 = vrot.slane %v1097, 4
      %v1100 = vshll.u32 %v775, 16
      %v1102 = vrot.slane %v1100, 5
      %v1103 = vsel %vm801, %v1098, %v1102
      %v1104 = vshrl.u32 %v775, 16
      %v1106 = vrot.slane %v1104, 4
      %v1107 = vor.u32 %v1106, %v1102
      %v1108 = vrot.slane %v1107, 4
      %v1110 = vshll.u32 %v795, 16
      %v1112 = vrot.slane %v1110, 5
      %v1113 = vsel %vm801, %v1108, %v1112
      %v1115 = vshrl.u32 %v776, 16
      %v1117 = vrot.slane %v1115, 4
      %v1118 = vshll.u32 %v776, 16
      %v1120 = vrot.slane %v1118, 5
      %v1121 = vor.u32 %v1117, %v1120
      %v1122 = vrot.slane %v1121, 4
      %v1124 = vshll.u32 %v777, 16
      %v1126 = vrot.slane %v1124, 5
      %v1127 = vsel %vm801, %v1122, %v1126
      %v1128 = vshrl.u32 %v777, 16
      %v1130 = vrot.slane %v1128, 4
      %v1131 = vor.u32 %v1130, %v1126
      %v1132 = vrot.slane %v1131, 4
      %v1134 = vshll.u32 %v796, 16
      %v1136 = vrot.slane %v1134, 5
      %v1137 = vsel %vm801, %v1132, %v1136
      %v1139 = vshrl.u32 %v778, 16
      %v1141 = vrot.slane %v1139, 4
      %v1142 = vshll.u32 %v778, 16
      %v1144 = vrot.slane %v1142, 5
      %v1145 = vor.u32 %v1141, %v1144
      %v1146 = vrot.slane %v1145, 4
      %v1148 = vshll.u32 %v779, 16
      %v1150 = vrot.slane %v1148, 5
      %v1151 = vsel %vm801, %v1146, %v1150
      %v1152 = vshrl.u32 %v779, 16
      %v1154 = vrot.slane %v1152, 4
      %v1155 = vor.u32 %v1154, %v1150
      %v1156 = vrot.slane %v1155, 4
      %v1158 = vshll.u32 %v797, 16
      %v1160 = vrot.slane %v1158, 5
      %v1161 = vsel %vm801, %v1156, %v1160
      %v1163 = vshrl.u32 %v780, 16
      %v1165 = vrot.slane %v1163, 4
      %v1166 = vshll.u32 %v780, 16
      %v1168 = vrot.slane %v1166, 5
      %v1169 = vor.u32 %v1165, %v1168
      %v1170 = vrot.slane %v1169, 4
      %v1172 = vshll.u32 %v781, 16
      %v1174 = vrot.slane %v1172, 5
      %v1175 = vsel %vm801, %v1170, %v1174
      %v1176 = vshrl.u32 %v781, 16
      %v1178 = vrot.slane %v1176, 4
      %v1179 = vor.u32 %v1178, %v1174
      %v1180 = vrot.slane %v1179, 4
      %v1182 = vshll.u32 %v798, 16
      %v1184 = vrot.slane %v1182, 5
      %v1185 = vsel %vm801, %v1180, %v1184
      %s1186 = scalar_lea.vmem %s1, 2
      %v1187 = vld [vmem:[%s1186] sm:$0x3]
      %v1188 = vunpack.c.l.b16 %v815
      %v1189 = vunpack.c.l.b16 %v825
      %v1190 = vunpack.c.l.b16 %v839
      %v1191 = vunpack.c.l.b16 %v849
      %v1192 = vunpack.c.l.b16 %v863
      %v1193 = vunpack.c.l.b16 %v873
      %v1194 = vunpack.c.l.b16 %v887
      %v1195 = vunpack.c.l.b16 %v897
      %v1196 = vunpack.c.l.b16 %v911
      %v1197 = vunpack.c.l.b16 %v921
      %v1198 = vunpack.c.l.b16 %v935
      %v1199 = vunpack.c.l.b16 %v945
      %v1200 = vunpack.c.l.b16 %v959
      %v1201 = vunpack.c.l.b16 %v969
      %v1202 = vunpack.c.l.b16 %v983
      %v1203 = vunpack.c.l.b16 %v993
      %v1204 = vunpack.c.l.b16 %v1007
      %v1205 = vunpack.c.l.b16 %v1017
      %v1206 = vunpack.c.l.b16 %v1031
      %v1207 = vunpack.c.l.b16 %v1041
      %v1208 = vunpack.c.l.b16 %v1055
      %v1209 = vunpack.c.l.b16 %v1065
      %v1210 = vunpack.c.l.b16 %v1079
      %v1211 = vunpack.c.l.b16 %v1089
      %v1212 = vunpack.c.l.b16 %v1103
      %v1213 = vunpack.c.l.b16 %v1113
      %v1214 = vunpack.c.l.b16 %v1127
      %v1215 = vunpack.c.l.b16 %v1137
      %v1216 = vunpack.c.l.b16 %v1151
      %v1217 = vunpack.c.l.b16 %v1161
      %v1218 = vunpack.c.l.b16 %v1175
      %v1219 = vunpack.c.l.b16 %v1185
      %v1220 = vpack.c.b16 %v1189, %v1188
      %v1221 = vpack.c.b16 %v1191, %v1190
      %v1222 = vpack.c.b16 %v1193, %v1192
      %v1223 = vpack.c.b16 %v1195, %v1194
      %v1224 = vpack.c.b16 %v1197, %v1196
      %v1225 = vpack.c.b16 %v1199, %v1198
      %v1226 = vpack.c.b16 %v1201, %v1200
      %v1227 = vpack.c.b16 %v1203, %v1202
      %v1228 = vpack.c.b16 %v1205, %v1204
      %v1229 = vpack.c.b16 %v1207, %v1206
      %v1230 = vpack.c.b16 %v1209, %v1208
      %v1231 = vpack.c.b16 %v1211, %v1210
      %v1232 = vpack.c.b16 %v1213, %v1212
      %v1233 = vpack.c.b16 %v1215, %v1214
      %v1234 = vpack.c.b16 %v1217, %v1216
      %v1235 = vpack.c.b16 %v1219, %v1218
      %vm1236 = vcmask 31744
      %v1238 = vsel %vm1236, %v1220, 0
      %v1241 = vsel %vm1236, %v1221, 0
      %v1244 = vsel %vm1236, %v1222, 0
      %v1247 = vsel %vm1236, %v1223, 0
      %v1250 = vsel %vm1236, %v1224, 0
      %v1253 = vsel %vm1236, %v1225, 0
      %v1256 = vsel %vm1236, %v1226, 0
      %v1259 = vsel %vm1236, %v1227, 0
      %v1262 = vsel %vm1236, %v1228, 0
      %v1265 = vsel %vm1236, %v1229, 0
      %v1268 = vsel %vm1236, %v1230, 0
      %v1271 = vsel %vm1236, %v1231, 0
      %v1274 = vsel %vm1236, %v1232, 0
      %v1277 = vsel %vm1236, %v1233, 0
      %v1280 = vsel %vm1236, %v1234, 0
      %v1283 = vsel %vm1236, %v1235, 0
      %vm1285 = vcmask 1041408
      %v1287 = vsel %vm1285, %v1187, 0
      %1289 = vmatpush.bf16.msra.mxu0 0
      %1290 = vmatpush.bf16.msra.mxu0 0
      %1291 = vmatpush.bf16.msra.mxu0 0
      %1292 = vmatpush.bf16.msra.mxu0 0
      %1293 = vmatpush.bf16.msra.mxu0 0
      %1294 = vmatpush.bf16.msra.mxu0 0
      %1295 = vmatpush.bf16.msra.mxu0 0
      %1296 = vmatpush.bf16.msra.mxu0 %v1287
      %1297 = vmatmul.bf16.gmra.mxu0 %v1238
      %v1298 = vpop.f32.mrf.mxu0
      %v1299 = vadd.f32 0.0, %v1298
      %v1300 = vpop.f32.mrf.mxu0
      %v1301 = vadd.f32 0.0, %v1300
      %1302 = vmatmul.bf16.gmra.mxu0 %v1241
      %v1303 = vpop.f32.mrf.mxu0
      %v1304 = vadd.f32 0.0, %v1303
      %v1305 = vpop.f32.mrf.mxu0
      %v1306 = vadd.f32 0.0, %v1305
      %1307 = vmatmul.bf16.gmra.mxu0 %v1244
      %v1308 = vpop.f32.mrf.mxu0
      %v1309 = vadd.f32 0.0, %v1308
      %v1310 = vpop.f32.mrf.mxu0
      %v1311 = vadd.f32 0.0, %v1310
      %1312 = vmatmul.bf16.gmra.mxu0 %v1247
      %v1313 = vpop.f32.mrf.mxu0
      %v1314 = vadd.f32 0.0, %v1313
      %v1315 = vpop.f32.mrf.mxu0
      %v1316 = vadd.f32 0.0, %v1315
      %1317 = vmatmul.bf16.gmra.mxu0 %v1250
      %v1318 = vpop.f32.mrf.mxu0
      %v1319 = vadd.f32 0.0, %v1318
      %v1320 = vpop.f32.mrf.mxu0
      %v1321 = vadd.f32 0.0, %v1320
      %1322 = vmatmul.bf16.gmra.mxu0 %v1253
      %v1323 = vpop.f32.mrf.mxu0
      %v1324 = vadd.f32 0.0, %v1323
      %v1325 = vpop.f32.mrf.mxu0
      %v1326 = vadd.f32 0.0, %v1325
      %1327 = vmatmul.bf16.gmra.mxu0 %v1256
      %v1328 = vpop.f32.mrf.mxu0
      %v1329 = vadd.f32 0.0, %v1328
      %v1330 = vpop.f32.mrf.mxu0
      %v1331 = vadd.f32 0.0, %v1330
      %1332 = vmatmul.bf16.gmra.mxu0 %v1259
      %v1333 = vpop.f32.mrf.mxu0
      %v1334 = vadd.f32 0.0, %v1333
      %v1335 = vpop.f32.mrf.mxu0
      %v1336 = vadd.f32 0.0, %v1335
      %1337 = vmatmul.bf16.gmra.mxu0 %v1262
      %v1338 = vpop.f32.mrf.mxu0
      %v1339 = vadd.f32 0.0, %v1338
      %v1340 = vpop.f32.mrf.mxu0
      %v1341 = vadd.f32 0.0, %v1340
      %1342 = vmatmul.bf16.gmra.mxu0 %v1265
      %v1343 = vpop.f32.mrf.mxu0
      %v1344 = vadd.f32 0.0, %v1343
      %v1345 = vpop.f32.mrf.mxu0
      %v1346 = vadd.f32 0.0, %v1345
      %1347 = vmatmul.bf16.gmra.mxu0 %v1268
      %v1348 = vpop.f32.mrf.mxu0
      %v1349 = vadd.f32 0.0, %v1348
      %v1350 = vpop.f32.mrf.mxu0
      %v1351 = vadd.f32 0.0, %v1350
      %1352 = vmatmul.bf16.gmra.mxu0 %v1271
      %v1353 = vpop.f32.mrf.mxu0
      %v1354 = vadd.f32 0.0, %v1353
      %v1355 = vpop.f32.mrf.mxu0
      %v1356 = vadd.f32 0.0, %v1355
      %1357 = vmatmul.bf16.gmra.mxu0 %v1274
      %v1358 = vpop.f32.mrf.mxu0
      %v1359 = vadd.f32 0.0, %v1358
      %v1360 = vpop.f32.mrf.mxu0
      %v1361 = vadd.f32 0.0, %v1360
      %1362 = vmatmul.bf16.gmra.mxu0 %v1277
      %v1363 = vpop.f32.mrf.mxu0
      %v1364 = vadd.f32 0.0, %v1363
      %v1365 = vpop.f32.mrf.mxu0
      %v1366 = vadd.f32 0.0, %v1365
      %1367 = vmatmul.bf16.gmra.mxu0 %v1280
      %v1368 = vpop.f32.mrf.mxu0
      %v1369 = vadd.f32 0.0, %v1368
      %v1370 = vpop.f32.mrf.mxu0
      %v1371 = vadd.f32 0.0, %v1370
      %1372 = vmatmul.bf16.gmra.mxu0 %v1283
      %v1373 = vpop.f32.mrf.mxu0
      %v1374 = vadd.f32 0.0, %v1373
      %v1375 = vpop.f32.mrf.mxu0
      %v1376 = vadd.f32 0.0, %v1375
      %1377 = vdwg.mxu0
      %v1410 = vunpack.c.l.b16 %v750
      %v1411 = vunpack.c.l.b16 %v751
      %v1412 = vunpack.c.l.b16 %v752
      %v1413 = vunpack.c.l.b16 %v753
      %v1414 = vunpack.c.l.b16 %v754
      %v1415 = vunpack.c.l.b16 %v755
      %v1416 = vunpack.c.l.b16 %v756
      %v1417 = vunpack.c.l.b16 %v757
      %v1418 = vunpack.c.l.b16 %v758
      %v1419 = vunpack.c.l.b16 %v759
      %v1420 = vunpack.c.l.b16 %v760
      %v1421 = vunpack.c.l.b16 %v761
      %v1422 = vunpack.c.l.b16 %v762
      %v1423 = vunpack.c.l.b16 %v763
      %v1424 = vunpack.c.l.b16 %v764
      %v1425 = vunpack.c.l.b16 %v765
      %v1426 = vunpack.c.l.b16 %v766
      %v1427 = vunpack.c.l.b16 %v767
      %v1428 = vunpack.c.l.b16 %v768
      %v1429 = vunpack.c.l.b16 %v769
      %v1430 = vunpack.c.l.b16 %v770
      %v1431 = vunpack.c.l.b16 %v771
      %v1432 = vunpack.c.l.b16 %v772
      %v1433 = vunpack.c.l.b16 %v773
      %v1434 = vunpack.c.l.b16 %v774
      %v1435 = vunpack.c.l.b16 %v775
      %v1436 = vunpack.c.l.b16 %v776
      %v1437 = vunpack.c.l.b16 %v777
      %v1438 = vunpack.c.l.b16 %v778
      %v1439 = vunpack.c.l.b16 %v779
      %v1440 = vunpack.c.l.b16 %v780
      %v1441 = vunpack.c.l.b16 %v781
      %v1442 = vpack.c.b16 %v1411, %v1410
      %v1443 = vpack.c.b16 %v1413, %v1412
      %v1444 = vpack.c.b16 %v1415, %v1414
      %v1445 = vpack.c.b16 %v1417, %v1416
      %v1446 = vpack.c.b16 %v1419, %v1418
      %v1447 = vpack.c.b16 %v1421, %v1420
      %v1448 = vpack.c.b16 %v1423, %v1422
      %v1449 = vpack.c.b16 %v1425, %v1424
      %v1450 = vpack.c.b16 %v1427, %v1426
      %v1451 = vpack.c.b16 %v1429, %v1428
      %v1452 = vpack.c.b16 %v1431, %v1430
      %v1453 = vpack.c.b16 %v1433, %v1432
      %v1454 = vpack.c.b16 %v1435, %v1434
      %v1455 = vpack.c.b16 %v1437, %v1436
      %v1456 = vpack.c.b16 %v1439, %v1438
      %v1457 = vpack.c.b16 %v1441, %v1440
      %v1459 = vsel %vm1236, %v1442, 0
      %v1462 = vsel %vm1236, %v1443, 0
      %v1465 = vsel %vm1236, %v1444, 0
      %v1468 = vsel %vm1236, %v1445, 0
      %v1471 = vsel %vm1236, %v1446, 0
      %v1474 = vsel %vm1236, %v1447, 0
      %v1477 = vsel %vm1236, %v1448, 0
      %v1480 = vsel %vm1236, %v1449, 0
      %v1483 = vsel %vm1236, %v1450, 0
      %v1486 = vsel %vm1236, %v1451, 0
      %v1489 = vsel %vm1236, %v1452, 0
      %v1492 = vsel %vm1236, %v1453, 0
      %v1495 = vsel %vm1236, %v1454, 0
      %v1498 = vsel %vm1236, %v1455, 0
      %v1501 = vsel %vm1236, %v1456, 0
      %v1504 = vsel %vm1236, %v1457, 0
      %v1507 = vsel %vm1285, %v782, 0
      %1509 = vmatpush.bf16.msra.mxu0 0
      %1510 = vmatpush.bf16.msra.mxu0 0
      %1511 = vmatpush.bf16.msra.mxu0 0
      %1512 = vmatpush.bf16.msra.mxu0 0
      %1513 = vmatpush.bf16.msra.mxu0 0
      %1514 = vmatpush.bf16.msra.mxu0 0
      %1515 = vmatpush.bf16.msra.mxu0 0
      %1516 = vmatpush.bf16.msra.mxu0 %v1507
      %1517 = vmatmul.bf16.gmra.mxu0 %v1459
      %v1518 = vpop.f32.mrf.mxu0
      %v1519 = vadd.f32 %v1299, %v1518
      %v1520 = vpop.f32.mrf.mxu0
      %v1521 = vadd.f32 %v1301, %v1520
      %1522 = vmatmul.bf16.gmra.mxu0 %v1462
      %v1523 = vpop.f32.mrf.mxu0
      %v1524 = vadd.f32 %v1304, %v1523
      %v1525 = vpop.f32.mrf.mxu0
      %v1526 = vadd.f32 %v1306, %v1525
      %1527 = vmatmul.bf16.gmra.mxu0 %v1465
      %v1528 = vpop.f32.mrf.mxu0
      %v1529 = vadd.f32 %v1309, %v1528
      %v1530 = vpop.f32.mrf.mxu0
      %v1531 = vadd.f32 %v1311, %v1530
      %1532 = vmatmul.bf16.gmra.mxu0 %v1468
      %v1533 = vpop.f32.mrf.mxu0
      %v1534 = vadd.f32 %v1314, %v1533
      %v1535 = vpop.f32.mrf.mxu0
      %v1536 = vadd.f32 %v1316, %v1535
      %1537 = vmatmul.bf16.gmra.mxu0 %v1471
      %v1538 = vpop.f32.mrf.mxu0
      %v1539 = vadd.f32 %v1319, %v1538
      %v1540 = vpop.f32.mrf.mxu0
      %v1541 = vadd.f32 %v1321, %v1540
      %1542 = vmatmul.bf16.gmra.mxu0 %v1474
      %v1543 = vpop.f32.mrf.mxu0
      %v1544 = vadd.f32 %v1324, %v1543
      %v1545 = vpop.f32.mrf.mxu0
      %v1546 = vadd.f32 %v1326, %v1545
      %1547 = vmatmul.bf16.gmra.mxu0 %v1477
      %v1548 = vpop.f32.mrf.mxu0
      %v1549 = vadd.f32 %v1329, %v1548
      %v1550 = vpop.f32.mrf.mxu0
      %v1551 = vadd.f32 %v1331, %v1550
      %1552 = vmatmul.bf16.gmra.mxu0 %v1480
      %v1553 = vpop.f32.mrf.mxu0
      %v1554 = vadd.f32 %v1334, %v1553
      %v1555 = vpop.f32.mrf.mxu0
      %v1556 = vadd.f32 %v1336, %v1555
      %1557 = vmatmul.bf16.gmra.mxu0 %v1483
      %v1558 = vpop.f32.mrf.mxu0
      %v1559 = vadd.f32 %v1339, %v1558
      %v1560 = vpop.f32.mrf.mxu0
      %v1561 = vadd.f32 %v1341, %v1560
      %1562 = vmatmul.bf16.gmra.mxu0 %v1486
      %v1563 = vpop.f32.mrf.mxu0
      %v1564 = vadd.f32 %v1344, %v1563
      %v1565 = vpop.f32.mrf.mxu0
      %v1566 = vadd.f32 %v1346, %v1565
      %1567 = vmatmul.bf16.gmra.mxu0 %v1489
      %v1568 = vpop.f32.mrf.mxu0
      %v1569 = vadd.f32 %v1349, %v1568
      %v1570 = vpop.f32.mrf.mxu0
      %v1571 = vadd.f32 %v1351, %v1570
      %1572 = vmatmul.bf16.gmra.mxu0 %v1492
      %v1573 = vpop.f32.mrf.mxu0
      %v1574 = vadd.f32 %v1354, %v1573
      %v1575 = vpop.f32.mrf.mxu0
      %v1576 = vadd.f32 %v1356, %v1575
      %1577 = vmatmul.bf16.gmra.mxu0 %v1495
      %v1578 = vpop.f32.mrf.mxu0
      %v1579 = vadd.f32 %v1359, %v1578
      %v1580 = vpop.f32.mrf.mxu0
      %v1581 = vadd.f32 %v1361, %v1580
      %1582 = vmatmul.bf16.gmra.mxu0 %v1498
      %v1583 = vpop.f32.mrf.mxu0
      %v1584 = vadd.f32 %v1364, %v1583
      %v1585 = vpop.f32.mrf.mxu0
      %v1586 = vadd.f32 %v1366, %v1585
      %1587 = vmatmul.bf16.gmra.mxu0 %v1501
      %v1588 = vpop.f32.mrf.mxu0
      %v1589 = vadd.f32 %v1369, %v1588
      %v1590 = vpop.f32.mrf.mxu0
      %v1591 = vadd.f32 %v1371, %v1590
      %1592 = vmatmul.bf16.gmra.mxu0 %v1504
      %v1593 = vpop.f32.mrf.mxu0
      %v1594 = vadd.f32 %v1374, %v1593
      %v1595 = vpop.f32.mrf.mxu0
      %v1596 = vadd.f32 %v1376, %v1595
      %1597 = vdwg.mxu0
      %v1598 = vld [vmem:[#allocation2] sm:$0xe]
      %v1599 = vld [vmem:[#allocation2 + $0xc] sm:$0xe]
      %v1600 = vld [vmem:[#allocation2 + $0x18] sm:$0xe]
      %v1601 = vld [vmem:[#allocation2 + $0x24] sm:$0xe]
      %v1602 = vld [vmem:[#allocation2 + $0x30] sm:$0xe]
      %v1603 = vld [vmem:[#allocation2 + $0x3c] sm:$0xe]
      %v1604 = vld [vmem:[#allocation2 + $0x48] sm:$0xe]
      %v1605 = vld [vmem:[#allocation2 + $0x54] sm:$0xe]
      %v1606 = vld [vmem:[#allocation2 + $0x60] sm:$0xe]
      %v1607 = vld [vmem:[#allocation2 + $0x6c] sm:$0xe]
      %v1608 = vld [vmem:[#allocation2 + $0x78] sm:$0xe]
      %v1609 = vld [vmem:[#allocation2 + $0x84] sm:$0xe]
      %v1610 = vld [vmem:[#allocation2 + $0x90] sm:$0xe]
      %v1611 = vld [vmem:[#allocation2 + $0x9c] sm:$0xe]
      %v1612 = vld [vmem:[#allocation2 + $0xa8] sm:$0xe]
      %v1613 = vld [vmem:[#allocation2 + $0xb4] sm:$0xe]
      %vm1646 = vcmask 1042432
      %vm1647 = vcmask 1046532
      %vm1648 = vmor %vm1646, %vm1647
      %v1649 = vrot.slane %v1598, 5
      %v1650 = vrot.slane %v1649, 4
      %v1651 = vrot.slane %v751, 5
      %v1652 = vsel %vm1648, %v1650, %v1651
      %v1653 = vrot.slane %v1651, 4
      %v1654 = vrot.slane %v783, 5
      %v1655 = vsel %vm1648, %v1653, %v1654
      %v1656 = vrot.slane %v1599, 5
      %v1657 = vrot.slane %v1656, 4
      %v1658 = vrot.slane %v753, 5
      %v1659 = vsel %vm1648, %v1657, %v1658
      %v1660 = vrot.slane %v1658, 4
      %v1661 = vrot.slane %v784, 5
      %v1662 = vsel %vm1648, %v1660, %v1661
      %v1663 = vrot.slane %v1600, 5
      %v1664 = vrot.slane %v1663, 4
      %v1665 = vrot.slane %v755, 5
      %v1666 = vsel %vm1648, %v1664, %v1665
      %v1667 = vrot.slane %v1665, 4
      %v1668 = vrot.slane %v785, 5
      %v1669 = vsel %vm1648, %v1667, %v1668
      %v1670 = vrot.slane %v1601, 5
      %v1671 = vrot.slane %v1670, 4
      %v1672 = vrot.slane %v757, 5
      %v1673 = vsel %vm1648, %v1671, %v1672
      %v1674 = vrot.slane %v1672, 4
      %v1675 = vrot.slane %v786, 5
      %v1676 = vsel %vm1648, %v1674, %v1675
      %v1677 = vrot.slane %v1602, 5
      %v1678 = vrot.slane %v1677, 4
      %v1679 = vrot.slane %v759, 5
      %v1680 = vsel %vm1648, %v1678, %v1679
      %v1681 = vrot.slane %v1679, 4
      %v1682 = vrot.slane %v787, 5
      %v1683 = vsel %vm1648, %v1681, %v1682
      %v1684 = vrot.slane %v1603, 5
      %v1685 = vrot.slane %v1684, 4
      %v1686 = vrot.slane %v761, 5
      %v1687 = vsel %vm1648, %v1685, %v1686
      %v1688 = vrot.slane %v1686, 4
      %v1689 = vrot.slane %v788, 5
      %v1690 = vsel %vm1648, %v1688, %v1689
      %v1691 = vrot.slane %v1604, 5
      %v1692 = vrot.slane %v1691, 4
      %v1693 = vrot.slane %v763, 5
      %v1694 = vsel %vm1648, %v1692, %v1693
      %v1695 = vrot.slane %v1693, 4
      %v1696 = vrot.slane %v789, 5
      %v1697 = vsel %vm1648, %v1695, %v1696
      %v1698 = vrot.slane %v1605, 5
      %v1699 = vrot.slane %v1698, 4
      %v1700 = vrot.slane %v765, 5
      %v1701 = vsel %vm1648, %v1699, %v1700
      %v1702 = vrot.slane %v1700, 4
      %v1703 = vrot.slane %v790, 5
      %v1704 = vsel %vm1648, %v1702, %v1703
      %v1705 = vrot.slane %v1606, 5
      %v1706 = vrot.slane %v1705, 4
      %v1707 = vrot.slane %v767, 5
      %v1708 = vsel %vm1648, %v1706, %v1707
      %v1709 = vrot.slane %v1707, 4
      %v1710 = vrot.slane %v791, 5
      %v1711 = vsel %vm1648, %v1709, %v1710
      %v1712 = vrot.slane %v1607, 5
      %v1713 = vrot.slane %v1712, 4
      %v1714 = vrot.slane %v769, 5
      %v1715 = vsel %vm1648, %v1713, %v1714
      %v1716 = vrot.slane %v1714, 4
      %v1717 = vrot.slane %v792, 5
      %v1718 = vsel %vm1648, %v1716, %v1717
      %v1719 = vrot.slane %v1608, 5
      %v1720 = vrot.slane %v1719, 4
      %v1721 = vrot.slane %v771, 5
      %v1722 = vsel %vm1648, %v1720, %v1721
      %v1723 = vrot.slane %v1721, 4
      %v1724 = vrot.slane %v793, 5
      %v1725 = vsel %vm1648, %v1723, %v1724
      %v1726 = vrot.slane %v1609, 5
      %v1727 = vrot.slane %v1726, 4
      %v1728 = vrot.slane %v773, 5
      %v1729 = vsel %vm1648, %v1727, %v1728
      %v1730 = vrot.slane %v1728, 4
      %v1731 = vrot.slane %v794, 5
      %v1732 = vsel %vm1648, %v1730, %v1731
      %v1733 = vrot.slane %v1610, 5
      %v1734 = vrot.slane %v1733, 4
      %v1735 = vrot.slane %v775, 5
      %v1736 = vsel %vm1648, %v1734, %v1735
      %v1737 = vrot.slane %v1735, 4
      %v1738 = vrot.slane %v795, 5
      %v1739 = vsel %vm1648, %v1737, %v1738
      %v1740 = vrot.slane %v1611, 5
      %v1741 = vrot.slane %v1740, 4
      %v1742 = vrot.slane %v777, 5
      %v1743 = vsel %vm1648, %v1741, %v1742
      %v1744 = vrot.slane %v1742, 4
      %v1745 = vrot.slane %v796, 5
      %v1746 = vsel %vm1648, %v1744, %v1745
      %v1747 = vrot.slane %v1612, 5
      %v1748 = vrot.slane %v1747, 4
      %v1749 = vrot.slane %v779, 5
      %v1750 = vsel %vm1648, %v1748, %v1749
      %v1751 = vrot.slane %v1749, 4
      %v1752 = vrot.slane %v797, 5
      %v1753 = vsel %vm1648, %v1751, %v1752
      %v1754 = vrot.slane %v1613, 5
      %v1755 = vrot.slane %v1754, 4
      %v1756 = vrot.slane %v781, 5
      %v1757 = vsel %vm1648, %v1755, %v1756
      %v1758 = vrot.slane %v1756, 4
      %v1759 = vrot.slane %v798, 5
      %v1760 = vsel %vm1648, %v1758, %v1759
      %s1761 = scalar_lea.vmem %s1, 4
      %v1762 = vld [vmem:[%s1761] sm:$0x3]
      %v1763 = vunpack.c.l.b16 %v1652
      %v1764 = vunpack.c.l.b16 %v1655
      %v1765 = vunpack.c.l.b16 %v1659
      %v1766 = vunpack.c.l.b16 %v1662
      %v1767 = vunpack.c.l.b16 %v1666
      %v1768 = vunpack.c.l.b16 %v1669
      %v1769 = vunpack.c.l.b16 %v1673
      %v1770 = vunpack.c.l.b16 %v1676
      %v1771 = vunpack.c.l.b16 %v1680
      %v1772 = vunpack.c.l.b16 %v1683
      %v1773 = vunpack.c.l.b16 %v1687
      %v1774 = vunpack.c.l.b16 %v1690
      %v1775 = vunpack.c.l.b16 %v1694
      %v1776 = vunpack.c.l.b16 %v1697
      %v1777 = vunpack.c.l.b16 %v1701
      %v1778 = vunpack.c.l.b16 %v1704
      %v1779 = vunpack.c.l.b16 %v1708
      %v1780 = vunpack.c.l.b16 %v1711
      %v1781 = vunpack.c.l.b16 %v1715
      %v1782 = vunpack.c.l.b16 %v1718
      %v1783 = vunpack.c.l.b16 %v1722
      %v1784 = vunpack.c.l.b16 %v1725
      %v1785 = vunpack.c.l.b16 %v1729
      %v1786 = vunpack.c.l.b16 %v1732
      %v1787 = vunpack.c.l.b16 %v1736
      %v1788 = vunpack.c.l.b16 %v1739
      %v1789 = vunpack.c.l.b16 %v1743
      %v1790 = vunpack.c.l.b16 %v1746
      %v1791 = vunpack.c.l.b16 %v1750
      %v1792 = vunpack.c.l.b16 %v1753
      %v1793 = vunpack.c.l.b16 %v1757
      %v1794 = vunpack.c.l.b16 %v1760
      %v1795 = vpack.c.b16 %v1764, %v1763
      %v1796 = vpack.c.b16 %v1766, %v1765
      %v1797 = vpack.c.b16 %v1768, %v1767
      %v1798 = vpack.c.b16 %v1770, %v1769
      %v1799 = vpack.c.b16 %v1772, %v1771
      %v1800 = vpack.c.b16 %v1774, %v1773
      %v1801 = vpack.c.b16 %v1776, %v1775
      %v1802 = vpack.c.b16 %v1778, %v1777
      %v1803 = vpack.c.b16 %v1780, %v1779
      %v1804 = vpack.c.b16 %v1782, %v1781
      %v1805 = vpack.c.b16 %v1784, %v1783
      %v1806 = vpack.c.b16 %v1786, %v1785
      %v1807 = vpack.c.b16 %v1788, %v1787
      %v1808 = vpack.c.b16 %v1790, %v1789
      %v1809 = vpack.c.b16 %v1792, %v1791
      %v1810 = vpack.c.b16 %v1794, %v1793
      %v1812 = vsel %vm1236, %v1795, 0
      %v1815 = vsel %vm1236, %v1796, 0
      %v1818 = vsel %vm1236, %v1797, 0
      %v1821 = vsel %vm1236, %v1798, 0
      %v1824 = vsel %vm1236, %v1799, 0
      %v1827 = vsel %vm1236, %v1800, 0
      %v1830 = vsel %vm1236, %v1801, 0
      %v1833 = vsel %vm1236, %v1802, 0
      %v1836 = vsel %vm1236, %v1803, 0
      %v1839 = vsel %vm1236, %v1804, 0
      %v1842 = vsel %vm1236, %v1805, 0
      %v1845 = vsel %vm1236, %v1806, 0
      %v1848 = vsel %vm1236, %v1807, 0
      %v1851 = vsel %vm1236, %v1808, 0
      %v1854 = vsel %vm1236, %v1809, 0
      %v1857 = vsel %vm1236, %v1810, 0
      %v1860 = vsel %vm1285, %v1762, 0
      %1862 = vmatpush.bf16.msra.mxu0 0
      %1863 = vmatpush.bf16.msra.mxu0 0
      %1864 = vmatpush.bf16.msra.mxu0 0
      %1865 = vmatpush.bf16.msra.mxu0 0
      %1866 = vmatpush.bf16.msra.mxu0 0
      %1867 = vmatpush.bf16.msra.mxu0 0
      %1868 = vmatpush.bf16.msra.mxu0 0
      %1869 = vmatpush.bf16.msra.mxu0 %v1860
      %1870 = vmatmul.bf16.gmra.mxu0 %v1812
      %v1871 = vpop.f32.mrf.mxu0
      %v1872 = vadd.f32 0.0, %v1871
      %v1873 = vpop.f32.mrf.mxu0
      %v1874 = vadd.f32 0.0, %v1873
      %1875 = vmatmul.bf16.gmra.mxu0 %v1815
      %v1876 = vpop.f32.mrf.mxu0
      %v1877 = vadd.f32 0.0, %v1876
      %v1878 = vpop.f32.mrf.mxu0
      %v1879 = vadd.f32 0.0, %v1878
      %1880 = vmatmul.bf16.gmra.mxu0 %v1818
      %v1881 = vpop.f32.mrf.mxu0
      %v1882 = vadd.f32 0.0, %v1881
      %v1883 = vpop.f32.mrf.mxu0
      %v1884 = vadd.f32 0.0, %v1883
      %1885 = vmatmul.bf16.gmra.mxu0 %v1821
      %v1886 = vpop.f32.mrf.mxu0
      %v1887 = vadd.f32 0.0, %v1886
      %v1888 = vpop.f32.mrf.mxu0
      %v1889 = vadd.f32 0.0, %v1888
      %1890 = vmatmul.bf16.gmra.mxu0 %v1824
      %v1891 = vpop.f32.mrf.mxu0
      %v1892 = vadd.f32 0.0, %v1891
      %v1893 = vpop.f32.mrf.mxu0
      %v1894 = vadd.f32 0.0, %v1893
      %1895 = vmatmul.bf16.gmra.mxu0 %v1827
      %v1896 = vpop.f32.mrf.mxu0
      %v1897 = vadd.f32 0.0, %v1896
      %v1898 = vpop.f32.mrf.mxu0
      %v1899 = vadd.f32 0.0, %v1898
      %1900 = vmatmul.bf16.gmra.mxu0 %v1830
      %v1901 = vpop.f32.mrf.mxu0
      %v1902 = vadd.f32 0.0, %v1901
      %v1903 = vpop.f32.mrf.mxu0
      %v1904 = vadd.f32 0.0, %v1903
      %1905 = vmatmul.bf16.gmra.mxu0 %v1833
      %v1906 = vpop.f32.mrf.mxu0
      %v1907 = vadd.f32 0.0, %v1906
      %v1908 = vpop.f32.mrf.mxu0
      %v1909 = vadd.f32 0.0, %v1908
      %1910 = vmatmul.bf16.gmra.mxu0 %v1836
      %v1911 = vpop.f32.mrf.mxu0
      %v1912 = vadd.f32 0.0, %v1911
      %v1913 = vpop.f32.mrf.mxu0
      %v1914 = vadd.f32 0.0, %v1913
      %1915 = vmatmul.bf16.gmra.mxu0 %v1839
      %v1916 = vpop.f32.mrf.mxu0
      %v1917 = vadd.f32 0.0, %v1916
      %v1918 = vpop.f32.mrf.mxu0
      %v1919 = vadd.f32 0.0, %v1918
      %1920 = vmatmul.bf16.gmra.mxu0 %v1842
      %v1921 = vpop.f32.mrf.mxu0
      %v1922 = vadd.f32 0.0, %v1921
      %v1923 = vpop.f32.mrf.mxu0
      %v1924 = vadd.f32 0.0, %v1923
      %1925 = vmatmul.bf16.gmra.mxu0 %v1845
      %v1926 = vpop.f32.mrf.mxu0
      %v1927 = vadd.f32 0.0, %v1926
      %v1928 = vpop.f32.mrf.mxu0
      %v1929 = vadd.f32 0.0, %v1928
      %1930 = vmatmul.bf16.gmra.mxu0 %v1848
      %v1931 = vpop.f32.mrf.mxu0
      %v1932 = vadd.f32 0.0, %v1931
      %v1933 = vpop.f32.mrf.mxu0
      %v1934 = vadd.f32 0.0, %v1933
      %1935 = vmatmul.bf16.gmra.mxu0 %v1851
      %v1936 = vpop.f32.mrf.mxu0
      %v1937 = vadd.f32 0.0, %v1936
      %v1938 = vpop.f32.mrf.mxu0
      %v1939 = vadd.f32 0.0, %v1938
      %1940 = vmatmul.bf16.gmra.mxu0 %v1854
      %v1941 = vpop.f32.mrf.mxu0
      %v1942 = vadd.f32 0.0, %v1941
      %v1943 = vpop.f32.mrf.mxu0
      %v1944 = vadd.f32 0.0, %v1943
      %1945 = vmatmul.bf16.gmra.mxu0 %v1857
      %v1946 = vpop.f32.mrf.mxu0
      %v1947 = vadd.f32 0.0, %v1946
      %v1948 = vpop.f32.mrf.mxu0
      %v1949 = vadd.f32 0.0, %v1948
      %1950 = vdwg.mxu0
      %v1951 = vadd.f32 %v1519, %v1872
      %v1952 = vadd.f32 %v1521, %v1874
      %v1953 = vadd.f32 %v1524, %v1877
      %v1954 = vadd.f32 %v1526, %v1879
      %v1955 = vadd.f32 %v1529, %v1882
      %v1956 = vadd.f32 %v1531, %v1884
      %v1957 = vadd.f32 %v1534, %v1887
      %v1958 = vadd.f32 %v1536, %v1889
      %v1959 = vadd.f32 %v1539, %v1892
      %v1960 = vadd.f32 %v1541, %v1894
      %v1961 = vadd.f32 %v1544, %v1897
      %v1962 = vadd.f32 %v1546, %v1899
      %v1963 = vadd.f32 %v1549, %v1902
      %v1964 = vadd.f32 %v1551, %v1904
      %v1965 = vadd.f32 %v1554, %v1907
      %v1966 = vadd.f32 %v1556, %v1909
      %v1967 = vadd.f32 %v1559, %v1912
      %v1968 = vadd.f32 %v1561, %v1914
      %v1969 = vadd.f32 %v1564, %v1917
      %v1970 = vadd.f32 %v1566, %v1919
      %v1971 = vadd.f32 %v1569, %v1922
      %v1972 = vadd.f32 %v1571, %v1924
      %v1973 = vadd.f32 %v1574, %v1927
      %v1974 = vadd.f32 %v1576, %v1929
      %v1975 = vadd.f32 %v1579, %v1932
      %v1976 = vadd.f32 %v1581, %v1934
      %v1977 = vadd.f32 %v1584, %v1937
      %v1978 = vadd.f32 %v1586, %v1939
      %v1979 = vadd.f32 %v1589, %v1942
      %v1980 = vadd.f32 %v1591, %v1944
      %v1981 = vadd.f32 %v1594, %v1947
      %v1982 = vadd.f32 %v1596, %v1949
      %v1983 = vld [vmem:[%s180] sm:$0xf]
      %v1984 = vld [vmem:[%s180 + $0x4] sm:$0xf]
      %v1985 = vld [vmem:[%s180 + $0xc] sm:$0xf]
      %v1986 = vld [vmem:[%s180 + $0x10] sm:$0xf]
      %v1987 = vld [vmem:[%s180 + $0x18] sm:$0xf]
      %v1988 = vld [vmem:[%s180 + $0x1c] sm:$0xf]
      %v1989 = vld [vmem:[%s180 + $0x24] sm:$0xf]
      %v1990 = vld [vmem:[%s180 + $0x28] sm:$0xf]
      %v1991 = vld [vmem:[%s180 + $0x30] sm:$0xf]
      %v1992 = vld [vmem:[%s180 + $0x34] sm:$0xf]
      %v1993 = vld [vmem:[%s180 + $0x3c] sm:$0xf]
      %v1994 = vld [vmem:[%s180 + $0x40] sm:$0xf]
      %v1995 = vld [vmem:[%s180 + $0x48] sm:$0xf]
      %v1996 = vld [vmem:[%s180 + $0x4c] sm:$0xf]
      %v1997 = vld [vmem:[%s180 + $0x54] sm:$0xf]
      %v1998 = vld [vmem:[%s180 + $0x58] sm:$0xf]
      %v1999 = vld [vmem:[%s180 + $0x60] sm:$0xf]
      %v2000 = vld [vmem:[%s180 + $0x64] sm:$0xf]
      %v2001 = vld [vmem:[%s180 + $0x6c] sm:$0xf]
      %v2002 = vld [vmem:[%s180 + $0x70] sm:$0xf]
      %v2003 = vld [vmem:[%s180 + $0x78] sm:$0xf]
      %v2004 = vld [vmem:[%s180 + $0x7c] sm:$0xf]
      %v2005 = vld [vmem:[%s180 + $0x84] sm:$0xf]
      %v2006 = vld [vmem:[%s180 + $0x88] sm:$0xf]
      %v2007 = vld [vmem:[%s180 + $0x90] sm:$0xf]
      %v2008 = vld [vmem:[%s180 + $0x94] sm:$0xf]
      %v2009 = vld [vmem:[%s180 + $0x9c] sm:$0xf]
      %v2010 = vld [vmem:[%s180 + $0xa0] sm:$0xf]
      %v2011 = vld [vmem:[%s180 + $0xa8] sm:$0xf]
      %v2012 = vld [vmem:[%s180 + $0xac] sm:$0xf]
      %v2013 = vld [vmem:[%s180 + $0xb4] sm:$0xf]
      %v2014 = vld [vmem:[%s180 + $0xb8] sm:$0xf]
      %s2015 = scalar_lea.vmem %s1, 6
      %v2016 = vld [vmem:[%s2015] sm:$0x3]
      %v2049 = vunpack.c.l.b16 %v1983
      %v2050 = vunpack.c.l.b16 %v1984
      %v2051 = vunpack.c.l.b16 %v1985
      %v2052 = vunpack.c.l.b16 %v1986
      %v2053 = vunpack.c.l.b16 %v1987
      %v2054 = vunpack.c.l.b16 %v1988
      %v2055 = vunpack.c.l.b16 %v1989
      %v2056 = vunpack.c.l.b16 %v1990
      %v2057 = vunpack.c.l.b16 %v1991
      %v2058 = vunpack.c.l.b16 %v1992
      %v2059 = vunpack.c.l.b16 %v1993
      %v2060 = vunpack.c.l.b16 %v1994
      %v2061 = vunpack.c.l.b16 %v1995
      %v2062 = vunpack.c.l.b16 %v1996
      %v2063 = vunpack.c.l.b16 %v1997
      %v2064 = vunpack.c.l.b16 %v1998
      %v2065 = vunpack.c.l.b16 %v1999
      %v2066 = vunpack.c.l.b16 %v2000
      %v2067 = vunpack.c.l.b16 %v2001
      %v2068 = vunpack.c.l.b16 %v2002
      %v2069 = vunpack.c.l.b16 %v2003
      %v2070 = vunpack.c.l.b16 %v2004
      %v2071 = vunpack.c.l.b16 %v2005
      %v2072 = vunpack.c.l.b16 %v2006
      %v2073 = vunpack.c.l.b16 %v2007
      %v2074 = vunpack.c.l.b16 %v2008
      %v2075 = vunpack.c.l.b16 %v2009
      %v2076 = vunpack.c.l.b16 %v2010
      %v2077 = vunpack.c.l.b16 %v2011
      %v2078 = vunpack.c.l.b16 %v2012
      %v2079 = vunpack.c.l.b16 %v2013
      %v2080 = vunpack.c.l.b16 %v2014
      %v2081 = vpack.c.b16 %v2050, %v2049
      %v2082 = vpack.c.b16 %v2052, %v2051
      %v2083 = vpack.c.b16 %v2054, %v2053
      %v2084 = vpack.c.b16 %v2056, %v2055
      %v2085 = vpack.c.b16 %v2058, %v2057
      %v2086 = vpack.c.b16 %v2060, %v2059
      %v2087 = vpack.c.b16 %v2062, %v2061
      %v2088 = vpack.c.b16 %v2064, %v2063
      %v2089 = vpack.c.b16 %v2066, %v2065
      %v2090 = vpack.c.b16 %v2068, %v2067
      %v2091 = vpack.c.b16 %v2070, %v2069
      %v2092 = vpack.c.b16 %v2072, %v2071
      %v2093 = vpack.c.b16 %v2074, %v2073
      %v2094 = vpack.c.b16 %v2076, %v2075
      %v2095 = vpack.c.b16 %v2078, %v2077
      %v2096 = vpack.c.b16 %v2080, %v2079
      %v2098 = vsel %vm1236, %v2081, 0
      %v2101 = vsel %vm1236, %v2082, 0
      %v2104 = vsel %vm1236, %v2083, 0
      %v2107 = vsel %vm1236, %v2084, 0
      %v2110 = vsel %vm1236, %v2085, 0
      %v2113 = vsel %vm1236, %v2086, 0
      %v2116 = vsel %vm1236, %v2087, 0
      %v2119 = vsel %vm1236, %v2088, 0
      %v2122 = vsel %vm1236, %v2089, 0
      %v2125 = vsel %vm1236, %v2090, 0
      %v2128 = vsel %vm1236, %v2091, 0
      %v2131 = vsel %vm1236, %v2092, 0
      %v2134 = vsel %vm1236, %v2093, 0
      %v2137 = vsel %vm1236, %v2094, 0
      %v2140 = vsel %vm1236, %v2095, 0
      %v2143 = vsel %vm1236, %v2096, 0
      %v2146 = vsel %vm1285, %v2016, 0
      %2148 = vmatpush.bf16.msra.mxu0 0
      %2149 = vmatpush.bf16.msra.mxu0 0
      %2150 = vmatpush.bf16.msra.mxu0 0
      %2151 = vmatpush.bf16.msra.mxu0 0
      %2152 = vmatpush.bf16.msra.mxu0 0
      %2153 = vmatpush.bf16.msra.mxu0 0
      %2154 = vmatpush.bf16.msra.mxu0 0
      %2155 = vmatpush.bf16.msra.mxu0 %v2146
      %2156 = vmatmul.bf16.gmra.mxu0 %v2098
      %v2157 = vpop.f32.mrf.mxu0
      %v2158 = vadd.f32 0.0, %v2157
      %v2159 = vpop.f32.mrf.mxu0
      %v2160 = vadd.f32 0.0, %v2159
      %2161 = vmatmul.bf16.gmra.mxu0 %v2101
      %v2162 = vpop.f32.mrf.mxu0
      %v2163 = vadd.f32 0.0, %v2162
      %v2164 = vpop.f32.mrf.mxu0
      %v2165 = vadd.f32 0.0, %v2164
      %2166 = vmatmul.bf16.gmra.mxu0 %v2104
      %v2167 = vpop.f32.mrf.mxu0
      %v2168 = vadd.f32 0.0, %v2167
      %v2169 = vpop.f32.mrf.mxu0
      %v2170 = vadd.f32 0.0, %v2169
      %2171 = vmatmul.bf16.gmra.mxu0 %v2107
      %v2172 = vpop.f32.mrf.mxu0
      %v2173 = vadd.f32 0.0, %v2172
      %v2174 = vpop.f32.mrf.mxu0
      %v2175 = vadd.f32 0.0, %v2174
      %2176 = vmatmul.bf16.gmra.mxu0 %v2110
      %v2177 = vpop.f32.mrf.mxu0
      %v2178 = vadd.f32 0.0, %v2177
      %v2179 = vpop.f32.mrf.mxu0
      %v2180 = vadd.f32 0.0, %v2179
      %2181 = vmatmul.bf16.gmra.mxu0 %v2113
      %v2182 = vpop.f32.mrf.mxu0
      %v2183 = vadd.f32 0.0, %v2182
      %v2184 = vpop.f32.mrf.mxu0
      %v2185 = vadd.f32 0.0, %v2184
      %2186 = vmatmul.bf16.gmra.mxu0 %v2116
      %v2187 = vpop.f32.mrf.mxu0
      %v2188 = vadd.f32 0.0, %v2187
      %v2189 = vpop.f32.mrf.mxu0
      %v2190 = vadd.f32 0.0, %v2189
      %2191 = vmatmul.bf16.gmra.mxu0 %v2119
      %v2192 = vpop.f32.mrf.mxu0
      %v2193 = vadd.f32 0.0, %v2192
      %v2194 = vpop.f32.mrf.mxu0
      %v2195 = vadd.f32 0.0, %v2194
      %2196 = vmatmul.bf16.gmra.mxu0 %v2122
      %v2197 = vpop.f32.mrf.mxu0
      %v2198 = vadd.f32 0.0, %v2197
      %v2199 = vpop.f32.mrf.mxu0
      %v2200 = vadd.f32 0.0, %v2199
      %2201 = vmatmul.bf16.gmra.mxu0 %v2125
      %v2202 = vpop.f32.mrf.mxu0
      %v2203 = vadd.f32 0.0, %v2202
      %v2204 = vpop.f32.mrf.mxu0
      %v2205 = vadd.f32 0.0, %v2204
      %2206 = vmatmul.bf16.gmra.mxu0 %v2128
      %v2207 = vpop.f32.mrf.mxu0
      %v2208 = vadd.f32 0.0, %v2207
      %v2209 = vpop.f32.mrf.mxu0
      %v2210 = vadd.f32 0.0, %v2209
      %2211 = vmatmul.bf16.gmra.mxu0 %v2131
      %v2212 = vpop.f32.mrf.mxu0
      %v2213 = vadd.f32 0.0, %v2212
      %v2214 = vpop.f32.mrf.mxu0
      %v2215 = vadd.f32 0.0, %v2214
      %2216 = vmatmul.bf16.gmra.mxu0 %v2134
      %v2217 = vpop.f32.mrf.mxu0
      %v2218 = vadd.f32 0.0, %v2217
      %v2219 = vpop.f32.mrf.mxu0
      %v2220 = vadd.f32 0.0, %v2219
      %2221 = vmatmul.bf16.gmra.mxu0 %v2137
      %v2222 = vpop.f32.mrf.mxu0
      %v2223 = vadd.f32 0.0, %v2222
      %v2224 = vpop.f32.mrf.mxu0
      %v2225 = vadd.f32 0.0, %v2224
      %2226 = vmatmul.bf16.gmra.mxu0 %v2140
      %v2227 = vpop.f32.mrf.mxu0
      %v2228 = vadd.f32 0.0, %v2227
      %v2229 = vpop.f32.mrf.mxu0
      %v2230 = vadd.f32 0.0, %v2229
      %2231 = vmatmul.bf16.gmra.mxu0 %v2143
      %v2232 = vpop.f32.mrf.mxu0
      %v2233 = vadd.f32 0.0, %v2232
      %v2234 = vpop.f32.mrf.mxu0
      %v2235 = vadd.f32 0.0, %v2234
      %2236 = vdwg.mxu0
      %v2237 = vadd.f32 %v1951, %v2158
      %v2238 = vadd.f32 %v1952, %v2160
      %v2239 = vadd.f32 %v1953, %v2163
      %v2240 = vadd.f32 %v1954, %v2165
      %v2241 = vadd.f32 %v1955, %v2168
      %v2242 = vadd.f32 %v1956, %v2170
      %v2243 = vadd.f32 %v1957, %v2173
      %v2244 = vadd.f32 %v1958, %v2175
      %v2245 = vadd.f32 %v1959, %v2178
      %v2246 = vadd.f32 %v1960, %v2180
      %v2247 = vadd.f32 %v1961, %v2183
      %v2248 = vadd.f32 %v1962, %v2185
      %v2249 = vadd.f32 %v1963, %v2188
      %v2250 = vadd.f32 %v1964, %v2190
      %v2251 = vadd.f32 %v1965, %v2193
      %v2252 = vadd.f32 %v1966, %v2195
      %v2253 = vadd.f32 %v1967, %v2198
      %v2254 = vadd.f32 %v1968, %v2200
      %v2255 = vadd.f32 %v1969, %v2203
      %v2256 = vadd.f32 %v1970, %v2205
      %v2257 = vadd.f32 %v1971, %v2208
      %v2258 = vadd.f32 %v1972, %v2210
      %v2259 = vadd.f32 %v1973, %v2213
      %v2260 = vadd.f32 %v1974, %v2215
      %v2261 = vadd.f32 %v1975, %v2218
      %v2262 = vadd.f32 %v1976, %v2220
      %v2263 = vadd.f32 %v1977, %v2223
      %v2264 = vadd.f32 %v1978, %v2225
      %v2265 = vadd.f32 %v1979, %v2228
      %v2266 = vadd.f32 %v1980, %v2230
      %v2267 = vadd.f32 %v1981, %v2233
      %v2268 = vadd.f32 %v1982, %v2235
      %v2269 = vld [vmem:[%s180] sm:$0xf]
      %v2270 = vld [vmem:[%s180 + $0x4] sm:$0xf]
      %v2271 = vld [vmem:[%s180 + $0x8] sm:$0x1]
      %v2272 = vld [vmem:[%s180 + $0xc] sm:$0xf]
      %v2273 = vld [vmem:[%s180 + $0x10] sm:$0xf]
      %v2274 = vld [vmem:[%s180 + $0x14] sm:$0x1]
      %v2275 = vld [vmem:[%s180 + $0x18] sm:$0xf]
      %v2276 = vld [vmem:[%s180 + $0x1c] sm:$0xf]
      %v2277 = vld [vmem:[%s180 + $0x20] sm:$0x1]
      %v2278 = vld [vmem:[%s180 + $0x24] sm:$0xf]
      %v2279 = vld [vmem:[%s180 + $0x28] sm:$0xf]
      %v2280 = vld [vmem:[%s180 + $0x2c] sm:$0x1]
      %v2281 = vld [vmem:[%s180 + $0x30] sm:$0xf]
      %v2282 = vld [vmem:[%s180 + $0x34] sm:$0xf]
      %v2283 = vld [vmem:[%s180 + $0x38] sm:$0x1]
      %v2284 = vld [vmem:[%s180 + $0x3c] sm:$0xf]
      %v2285 = vld [vmem:[%s180 + $0x40] sm:$0xf]
      %v2286 = vld [vmem:[%s180 + $0x44] sm:$0x1]
      %v2287 = vld [vmem:[%s180 + $0x48] sm:$0xf]
      %v2288 = vld [vmem:[%s180 + $0x4c] sm:$0xf]
      %v2289 = vld [vmem:[%s180 + $0x50] sm:$0x1]
      %v2290 = vld [vmem:[%s180 + $0x54] sm:$0xf]
      %v2291 = vld [vmem:[%s180 + $0x58] sm:$0xf]
      %v2292 = vld [vmem:[%s180 + $0x5c] sm:$0x1]
      %v2293 = vld [vmem:[%s180 + $0x60] sm:$0xf]
      %v2294 = vld [vmem:[%s180 + $0x64] sm:$0xf]
      %v2295 = vld [vmem:[%s180 + $0x68] sm:$0x1]
      %v2296 = vld [vmem:[%s180 + $0x6c] sm:$0xf]
      %v2297 = vld [vmem:[%s180 + $0x70] sm:$0xf]
      %v2298 = vld [vmem:[%s180 + $0x74] sm:$0x1]
      %v2299 = vld [vmem:[%s180 + $0x78] sm:$0xf]
      %v2300 = vld [vmem:[%s180 + $0x7c] sm:$0xf]
      %v2301 = vld [vmem:[%s180 + $0x80] sm:$0x1]
      %v2302 = vld [vmem:[%s180 + $0x84] sm:$0xf]
      %v2303 = vld [vmem:[%s180 + $0x88] sm:$0xf]
      %v2304 = vld [vmem:[%s180 + $0x8c] sm:$0x1]
      %v2305 = vld [vmem:[%s180 + $0x90] sm:$0xf]
      %v2306 = vld [vmem:[%s180 + $0x94] sm:$0xf]
      %v2307 = vld [vmem:[%s180 + $0x98] sm:$0x1]
      %v2308 = vld [vmem:[%s180 + $0x9c] sm:$0xf]
      %v2309 = vld [vmem:[%s180 + $0xa0] sm:$0xf]
      %v2310 = vld [vmem:[%s180 + $0xa4] sm:$0x1]
      %v2311 = vld [vmem:[%s180 + $0xa8] sm:$0xf]
      %v2312 = vld [vmem:[%s180 + $0xac] sm:$0xf]
      %v2313 = vld [vmem:[%s180 + $0xb0] sm:$0x1]
      %v2314 = vld [vmem:[%s180 + $0xb4] sm:$0xf]
      %v2315 = vld [vmem:[%s180 + $0xb8] sm:$0xf]
      %v2316 = vld [vmem:[%s180 + $0xbc] sm:$0x1]
      %v2318 = vshrl.u32 %v2269, 16
      %v2320 = vrot.slane %v2318, 4
      %v2321 = vshll.u32 %v2269, 16
      %v2323 = vrot.slane %v2321, 5
      %v2324 = vor.u32 %v2320, %v2323
      %v2325 = vrot.slane %v2324, 4
      %v2327 = vshll.u32 %v2270, 16
      %v2329 = vrot.slane %v2327, 5
      %v2330 = vsel %vm801, %v2325, %v2329
      %v2331 = vshrl.u32 %v2270, 16
      %v2333 = vrot.slane %v2331, 4
      %v2334 = vor.u32 %v2333, %v2329
      %v2335 = vrot.slane %v2334, 4
      %v2337 = vshll.u32 %v2271, 16
      %v2339 = vrot.slane %v2337, 5
      %v2340 = vsel %vm801, %v2335, %v2339
      %v2342 = vshrl.u32 %v2272, 16
      %v2344 = vrot.slane %v2342, 4
      %v2345 = vshll.u32 %v2272, 16
      %v2347 = vrot.slane %v2345, 5
      %v2348 = vor.u32 %v2344, %v2347
      %v2349 = vrot.slane %v2348, 4
      %v2351 = vshll.u32 %v2273, 16
      %v2353 = vrot.slane %v2351, 5
      %v2354 = vsel %vm801, %v2349, %v2353
      %v2355 = vshrl.u32 %v2273, 16
      %v2357 = vrot.slane %v2355, 4
      %v2358 = vor.u32 %v2357, %v2353
      %v2359 = vrot.slane %v2358, 4
      %v2361 = vshll.u32 %v2274, 16
      %v2363 = vrot.slane %v2361, 5
      %v2364 = vsel %vm801, %v2359, %v2363
      %v2366 = vshrl.u32 %v2275, 16
      %v2368 = vrot.slane %v2366, 4
      %v2369 = vshll.u32 %v2275, 16
      %v2371 = vrot.slane %v2369, 5
      %v2372 = vor.u32 %v2368, %v2371
      %v2373 = vrot.slane %v2372, 4
      %v2375 = vshll.u32 %v2276, 16
      %v2377 = vrot.slane %v2375, 5
      %v2378 = vsel %vm801, %v2373, %v2377
      %v2379 = vshrl.u32 %v2276, 16
      %v2381 = vrot.slane %v2379, 4
      %v2382 = vor.u32 %v2381, %v2377
      %v2383 = vrot.slane %v2382, 4
      %v2385 = vshll.u32 %v2277, 16
      %v2387 = vrot.slane %v2385, 5
      %v2388 = vsel %vm801, %v2383, %v2387
      %v2390 = vshrl.u32 %v2278, 16
      %v2392 = vrot.slane %v2390, 4
      %v2393 = vshll.u32 %v2278, 16
      %v2395 = vrot.slane %v2393, 5
      %v2396 = vor.u32 %v2392, %v2395
      %v2397 = vrot.slane %v2396, 4
      %v2399 = vshll.u32 %v2279, 16
      %v2401 = vrot.slane %v2399, 5
      %v2402 = vsel %vm801, %v2397, %v2401
      %v2403 = vshrl.u32 %v2279, 16
      %v2405 = vrot.slane %v2403, 4
      %v2406 = vor.u32 %v2405, %v2401
      %v2407 = vrot.slane %v2406, 4
      %v2409 = vshll.u32 %v2280, 16
      %v2411 = vrot.slane %v2409, 5
      %v2412 = vsel %vm801, %v2407, %v2411
      %v2414 = vshrl.u32 %v2281, 16
      %v2416 = vrot.slane %v2414, 4
      %v2417 = vshll.u32 %v2281, 16
      %v2419 = vrot.slane %v2417, 5
      %v2420 = vor.u32 %v2416, %v2419
      %v2421 = vrot.slane %v2420, 4
      %v2423 = vshll.u32 %v2282, 16
      %v2425 = vrot.slane %v2423, 5
      %v2426 = vsel %vm801, %v2421, %v2425
      %v2427 = vshrl.u32 %v2282, 16
      %v2429 = vrot.slane %v2427, 4
      %v2430 = vor.u32 %v2429, %v2425
      %v2431 = vrot.slane %v2430, 4
      %v2433 = vshll.u32 %v2283, 16
      %v2435 = vrot.slane %v2433, 5
      %v2436 = vsel %vm801, %v2431, %v2435
      %v2438 = vshrl.u32 %v2284, 16
      %v2440 = vrot.slane %v2438, 4
      %v2441 = vshll.u32 %v2284, 16
      %v2443 = vrot.slane %v2441, 5
      %v2444 = vor.u32 %v2440, %v2443
      %v2445 = vrot.slane %v2444, 4
      %v2447 = vshll.u32 %v2285, 16
      %v2449 = vrot.slane %v2447, 5
      %v2450 = vsel %vm801, %v2445, %v2449
      %v2451 = vshrl.u32 %v2285, 16
      %v2453 = vrot.slane %v2451, 4
      %v2454 = vor.u32 %v2453, %v2449
      %v2455 = vrot.slane %v2454, 4
      %v2457 = vshll.u32 %v2286, 16
      %v2459 = vrot.slane %v2457, 5
      %v2460 = vsel %vm801, %v2455, %v2459
      %v2462 = vshrl.u32 %v2287, 16
      %v2464 = vrot.slane %v2462, 4
      %v2465 = vshll.u32 %v2287, 16
      %v2467 = vrot.slane %v2465, 5
      %v2468 = vor.u32 %v2464, %v2467
      %v2469 = vrot.slane %v2468, 4
      %v2471 = vshll.u32 %v2288, 16
      %v2473 = vrot.slane %v2471, 5
      %v2474 = vsel %vm801, %v2469, %v2473
      %v2475 = vshrl.u32 %v2288, 16
      %v2477 = vrot.slane %v2475, 4
      %v2478 = vor.u32 %v2477, %v2473
      %v2479 = vrot.slane %v2478, 4
      %v2481 = vshll.u32 %v2289, 16
      %v2483 = vrot.slane %v2481, 5
      %v2484 = vsel %vm801, %v2479, %v2483
      %v2486 = vshrl.u32 %v2290, 16
      %v2488 = vrot.slane %v2486, 4
      %v2489 = vshll.u32 %v2290, 16
      %v2491 = vrot.slane %v2489, 5
      %v2492 = vor.u32 %v2488, %v2491
      %v2493 = vrot.slane %v2492, 4
      %v2495 = vshll.u32 %v2291, 16
      %v2497 = vrot.slane %v2495, 5
      %v2498 = vsel %vm801, %v2493, %v2497
      %v2499 = vshrl.u32 %v2291, 16
      %v2501 = vrot.slane %v2499, 4
      %v2502 = vor.u32 %v2501, %v2497
      %v2503 = vrot.slane %v2502, 4
      %v2505 = vshll.u32 %v2292, 16
      %v2507 = vrot.slane %v2505, 5
      %v2508 = vsel %vm801, %v2503, %v2507
      %v2510 = vshrl.u32 %v2293, 16
      %v2512 = vrot.slane %v2510, 4
      %v2513 = vshll.u32 %v2293, 16
      %v2515 = vrot.slane %v2513, 5
      %v2516 = vor.u32 %v2512, %v2515
      %v2517 = vrot.slane %v2516, 4
      %v2519 = vshll.u32 %v2294, 16
      %v2521 = vrot.slane %v2519, 5
      %v2522 = vsel %vm801, %v2517, %v2521
      %v2523 = vshrl.u32 %v2294, 16
      %v2525 = vrot.slane %v2523, 4
      %v2526 = vor.u32 %v2525, %v2521
      %v2527 = vrot.slane %v2526, 4
      %v2529 = vshll.u32 %v2295, 16
      %v2531 = vrot.slane %v2529, 5
      %v2532 = vsel %vm801, %v2527, %v2531
      %v2534 = vshrl.u32 %v2296, 16
      %v2536 = vrot.slane %v2534, 4
      %v2537 = vshll.u32 %v2296, 16
      %v2539 = vrot.slane %v2537, 5
      %v2540 = vor.u32 %v2536, %v2539
      %v2541 = vrot.slane %v2540, 4
      %v2543 = vshll.u32 %v2297, 16
      %v2545 = vrot.slane %v2543, 5
      %v2546 = vsel %vm801, %v2541, %v2545
      %v2547 = vshrl.u32 %v2297, 16
      %v2549 = vrot.slane %v2547, 4
      %v2550 = vor.u32 %v2549, %v2545
      %v2551 = vrot.slane %v2550, 4
      %v2553 = vshll.u32 %v2298, 16
      %v2555 = vrot.slane %v2553, 5
      %v2556 = vsel %vm801, %v2551, %v2555
      %v2558 = vshrl.u32 %v2299, 16
      %v2560 = vrot.slane %v2558, 4
      %v2561 = vshll.u32 %v2299, 16
      %v2563 = vrot.slane %v2561, 5
      %v2564 = vor.u32 %v2560, %v2563
      %v2565 = vrot.slane %v2564, 4
      %v2567 = vshll.u32 %v2300, 16
      %v2569 = vrot.slane %v2567, 5
      %v2570 = vsel %vm801, %v2565, %v2569
      %v2571 = vshrl.u32 %v2300, 16
      %v2573 = vrot.slane %v2571, 4
      %v2574 = vor.u32 %v2573, %v2569
      %v2575 = vrot.slane %v2574, 4
      %v2577 = vshll.u32 %v2301, 16
      %v2579 = vrot.slane %v2577, 5
      %v2580 = vsel %vm801, %v2575, %v2579
      %v2582 = vshrl.u32 %v2302, 16
      %v2584 = vrot.slane %v2582, 4
      %v2585 = vshll.u32 %v2302, 16
      %v2587 = vrot.slane %v2585, 5
      %v2588 = vor.u32 %v2584, %v2587
      %v2589 = vrot.slane %v2588, 4
      %v2591 = vshll.u32 %v2303, 16
      %v2593 = vrot.slane %v2591, 5
      %v2594 = vsel %vm801, %v2589, %v2593
      %v2595 = vshrl.u32 %v2303, 16
      %v2597 = vrot.slane %v2595, 4
      %v2598 = vor.u32 %v2597, %v2593
      %v2599 = vrot.slane %v2598, 4
      %v2601 = vshll.u32 %v2304, 16
      %v2603 = vrot.slane %v2601, 5
      %v2604 = vsel %vm801, %v2599, %v2603
      %v2606 = vshrl.u32 %v2305, 16
      %v2608 = vrot.slane %v2606, 4
      %v2609 = vshll.u32 %v2305, 16
      %v2611 = vrot.slane %v2609, 5
      %v2612 = vor.u32 %v2608, %v2611
      %v2613 = vrot.slane %v2612, 4
      %v2615 = vshll.u32 %v2306, 16
      %v2617 = vrot.slane %v2615, 5
      %v2618 = vsel %vm801, %v2613, %v2617
      %v2619 = vshrl.u32 %v2306, 16
      %v2621 = vrot.slane %v2619, 4
      %v2622 = vor.u32 %v2621, %v2617
      %v2623 = vrot.slane %v2622, 4
      %v2625 = vshll.u32 %v2307, 16
      %v2627 = vrot.slane %v2625, 5
      %v2628 = vsel %vm801, %v2623, %v2627
      %v2630 = vshrl.u32 %v2308, 16
      %v2632 = vrot.slane %v2630, 4
      %v2633 = vshll.u32 %v2308, 16
      %v2635 = vrot.slane %v2633, 5
      %v2636 = vor.u32 %v2632, %v2635
      %v2637 = vrot.slane %v2636, 4
      %v2639 = vshll.u32 %v2309, 16
      %v2641 = vrot.slane %v2639, 5
      %v2642 = vsel %vm801, %v2637, %v2641
      %v2643 = vshrl.u32 %v2309, 16
      %v2645 = vrot.slane %v2643, 4
      %v2646 = vor.u32 %v2645, %v2641
      %v2647 = vrot.slane %v2646, 4
      %v2649 = vshll.u32 %v2310, 16
      %v2651 = vrot.slane %v2649, 5
      %v2652 = vsel %vm801, %v2647, %v2651
      %v2654 = vshrl.u32 %v2311, 16
      %v2656 = vrot.slane %v2654, 4
      %v2657 = vshll.u32 %v2311, 16
      %v2659 = vrot.slane %v2657, 5
      %v2660 = vor.u32 %v2656, %v2659
      %v2661 = vrot.slane %v2660, 4
      %v2663 = vshll.u32 %v2312, 16
      %v2665 = vrot.slane %v2663, 5
      %v2666 = vsel %vm801, %v2661, %v2665
      %v2667 = vshrl.u32 %v2312, 16
      %v2669 = vrot.slane %v2667, 4
      %v2670 = vor.u32 %v2669, %v2665
      %v2671 = vrot.slane %v2670, 4
      %v2673 = vshll.u32 %v2313, 16
      %v2675 = vrot.slane %v2673, 5
      %v2676 = vsel %vm801, %v2671, %v2675
      %v2678 = vshrl.u32 %v2314, 16
      %v2680 = vrot.slane %v2678, 4
      %v2681 = vshll.u32 %v2314, 16
      %v2683 = vrot.slane %v2681, 5
      %v2684 = vor.u32 %v2680, %v2683
      %v2685 = vrot.slane %v2684, 4
      %v2687 = vshll.u32 %v2315, 16
      %v2689 = vrot.slane %v2687, 5
      %v2690 = vsel %vm801, %v2685, %v2689
      %v2691 = vshrl.u32 %v2315, 16
      %v2693 = vrot.slane %v2691, 4
      %v2694 = vor.u32 %v2693, %v2689
      %v2695 = vrot.slane %v2694, 4
      %v2697 = vshll.u32 %v2316, 16
      %v2699 = vrot.slane %v2697, 5
      %v2700 = vsel %vm801, %v2695, %v2699
      %s2701 = scalar_lea.vmem %s1, 8
      %v2702 = vld [vmem:[%s2701] sm:$0x3]
      %v2703 = vunpack.c.l.b16 %v2330
      %v2704 = vunpack.c.l.b16 %v2340
      %v2705 = vunpack.c.l.b16 %v2354
      %v2706 = vunpack.c.l.b16 %v2364
      %v2707 = vunpack.c.l.b16 %v2378
      %v2708 = vunpack.c.l.b16 %v2388
      %v2709 = vunpack.c.l.b16 %v2402
      %v2710 = vunpack.c.l.b16 %v2412
      %v2711 = vunpack.c.l.b16 %v2426
      %v2712 = vunpack.c.l.b16 %v2436
      %v2713 = vunpack.c.l.b16 %v2450
      %v2714 = vunpack.c.l.b16 %v2460
      %v2715 = vunpack.c.l.b16 %v2474
      %v2716 = vunpack.c.l.b16 %v2484
      %v2717 = vunpack.c.l.b16 %v2498
      %v2718 = vunpack.c.l.b16 %v2508
      %v2719 = vunpack.c.l.b16 %v2522
      %v2720 = vunpack.c.l.b16 %v2532
      %v2721 = vunpack.c.l.b16 %v2546
      %v2722 = vunpack.c.l.b16 %v2556
      %v2723 = vunpack.c.l.b16 %v2570
      %v2724 = vunpack.c.l.b16 %v2580
      %v2725 = vunpack.c.l.b16 %v2594
      %v2726 = vunpack.c.l.b16 %v2604
      %v2727 = vunpack.c.l.b16 %v2618
      %v2728 = vunpack.c.l.b16 %v2628
      %v2729 = vunpack.c.l.b16 %v2642
      %v2730 = vunpack.c.l.b16 %v2652
      %v2731 = vunpack.c.l.b16 %v2666
      %v2732 = vunpack.c.l.b16 %v2676
      %v2733 = vunpack.c.l.b16 %v2690
      %v2734 = vunpack.c.l.b16 %v2700
      %v2735 = vpack.c.b16 %v2704, %v2703
      %v2736 = vpack.c.b16 %v2706, %v2705
      %v2737 = vpack.c.b16 %v2708, %v2707
      %v2738 = vpack.c.b16 %v2710, %v2709
      %v2739 = vpack.c.b16 %v2712, %v2711
      %v2740 = vpack.c.b16 %v2714, %v2713
      %v2741 = vpack.c.b16 %v2716, %v2715
      %v2742 = vpack.c.b16 %v2718, %v2717
      %v2743 = vpack.c.b16 %v2720, %v2719
      %v2744 = vpack.c.b16 %v2722, %v2721
      %v2745 = vpack.c.b16 %v2724, %v2723
      %v2746 = vpack.c.b16 %v2726, %v2725
      %v2747 = vpack.c.b16 %v2728, %v2727
      %v2748 = vpack.c.b16 %v2730, %v2729
      %v2749 = vpack.c.b16 %v2732, %v2731
      %v2750 = vpack.c.b16 %v2734, %v2733
      %v2752 = vsel %vm1236, %v2735, 0
      %v2755 = vsel %vm1236, %v2736, 0
      %v2758 = vsel %vm1236, %v2737, 0
      %v2761 = vsel %vm1236, %v2738, 0
      %v2764 = vsel %vm1236, %v2739, 0
      %v2767 = vsel %vm1236, %v2740, 0
      %v2770 = vsel %vm1236, %v2741, 0
      %v2773 = vsel %vm1236, %v2742, 0
      %v2776 = vsel %vm1236, %v2743, 0
      %v2779 = vsel %vm1236, %v2744, 0
      %v2782 = vsel %vm1236, %v2745, 0
      %v2785 = vsel %vm1236, %v2746, 0
      %v2788 = vsel %vm1236, %v2747, 0
      %v2791 = vsel %vm1236, %v2748, 0
      %v2794 = vsel %vm1236, %v2749, 0
      %v2797 = vsel %vm1236, %v2750, 0
      %v2800 = vsel %vm1285, %v2702, 0
      %2802 = vmatpush.bf16.msra.mxu0 0
      %2803 = vmatpush.bf16.msra.mxu0 0
      %2804 = vmatpush.bf16.msra.mxu0 0
      %2805 = vmatpush.bf16.msra.mxu0 0
      %2806 = vmatpush.bf16.msra.mxu0 0
      %2807 = vmatpush.bf16.msra.mxu0 0
      %2808 = vmatpush.bf16.msra.mxu0 0
      %2809 = vmatpush.bf16.msra.mxu0 %v2800
      %2810 = vmatmul.bf16.gmra.mxu0 %v2752
      %v2811 = vpop.f32.mrf.mxu0
      %v2812 = vadd.f32 0.0, %v2811
      %v2813 = vpop.f32.mrf.mxu0
      %v2814 = vadd.f32 0.0, %v2813
      %2815 = vmatmul.bf16.gmra.mxu0 %v2755
      %v2816 = vpop.f32.mrf.mxu0
      %v2817 = vadd.f32 0.0, %v2816
      %v2818 = vpop.f32.mrf.mxu0
      %v2819 = vadd.f32 0.0, %v2818
      %2820 = vmatmul.bf16.gmra.mxu0 %v2758
      %v2821 = vpop.f32.mrf.mxu0
      %v2822 = vadd.f32 0.0, %v2821
      %v2823 = vpop.f32.mrf.mxu0
      %v2824 = vadd.f32 0.0, %v2823
      %2825 = vmatmul.bf16.gmra.mxu0 %v2761
      %v2826 = vpop.f32.mrf.mxu0
      %v2827 = vadd.f32 0.0, %v2826
      %v2828 = vpop.f32.mrf.mxu0
      %v2829 = vadd.f32 0.0, %v2828
      %2830 = vmatmul.bf16.gmra.mxu0 %v2764
      %v2831 = vpop.f32.mrf.mxu0
      %v2832 = vadd.f32 0.0, %v2831
      %v2833 = vpop.f32.mrf.mxu0
      %v2834 = vadd.f32 0.0, %v2833
      %2835 = vmatmul.bf16.gmra.mxu0 %v2767
      %v2836 = vpop.f32.mrf.mxu0
      %v2837 = vadd.f32 0.0, %v2836
      %v2838 = vpop.f32.mrf.mxu0
      %v2839 = vadd.f32 0.0, %v2838
      %2840 = vmatmul.bf16.gmra.mxu0 %v2770
      %v2841 = vpop.f32.mrf.mxu0
      %v2842 = vadd.f32 0.0, %v2841
      %v2843 = vpop.f32.mrf.mxu0
      %v2844 = vadd.f32 0.0, %v2843
      %2845 = vmatmul.bf16.gmra.mxu0 %v2773
      %v2846 = vpop.f32.mrf.mxu0
      %v2847 = vadd.f32 0.0, %v2846
      %v2848 = vpop.f32.mrf.mxu0
      %v2849 = vadd.f32 0.0, %v2848
      %2850 = vmatmul.bf16.gmra.mxu0 %v2776
      %v2851 = vpop.f32.mrf.mxu0
      %v2852 = vadd.f32 0.0, %v2851
      %v2853 = vpop.f32.mrf.mxu0
      %v2854 = vadd.f32 0.0, %v2853
      %2855 = vmatmul.bf16.gmra.mxu0 %v2779
      %v2856 = vpop.f32.mrf.mxu0
      %v2857 = vadd.f32 0.0, %v2856
      %v2858 = vpop.f32.mrf.mxu0
      %v2859 = vadd.f32 0.0, %v2858
      %2860 = vmatmul.bf16.gmra.mxu0 %v2782
      %v2861 = vpop.f32.mrf.mxu0
      %v2862 = vadd.f32 0.0, %v2861
      %v2863 = vpop.f32.mrf.mxu0
      %v2864 = vadd.f32 0.0, %v2863
      %2865 = vmatmul.bf16.gmra.mxu0 %v2785
      %v2866 = vpop.f32.mrf.mxu0
      %v2867 = vadd.f32 0.0, %v2866
      %v2868 = vpop.f32.mrf.mxu0
      %v2869 = vadd.f32 0.0, %v2868
      %2870 = vmatmul.bf16.gmra.mxu0 %v2788
      %v2871 = vpop.f32.mrf.mxu0
      %v2872 = vadd.f32 0.0, %v2871
      %v2873 = vpop.f32.mrf.mxu0
      %v2874 = vadd.f32 0.0, %v2873
      %2875 = vmatmul.bf16.gmra.mxu0 %v2791
      %v2876 = vpop.f32.mrf.mxu0
      %v2877 = vadd.f32 0.0, %v2876
      %v2878 = vpop.f32.mrf.mxu0
      %v2879 = vadd.f32 0.0, %v2878
      %2880 = vmatmul.bf16.gmra.mxu0 %v2794
      %v2881 = vpop.f32.mrf.mxu0
      %v2882 = vadd.f32 0.0, %v2881
      %v2883 = vpop.f32.mrf.mxu0
      %v2884 = vadd.f32 0.0, %v2883
      %2885 = vmatmul.bf16.gmra.mxu0 %v2797
      %v2886 = vpop.f32.mrf.mxu0
      %v2887 = vadd.f32 0.0, %v2886
      %v2888 = vpop.f32.mrf.mxu0
      %v2889 = vadd.f32 0.0, %v2888
      %2890 = vdwg.mxu0
      %v2891 = vadd.f32 %v2237, %v2812
      %v2892 = vadd.f32 %v2238, %v2814
      %v2893 = vadd.f32 %v2239, %v2817
      %v2894 = vadd.f32 %v2240, %v2819
      %v2895 = vadd.f32 %v2241, %v2822
      %v2896 = vadd.f32 %v2242, %v2824
      %v2897 = vadd.f32 %v2243, %v2827
      %v2898 = vadd.f32 %v2244, %v2829
      %v2899 = vadd.f32 %v2245, %v2832
      %v2900 = vadd.f32 %v2246, %v2834
      %v2901 = vadd.f32 %v2247, %v2837
      %v2902 = vadd.f32 %v2248, %v2839
      %v2903 = vadd.f32 %v2249, %v2842
      %v2904 = vadd.f32 %v2250, %v2844
      %v2905 = vadd.f32 %v2251, %v2847
      %v2906 = vadd.f32 %v2252, %v2849
      %v2907 = vadd.f32 %v2253, %v2852
      %v2908 = vadd.f32 %v2254, %v2854
      %v2909 = vadd.f32 %v2255, %v2857
      %v2910 = vadd.f32 %v2256, %v2859
      %v2911 = vadd.f32 %v2257, %v2862
      %v2912 = vadd.f32 %v2258, %v2864
      %v2913 = vadd.f32 %v2259, %v2867
      %v2914 = vadd.f32 %v2260, %v2869
      %v2915 = vadd.f32 %v2261, %v2872
      %v2916 = vadd.f32 %v2262, %v2874
      %v2917 = vadd.f32 %v2263, %v2877
      %v2918 = vadd.f32 %v2264, %v2879
      %v2919 = vadd.f32 %v2265, %v2882
      %v2920 = vadd.f32 %v2266, %v2884
      %v2921 = vadd.f32 %v2267, %v2887
      %v2922 = vadd.f32 %v2268, %v2889
      %v2923 = vld [vmem:[%s180] sm:$0xe]
      %v2924 = vld [vmem:[%s180 + $0xc] sm:$0xe]
      %v2925 = vld [vmem:[%s180 + $0x18] sm:$0xe]
      %v2926 = vld [vmem:[%s180 + $0x24] sm:$0xe]
      %v2927 = vld [vmem:[%s180 + $0x30] sm:$0xe]
      %v2928 = vld [vmem:[%s180 + $0x3c] sm:$0xe]
      %v2929 = vld [vmem:[%s180 + $0x48] sm:$0xe]
      %v2930 = vld [vmem:[%s180 + $0x54] sm:$0xe]
      %v2931 = vld [vmem:[%s180 + $0x60] sm:$0xe]
      %v2932 = vld [vmem:[%s180 + $0x6c] sm:$0xe]
      %v2933 = vld [vmem:[%s180 + $0x78] sm:$0xe]
      %v2934 = vld [vmem:[%s180 + $0x84] sm:$0xe]
      %v2935 = vld [vmem:[%s180 + $0x90] sm:$0xe]
      %v2936 = vld [vmem:[%s180 + $0x9c] sm:$0xe]
      %v2937 = vld [vmem:[%s180 + $0xa8] sm:$0xe]
      %v2938 = vld [vmem:[%s180 + $0xb4] sm:$0xe]
      %v2987 = vrot.slane %v2923, 5
      %v2988 = vrot.slane %v2987, 4
      %v2989 = vrot.slane %v2270, 5
      %v2990 = vsel %vm1648, %v2988, %v2989
      %v2991 = vrot.slane %v2989, 4
      %v2992 = vrot.slane %v2271, 5
      %v2993 = vsel %vm1648, %v2991, %v2992
      %v2994 = vrot.slane %v2924, 5
      %v2995 = vrot.slane %v2994, 4
      %v2996 = vrot.slane %v2273, 5
      %v2997 = vsel %vm1648, %v2995, %v2996
      %v2998 = vrot.slane %v2996, 4
      %v2999 = vrot.slane %v2274, 5
      %v3000 = vsel %vm1648, %v2998, %v2999
      %v3001 = vrot.slane %v2925, 5
      %v3002 = vrot.slane %v3001, 4
      %v3003 = vrot.slane %v2276, 5
      %v3004 = vsel %vm1648, %v3002, %v3003
      %v3005 = vrot.slane %v3003, 4
      %v3006 = vrot.slane %v2277, 5
      %v3007 = vsel %vm1648, %v3005, %v3006
      %v3008 = vrot.slane %v2926, 5
      %v3009 = vrot.slane %v3008, 4
      %v3010 = vrot.slane %v2279, 5
      %v3011 = vsel %vm1648, %v3009, %v3010
      %v3012 = vrot.slane %v3010, 4
      %v3013 = vrot.slane %v2280, 5
      %v3014 = vsel %vm1648, %v3012, %v3013
      %v3015 = vrot.slane %v2927, 5
      %v3016 = vrot.slane %v3015, 4
      %v3017 = vrot.slane %v2282, 5
      %v3018 = vsel %vm1648, %v3016, %v3017
      %v3019 = vrot.slane %v3017, 4
      %v3020 = vrot.slane %v2283, 5
      %v3021 = vsel %vm1648, %v3019, %v3020
      %v3022 = vrot.slane %v2928, 5
      %v3023 = vrot.slane %v3022, 4
      %v3024 = vrot.slane %v2285, 5
      %v3025 = vsel %vm1648, %v3023, %v3024
      %v3026 = vrot.slane %v3024, 4
      %v3027 = vrot.slane %v2286, 5
      %v3028 = vsel %vm1648, %v3026, %v3027
      %v3029 = vrot.slane %v2929, 5
      %v3030 = vrot.slane %v3029, 4
      %v3031 = vrot.slane %v2288, 5
      %v3032 = vsel %vm1648, %v3030, %v3031
      %v3033 = vrot.slane %v3031, 4
      %v3034 = vrot.slane %v2289, 5
      %v3035 = vsel %vm1648, %v3033, %v3034
      %v3036 = vrot.slane %v2930, 5
      %v3037 = vrot.slane %v3036, 4
      %v3038 = vrot.slane %v2291, 5
      %v3039 = vsel %vm1648, %v3037, %v3038
      %v3040 = vrot.slane %v3038, 4
      %v3041 = vrot.slane %v2292, 5
      %v3042 = vsel %vm1648, %v3040, %v3041
      %v3043 = vrot.slane %v2931, 5
      %v3044 = vrot.slane %v3043, 4
      %v3045 = vrot.slane %v2294, 5
      %v3046 = vsel %vm1648, %v3044, %v3045
      %v3047 = vrot.slane %v3045, 4
      %v3048 = vrot.slane %v2295, 5
      %v3049 = vsel %vm1648, %v3047, %v3048
      %v3050 = vrot.slane %v2932, 5
      %v3051 = vrot.slane %v3050, 4
      %v3052 = vrot.slane %v2297, 5
      %v3053 = vsel %vm1648, %v3051, %v3052
      %v3054 = vrot.slane %v3052, 4
      %v3055 = vrot.slane %v2298, 5
      %v3056 = vsel %vm1648, %v3054, %v3055
      %v3057 = vrot.slane %v2933, 5
      %v3058 = vrot.slane %v3057, 4
      %v3059 = vrot.slane %v2300, 5
      %v3060 = vsel %vm1648, %v3058, %v3059
      %v3061 = vrot.slane %v3059, 4
      %v3062 = vrot.slane %v2301, 5
      %v3063 = vsel %vm1648, %v3061, %v3062
      %v3064 = vrot.slane %v2934, 5
      %v3065 = vrot.slane %v3064, 4
      %v3066 = vrot.slane %v2303, 5
      %v3067 = vsel %vm1648, %v3065, %v3066
      %v3068 = vrot.slane %v3066, 4
      %v3069 = vrot.slane %v2304, 5
      %v3070 = vsel %vm1648, %v3068, %v3069
      %v3071 = vrot.slane %v2935, 5
      %v3072 = vrot.slane %v3071, 4
      %v3073 = vrot.slane %v2306, 5
      %v3074 = vsel %vm1648, %v3072, %v3073
      %v3075 = vrot.slane %v3073, 4
      %v3076 = vrot.slane %v2307, 5
      %v3077 = vsel %vm1648, %v3075, %v3076
      %v3078 = vrot.slane %v2936, 5
      %v3079 = vrot.slane %v3078, 4
      %v3080 = vrot.slane %v2309, 5
      %v3081 = vsel %vm1648, %v3079, %v3080
      %v3082 = vrot.slane %v3080, 4
      %v3083 = vrot.slane %v2310, 5
      %v3084 = vsel %vm1648, %v3082, %v3083
      %v3085 = vrot.slane %v2937, 5
      %v3086 = vrot.slane %v3085, 4
      %v3087 = vrot.slane %v2312, 5
      %v3088 = vsel %vm1648, %v3086, %v3087
      %v3089 = vrot.slane %v3087, 4
      %v3090 = vrot.slane %v2313, 5
      %v3091 = vsel %vm1648, %v3089, %v3090
      %v3092 = vrot.slane %v2938, 5
      %v3093 = vrot.slane %v3092, 4
      %v3094 = vrot.slane %v2315, 5
      %v3095 = vsel %vm1648, %v3093, %v3094
      %v3096 = vrot.slane %v3094, 4
      %v3097 = vrot.slane %v2316, 5
      %v3098 = vsel %vm1648, %v3096, %v3097
      %s3099 = scalar_lea.vmem %s1, 10
      %v3100 = vld [vmem:[%s3099] sm:$0x3]
      %v3101 = vunpack.c.l.b16 %v2990
      %v3102 = vunpack.c.l.b16 %v2993
      %v3103 = vunpack.c.l.b16 %v2997
      %v3104 = vunpack.c.l.b16 %v3000
      %v3105 = vunpack.c.l.b16 %v3004
      %v3106 = vunpack.c.l.b16 %v3007
      %v3107 = vunpack.c.l.b16 %v3011
      %v3108 = vunpack.c.l.b16 %v3014
      %v3109 = vunpack.c.l.b16 %v3018
      %v3110 = vunpack.c.l.b16 %v3021
      %v3111 = vunpack.c.l.b16 %v3025
      %v3112 = vunpack.c.l.b16 %v3028
      %v3113 = vunpack.c.l.b16 %v3032
      %v3114 = vunpack.c.l.b16 %v3035
      %v3115 = vunpack.c.l.b16 %v3039
      %v3116 = vunpack.c.l.b16 %v3042
      %v3117 = vunpack.c.l.b16 %v3046
      %v3118 = vunpack.c.l.b16 %v3049
      %v3119 = vunpack.c.l.b16 %v3053
      %v3120 = vunpack.c.l.b16 %v3056
      %v3121 = vunpack.c.l.b16 %v3060
      %v3122 = vunpack.c.l.b16 %v3063
      %v3123 = vunpack.c.l.b16 %v3067
      %v3124 = vunpack.c.l.b16 %v3070
      %v3125 = vunpack.c.l.b16 %v3074
      %v3126 = vunpack.c.l.b16 %v3077
      %v3127 = vunpack.c.l.b16 %v3081
      %v3128 = vunpack.c.l.b16 %v3084
      %v3129 = vunpack.c.l.b16 %v3088
      %v3130 = vunpack.c.l.b16 %v3091
      %v3131 = vunpack.c.l.b16 %v3095
      %v3132 = vunpack.c.l.b16 %v3098
      %v3133 = vpack.c.b16 %v3102, %v3101
      %v3134 = vpack.c.b16 %v3104, %v3103
      %v3135 = vpack.c.b16 %v3106, %v3105
      %v3136 = vpack.c.b16 %v3108, %v3107
      %v3137 = vpack.c.b16 %v3110, %v3109
      %v3138 = vpack.c.b16 %v3112, %v3111
      %v3139 = vpack.c.b16 %v3114, %v3113
      %v3140 = vpack.c.b16 %v3116, %v3115
      %v3141 = vpack.c.b16 %v3118, %v3117
      %v3142 = vpack.c.b16 %v3120, %v3119
      %v3143 = vpack.c.b16 %v3122, %v3121
      %v3144 = vpack.c.b16 %v3124, %v3123
      %v3145 = vpack.c.b16 %v3126, %v3125
      %v3146 = vpack.c.b16 %v3128, %v3127
      %v3147 = vpack.c.b16 %v3130, %v3129
      %v3148 = vpack.c.b16 %v3132, %v3131
      %v3150 = vsel %vm1236, %v3133, 0
      %v3153 = vsel %vm1236, %v3134, 0
      %v3156 = vsel %vm1236, %v3135, 0
      %v3159 = vsel %vm1236, %v3136, 0
      %v3162 = vsel %vm1236, %v3137, 0
      %v3165 = vsel %vm1236, %v3138, 0
      %v3168 = vsel %vm1236, %v3139, 0
      %v3171 = vsel %vm1236, %v3140, 0
      %v3174 = vsel %vm1236, %v3141, 0
      %v3177 = vsel %vm1236, %v3142, 0
      %v3180 = vsel %vm1236, %v3143, 0
      %v3183 = vsel %vm1236, %v3144, 0
      %v3186 = vsel %vm1236, %v3145, 0
      %v3189 = vsel %vm1236, %v3146, 0
      %v3192 = vsel %vm1236, %v3147, 0
      %v3195 = vsel %vm1236, %v3148, 0
      %v3198 = vsel %vm1285, %v3100, 0
      %3200 = vmatpush.bf16.msra.mxu0 0
      %3201 = vmatpush.bf16.msra.mxu0 0
      %3202 = vmatpush.bf16.msra.mxu0 0
      %3203 = vmatpush.bf16.msra.mxu0 0
      %3204 = vmatpush.bf16.msra.mxu0 0
      %3205 = vmatpush.bf16.msra.mxu0 0
      %3206 = vmatpush.bf16.msra.mxu0 0
      %3207 = vmatpush.bf16.msra.mxu0 %v3198
      %3208 = vmatmul.bf16.gmra.mxu0 %v3150
      %v3209 = vpop.f32.mrf.mxu0
      %v3210 = vadd.f32 0.0, %v3209
      %v3211 = vpop.f32.mrf.mxu0
      %v3212 = vadd.f32 0.0, %v3211
      %3213 = vmatmul.bf16.gmra.mxu0 %v3153
      %v3214 = vpop.f32.mrf.mxu0
      %v3215 = vadd.f32 0.0, %v3214
      %v3216 = vpop.f32.mrf.mxu0
      %v3217 = vadd.f32 0.0, %v3216
      %3218 = vmatmul.bf16.gmra.mxu0 %v3156
      %v3219 = vpop.f32.mrf.mxu0
      %v3220 = vadd.f32 0.0, %v3219
      %v3221 = vpop.f32.mrf.mxu0
      %v3222 = vadd.f32 0.0, %v3221
      %3223 = vmatmul.bf16.gmra.mxu0 %v3159
      %v3224 = vpop.f32.mrf.mxu0
      %v3225 = vadd.f32 0.0, %v3224
      %v3226 = vpop.f32.mrf.mxu0
      %v3227 = vadd.f32 0.0, %v3226
      %3228 = vmatmul.bf16.gmra.mxu0 %v3162
      %v3229 = vpop.f32.mrf.mxu0
      %v3230 = vadd.f32 0.0, %v3229
      %v3231 = vpop.f32.mrf.mxu0
      %v3232 = vadd.f32 0.0, %v3231
      %3233 = vmatmul.bf16.gmra.mxu0 %v3165
      %v3234 = vpop.f32.mrf.mxu0
      %v3235 = vadd.f32 0.0, %v3234
      %v3236 = vpop.f32.mrf.mxu0
      %v3237 = vadd.f32 0.0, %v3236
      %3238 = vmatmul.bf16.gmra.mxu0 %v3168
      %v3239 = vpop.f32.mrf.mxu0
      %v3240 = vadd.f32 0.0, %v3239
      %v3241 = vpop.f32.mrf.mxu0
      %v3242 = vadd.f32 0.0, %v3241
      %3243 = vmatmul.bf16.gmra.mxu0 %v3171
      %v3244 = vpop.f32.mrf.mxu0
      %v3245 = vadd.f32 0.0, %v3244
      %v3246 = vpop.f32.mrf.mxu0
      %v3247 = vadd.f32 0.0, %v3246
      %3248 = vmatmul.bf16.gmra.mxu0 %v3174
      %v3249 = vpop.f32.mrf.mxu0
      %v3250 = vadd.f32 0.0, %v3249
      %v3251 = vpop.f32.mrf.mxu0
      %v3252 = vadd.f32 0.0, %v3251
      %3253 = vmatmul.bf16.gmra.mxu0 %v3177
      %v3254 = vpop.f32.mrf.mxu0
      %v3255 = vadd.f32 0.0, %v3254
      %v3256 = vpop.f32.mrf.mxu0
      %v3257 = vadd.f32 0.0, %v3256
      %3258 = vmatmul.bf16.gmra.mxu0 %v3180
      %v3259 = vpop.f32.mrf.mxu0
      %v3260 = vadd.f32 0.0, %v3259
      %v3261 = vpop.f32.mrf.mxu0
      %v3262 = vadd.f32 0.0, %v3261
      %3263 = vmatmul.bf16.gmra.mxu0 %v3183
      %v3264 = vpop.f32.mrf.mxu0
      %v3265 = vadd.f32 0.0, %v3264
      %v3266 = vpop.f32.mrf.mxu0
      %v3267 = vadd.f32 0.0, %v3266
      %3268 = vmatmul.bf16.gmra.mxu0 %v3186
      %v3269 = vpop.f32.mrf.mxu0
      %v3270 = vadd.f32 0.0, %v3269
      %v3271 = vpop.f32.mrf.mxu0
      %v3272 = vadd.f32 0.0, %v3271
      %3273 = vmatmul.bf16.gmra.mxu0 %v3189
      %v3274 = vpop.f32.mrf.mxu0
      %v3275 = vadd.f32 0.0, %v3274
      %v3276 = vpop.f32.mrf.mxu0
      %v3277 = vadd.f32 0.0, %v3276
      %3278 = vmatmul.bf16.gmra.mxu0 %v3192
      %v3279 = vpop.f32.mrf.mxu0
      %v3280 = vadd.f32 0.0, %v3279
      %v3281 = vpop.f32.mrf.mxu0
      %v3282 = vadd.f32 0.0, %v3281
      %3283 = vmatmul.bf16.gmra.mxu0 %v3195
      %v3284 = vpop.f32.mrf.mxu0
      %v3285 = vadd.f32 0.0, %v3284
      %v3286 = vpop.f32.mrf.mxu0
      %v3287 = vadd.f32 0.0, %v3286
      %3288 = vdwg.mxu0
      %v3289 = vadd.f32 %v2891, %v3210
      %v3290 = vadd.f32 %v2892, %v3212
      %v3291 = vadd.f32 %v2893, %v3215
      %v3292 = vadd.f32 %v2894, %v3217
      %v3293 = vadd.f32 %v2895, %v3220
      %v3294 = vadd.f32 %v2896, %v3222
      %v3295 = vadd.f32 %v2897, %v3225
      %v3296 = vadd.f32 %v2898, %v3227
      %v3297 = vadd.f32 %v2899, %v3230
      %v3298 = vadd.f32 %v2900, %v3232
      %v3299 = vadd.f32 %v2901, %v3235
      %v3300 = vadd.f32 %v2902, %v3237
      %v3301 = vadd.f32 %v2903, %v3240
      %v3302 = vadd.f32 %v2904, %v3242
      %v3303 = vadd.f32 %v2905, %v3245
      %v3304 = vadd.f32 %v2906, %v3247
      %v3305 = vadd.f32 %v2907, %v3250
      %v3306 = vadd.f32 %v2908, %v3252
      %v3307 = vadd.f32 %v2909, %v3255
      %v3308 = vadd.f32 %v2910, %v3257
      %v3309 = vadd.f32 %v2911, %v3260
      %v3310 = vadd.f32 %v2912, %v3262
      %v3311 = vadd.f32 %v2913, %v3265
      %v3312 = vadd.f32 %v2914, %v3267
      %v3313 = vadd.f32 %v2915, %v3270
      %v3314 = vadd.f32 %v2916, %v3272
      %v3315 = vadd.f32 %v2917, %v3275
      %v3316 = vadd.f32 %v2918, %v3277
      %v3317 = vadd.f32 %v2919, %v3280
      %v3318 = vadd.f32 %v2920, %v3282
      %v3319 = vadd.f32 %v2921, %v3285
      %v3320 = vadd.f32 %v2922, %v3287
      %s3321 = scalar_lea.vmem [#allocation2], 24
      %v3322 = vld [vmem:[%s3321] sm:$0xf]
      %v3323 = vld [vmem:[%s3321 + $0x4] sm:$0xf]
      %v3324 = vld [vmem:[%s3321 + $0xc] sm:$0xf]
      %v3325 = vld [vmem:[%s3321 + $0x10] sm:$0xf]
      %v3326 = vld [vmem:[%s3321 + $0x18] sm:$0xf]
      %v3327 = vld [vmem:[%s3321 + $0x1c] sm:$0xf]
      %v3328 = vld [vmem:[%s3321 + $0x24] sm:$0xf]
      %v3329 = vld [vmem:[%s3321 + $0x28] sm:$0xf]
      %v3330 = vld [vmem:[%s3321 + $0x30] sm:$0xf]
      %v3331 = vld [vmem:[%s3321 + $0x34] sm:$0xf]
      %v3332 = vld [vmem:[%s3321 + $0x3c] sm:$0xf]
      %v3333 = vld [vmem:[%s3321 + $0x40] sm:$0xf]
      %v3334 = vld [vmem:[%s3321 + $0x48] sm:$0xf]
      %v3335 = vld [vmem:[%s3321 + $0x4c] sm:$0xf]
      %v3336 = vld [vmem:[%s3321 + $0x54] sm:$0xf]
      %v3337 = vld [vmem:[%s3321 + $0x58] sm:$0xf]
      %v3338 = vld [vmem:[%s3321 + $0x60] sm:$0xf]
      %v3339 = vld [vmem:[%s3321 + $0x64] sm:$0xf]
      %v3340 = vld [vmem:[%s3321 + $0x6c] sm:$0xf]
      %v3341 = vld [vmem:[%s3321 + $0x70] sm:$0xf]
      %v3342 = vld [vmem:[%s3321 + $0x78] sm:$0xf]
      %v3343 = vld [vmem:[%s3321 + $0x7c] sm:$0xf]
      %v3344 = vld [vmem:[%s3321 + $0x84] sm:$0xf]
      %v3345 = vld [vmem:[%s3321 + $0x88] sm:$0xf]
      %v3346 = vld [vmem:[%s3321 + $0x90] sm:$0xf]
      %v3347 = vld [vmem:[%s3321 + $0x94] sm:$0xf]
      %v3348 = vld [vmem:[%s3321 + $0x9c] sm:$0xf]
      %v3349 = vld [vmem:[%s3321 + $0xa0] sm:$0xf]
      %v3350 = vld [vmem:[%s3321 + $0xa8] sm:$0xf]
      %v3351 = vld [vmem:[%s3321 + $0xac] sm:$0xf]
      %v3352 = vld [vmem:[%s3321 + $0xb4] sm:$0xf]
      %v3353 = vld [vmem:[%s3321 + $0xb8] sm:$0xf]
      %s3354 = scalar_lea.vmem %s1, 12
      %v3355 = vld [vmem:[%s3354] sm:$0x3]
      %v3388 = vunpack.c.l.b16 %v3322
      %v3389 = vunpack.c.l.b16 %v3323
      %v3390 = vunpack.c.l.b16 %v3324
      %v3391 = vunpack.c.l.b16 %v3325
      %v3392 = vunpack.c.l.b16 %v3326
      %v3393 = vunpack.c.l.b16 %v3327
      %v3394 = vunpack.c.l.b16 %v3328
      %v3395 = vunpack.c.l.b16 %v3329
      %v3396 = vunpack.c.l.b16 %v3330
      %v3397 = vunpack.c.l.b16 %v3331
      %v3398 = vunpack.c.l.b16 %v3332
      %v3399 = vunpack.c.l.b16 %v3333
      %v3400 = vunpack.c.l.b16 %v3334
      %v3401 = vunpack.c.l.b16 %v3335
      %v3402 = vunpack.c.l.b16 %v3336
      %v3403 = vunpack.c.l.b16 %v3337
      %v3404 = vunpack.c.l.b16 %v3338
      %v3405 = vunpack.c.l.b16 %v3339
      %v3406 = vunpack.c.l.b16 %v3340
      %v3407 = vunpack.c.l.b16 %v3341
      %v3408 = vunpack.c.l.b16 %v3342
      %v3409 = vunpack.c.l.b16 %v3343
      %v3410 = vunpack.c.l.b16 %v3344
      %v3411 = vunpack.c.l.b16 %v3345
      %v3412 = vunpack.c.l.b16 %v3346
      %v3413 = vunpack.c.l.b16 %v3347
      %v3414 = vunpack.c.l.b16 %v3348
      %v3415 = vunpack.c.l.b16 %v3349
      %v3416 = vunpack.c.l.b16 %v3350
      %v3417 = vunpack.c.l.b16 %v3351
      %v3418 = vunpack.c.l.b16 %v3352
      %v3419 = vunpack.c.l.b16 %v3353
      %v3420 = vpack.c.b16 %v3389, %v3388
      %v3421 = vpack.c.b16 %v3391, %v3390
      %v3422 = vpack.c.b16 %v3393, %v3392
      %v3423 = vpack.c.b16 %v3395, %v3394
      %v3424 = vpack.c.b16 %v3397, %v3396
      %v3425 = vpack.c.b16 %v3399, %v3398
      %v3426 = vpack.c.b16 %v3401, %v3400
      %v3427 = vpack.c.b16 %v3403, %v3402
      %v3428 = vpack.c.b16 %v3405, %v3404
      %v3429 = vpack.c.b16 %v3407, %v3406
      %v3430 = vpack.c.b16 %v3409, %v3408
      %v3431 = vpack.c.b16 %v3411, %v3410
      %v3432 = vpack.c.b16 %v3413, %v3412
      %v3433 = vpack.c.b16 %v3415, %v3414
      %v3434 = vpack.c.b16 %v3417, %v3416
      %v3435 = vpack.c.b16 %v3419, %v3418
      %v3437 = vsel %vm1236, %v3420, 0
      %v3440 = vsel %vm1236, %v3421, 0
      %v3443 = vsel %vm1236, %v3422, 0
      %v3446 = vsel %vm1236, %v3423, 0
      %v3449 = vsel %vm1236, %v3424, 0
      %v3452 = vsel %vm1236, %v3425, 0
      %v3455 = vsel %vm1236, %v3426, 0
      %v3458 = vsel %vm1236, %v3427, 0
      %v3461 = vsel %vm1236, %v3428, 0
      %v3464 = vsel %vm1236, %v3429, 0
      %v3467 = vsel %vm1236, %v3430, 0
      %v3470 = vsel %vm1236, %v3431, 0
      %v3473 = vsel %vm1236, %v3432, 0
      %v3476 = vsel %vm1236, %v3433, 0
      %v3479 = vsel %vm1236, %v3434, 0
      %v3482 = vsel %vm1236, %v3435, 0
      %v3485 = vsel %vm1285, %v3355, 0
      %3487 = vmatpush.bf16.msra.mxu0 0
      %3488 = vmatpush.bf16.msra.mxu0 0
      %3489 = vmatpush.bf16.msra.mxu0 0
      %3490 = vmatpush.bf16.msra.mxu0 0
      %3491 = vmatpush.bf16.msra.mxu0 0
      %3492 = vmatpush.bf16.msra.mxu0 0
      %3493 = vmatpush.bf16.msra.mxu0 0
      %3494 = vmatpush.bf16.msra.mxu0 %v3485
      %3495 = vmatmul.bf16.gmra.mxu0 %v3437
      %v3496 = vpop.f32.mrf.mxu0
      %v3497 = vadd.f32 0.0, %v3496
      %v3498 = vpop.f32.mrf.mxu0
      %v3499 = vadd.f32 0.0, %v3498
      %3500 = vmatmul.bf16.gmra.mxu0 %v3440
      %v3501 = vpop.f32.mrf.mxu0
      %v3502 = vadd.f32 0.0, %v3501
      %v3503 = vpop.f32.mrf.mxu0
      %v3504 = vadd.f32 0.0, %v3503
      %3505 = vmatmul.bf16.gmra.mxu0 %v3443
      %v3506 = vpop.f32.mrf.mxu0
      %v3507 = vadd.f32 0.0, %v3506
      %v3508 = vpop.f32.mrf.mxu0
      %v3509 = vadd.f32 0.0, %v3508
      %3510 = vmatmul.bf16.gmra.mxu0 %v3446
      %v3511 = vpop.f32.mrf.mxu0
      %v3512 = vadd.f32 0.0, %v3511
      %v3513 = vpop.f32.mrf.mxu0
      %v3514 = vadd.f32 0.0, %v3513
      %3515 = vmatmul.bf16.gmra.mxu0 %v3449
      %v3516 = vpop.f32.mrf.mxu0
      %v3517 = vadd.f32 0.0, %v3516
      %v3518 = vpop.f32.mrf.mxu0
      %v3519 = vadd.f32 0.0, %v3518
      %3520 = vmatmul.bf16.gmra.mxu0 %v3452
      %v3521 = vpop.f32.mrf.mxu0
      %v3522 = vadd.f32 0.0, %v3521
      %v3523 = vpop.f32.mrf.mxu0
      %v3524 = vadd.f32 0.0, %v3523
      %3525 = vmatmul.bf16.gmra.mxu0 %v3455
      %v3526 = vpop.f32.mrf.mxu0
      %v3527 = vadd.f32 0.0, %v3526
      %v3528 = vpop.f32.mrf.mxu0
      %v3529 = vadd.f32 0.0, %v3528
      %3530 = vmatmul.bf16.gmra.mxu0 %v3458
      %v3531 = vpop.f32.mrf.mxu0
      %v3532 = vadd.f32 0.0, %v3531
      %v3533 = vpop.f32.mrf.mxu0
      %v3534 = vadd.f32 0.0, %v3533
      %3535 = vmatmul.bf16.gmra.mxu0 %v3461
      %v3536 = vpop.f32.mrf.mxu0
      %v3537 = vadd.f32 0.0, %v3536
      %v3538 = vpop.f32.mrf.mxu0
      %v3539 = vadd.f32 0.0, %v3538
      %3540 = vmatmul.bf16.gmra.mxu0 %v3464
      %v3541 = vpop.f32.mrf.mxu0
      %v3542 = vadd.f32 0.0, %v3541
      %v3543 = vpop.f32.mrf.mxu0
      %v3544 = vadd.f32 0.0, %v3543
      %3545 = vmatmul.bf16.gmra.mxu0 %v3467
      %v3546 = vpop.f32.mrf.mxu0
      %v3547 = vadd.f32 0.0, %v3546
      %v3548 = vpop.f32.mrf.mxu0
      %v3549 = vadd.f32 0.0, %v3548
      %3550 = vmatmul.bf16.gmra.mxu0 %v3470
      %v3551 = vpop.f32.mrf.mxu0
      %v3552 = vadd.f32 0.0, %v3551
      %v3553 = vpop.f32.mrf.mxu0
      %v3554 = vadd.f32 0.0, %v3553
      %3555 = vmatmul.bf16.gmra.mxu0 %v3473
      %v3556 = vpop.f32.mrf.mxu0
      %v3557 = vadd.f32 0.0, %v3556
      %v3558 = vpop.f32.mrf.mxu0
      %v3559 = vadd.f32 0.0, %v3558
      %3560 = vmatmul.bf16.gmra.mxu0 %v3476
      %v3561 = vpop.f32.mrf.mxu0
      %v3562 = vadd.f32 0.0, %v3561
      %v3563 = vpop.f32.mrf.mxu0
      %v3564 = vadd.f32 0.0, %v3563
      %3565 = vmatmul.bf16.gmra.mxu0 %v3479
      %v3566 = vpop.f32.mrf.mxu0
      %v3567 = vadd.f32 0.0, %v3566
      %v3568 = vpop.f32.mrf.mxu0
      %v3569 = vadd.f32 0.0, %v3568
      %3570 = vmatmul.bf16.gmra.mxu0 %v3482
      %v3571 = vpop.f32.mrf.mxu0
      %v3572 = vadd.f32 0.0, %v3571
      %v3573 = vpop.f32.mrf.mxu0
      %v3574 = vadd.f32 0.0, %v3573
      %3575 = vdwg.mxu0
      %v3576 = vadd.f32 %v3289, %v3497
      %v3577 = vadd.f32 %v3290, %v3499
      %v3578 = vadd.f32 %v3291, %v3502
      %v3579 = vadd.f32 %v3292, %v3504
      %v3580 = vadd.f32 %v3293, %v3507
      %v3581 = vadd.f32 %v3294, %v3509
      %v3582 = vadd.f32 %v3295, %v3512
      %v3583 = vadd.f32 %v3296, %v3514
      %v3584 = vadd.f32 %v3297, %v3517
      %v3585 = vadd.f32 %v3298, %v3519
      %v3586 = vadd.f32 %v3299, %v3522
      %v3587 = vadd.f32 %v3300, %v3524
      %v3588 = vadd.f32 %v3301, %v3527
      %v3589 = vadd.f32 %v3302, %v3529
      %v3590 = vadd.f32 %v3303, %v3532
      %v3591 = vadd.f32 %v3304, %v3534
      %v3592 = vadd.f32 %v3305, %v3537
      %v3593 = vadd.f32 %v3306, %v3539
      %v3594 = vadd.f32 %v3307, %v3542
      %v3595 = vadd.f32 %v3308, %v3544
      %v3596 = vadd.f32 %v3309, %v3547
      %v3597 = vadd.f32 %v3310, %v3549
      %v3598 = vadd.f32 %v3311, %v3552
      %v3599 = vadd.f32 %v3312, %v3554
      %v3600 = vadd.f32 %v3313, %v3557
      %v3601 = vadd.f32 %v3314, %v3559
      %v3602 = vadd.f32 %v3315, %v3562
      %v3603 = vadd.f32 %v3316, %v3564
      %v3604 = vadd.f32 %v3317, %v3567
      %v3605 = vadd.f32 %v3318, %v3569
      %v3606 = vadd.f32 %v3319, %v3572
      %v3607 = vadd.f32 %v3320, %v3574
      %v3608 = vld [vmem:[%s3321] sm:$0xf]
      %v3609 = vld [vmem:[%s3321 + $0x4] sm:$0xf]
      %v3610 = vld [vmem:[%s3321 + $0x8] sm:$0x1]
      %v3611 = vld [vmem:[%s3321 + $0xc] sm:$0xf]
      %v3612 = vld [vmem:[%s3321 + $0x10] sm:$0xf]
      %v3613 = vld [vmem:[%s3321 + $0x14] sm:$0x1]
      %v3614 = vld [vmem:[%s3321 + $0x18] sm:$0xf]
      %v3615 = vld [vmem:[%s3321 + $0x1c] sm:$0xf]
      %v3616 = vld [vmem:[%s3321 + $0x20] sm:$0x1]
      %v3617 = vld [vmem:[%s3321 + $0x24] sm:$0xf]
      %v3618 = vld [vmem:[%s3321 + $0x28] sm:$0xf]
      %v3619 = vld [vmem:[%s3321 + $0x2c] sm:$0x1]
      %v3620 = vld [vmem:[%s3321 + $0x30] sm:$0xf]
      %v3621 = vld [vmem:[%s3321 + $0x34] sm:$0xf]
      %v3622 = vld [vmem:[%s3321 + $0x38] sm:$0x1]
      %v3623 = vld [vmem:[%s3321 + $0x3c] sm:$0xf]
      %v3624 = vld [vmem:[%s3321 + $0x40] sm:$0xf]
      %v3625 = vld [vmem:[%s3321 + $0x44] sm:$0x1]
      %v3626 = vld [vmem:[%s3321 + $0x48] sm:$0xf]
      %v3627 = vld [vmem:[%s3321 + $0x4c] sm:$0xf]
      %v3628 = vld [vmem:[%s3321 + $0x50] sm:$0x1]
      %v3629 = vld [vmem:[%s3321 + $0x54] sm:$0xf]
      %v3630 = vld [vmem:[%s3321 + $0x58] sm:$0xf]
      %v3631 = vld [vmem:[%s3321 + $0x5c] sm:$0x1]
      %v3632 = vld [vmem:[%s3321 + $0x60] sm:$0xf]
      %v3633 = vld [vmem:[%s3321 + $0x64] sm:$0xf]
      %v3634 = vld [vmem:[%s3321 + $0x68] sm:$0x1]
      %v3635 = vld [vmem:[%s3321 + $0x6c] sm:$0xf]
      %v3636 = vld [vmem:[%s3321 + $0x70] sm:$0xf]
      %v3637 = vld [vmem:[%s3321 + $0x74] sm:$0x1]
      %v3638 = vld [vmem:[%s3321 + $0x78] sm:$0xf]
      %v3639 = vld [vmem:[%s3321 + $0x7c] sm:$0xf]
      %v3640 = vld [vmem:[%s3321 + $0x80] sm:$0x1]
      %v3641 = vld [vmem:[%s3321 + $0x84] sm:$0xf]
      %v3642 = vld [vmem:[%s3321 + $0x88] sm:$0xf]
      %v3643 = vld [vmem:[%s3321 + $0x8c] sm:$0x1]
      %v3644 = vld [vmem:[%s3321 + $0x90] sm:$0xf]
      %v3645 = vld [vmem:[%s3321 + $0x94] sm:$0xf]
      %v3646 = vld [vmem:[%s3321 + $0x98] sm:$0x1]
      %v3647 = vld [vmem:[%s3321 + $0x9c] sm:$0xf]
      %v3648 = vld [vmem:[%s3321 + $0xa0] sm:$0xf]
      %v3649 = vld [vmem:[%s3321 + $0xa4] sm:$0x1]
      %v3650 = vld [vmem:[%s3321 + $0xa8] sm:$0xf]
      %v3651 = vld [vmem:[%s3321 + $0xac] sm:$0xf]
      %v3652 = vld [vmem:[%s3321 + $0xb0] sm:$0x1]
      %v3653 = vld [vmem:[%s3321 + $0xb4] sm:$0xf]
      %v3654 = vld [vmem:[%s3321 + $0xb8] sm:$0xf]
      %v3655 = vld [vmem:[%s3321 + $0xbc] sm:$0x1]
      %v3657 = vshrl.u32 %v3608, 16
      %v3659 = vrot.slane %v3657, 4
      %v3660 = vshll.u32 %v3608, 16
      %v3662 = vrot.slane %v3660, 5
      %v3663 = vor.u32 %v3659, %v3662
      %v3664 = vrot.slane %v3663, 4
      %v3666 = vshll.u32 %v3609, 16
      %v3668 = vrot.slane %v3666, 5
      %v3669 = vsel %vm801, %v3664, %v3668
      %v3670 = vshrl.u32 %v3609, 16
      %v3672 = vrot.slane %v3670, 4
      %v3673 = vor.u32 %v3672, %v3668
      %v3674 = vrot.slane %v3673, 4
      %v3676 = vshll.u32 %v3610, 16
      %v3678 = vrot.slane %v3676, 5
      %v3679 = vsel %vm801, %v3674, %v3678
      %v3681 = vshrl.u32 %v3611, 16
      %v3683 = vrot.slane %v3681, 4
      %v3684 = vshll.u32 %v3611, 16
      %v3686 = vrot.slane %v3684, 5
      %v3687 = vor.u32 %v3683, %v3686
      %v3688 = vrot.slane %v3687, 4
      %v3690 = vshll.u32 %v3612, 16
      %v3692 = vrot.slane %v3690, 5
      %v3693 = vsel %vm801, %v3688, %v3692
      %v3694 = vshrl.u32 %v3612, 16
      %v3696 = vrot.slane %v3694, 4
      %v3697 = vor.u32 %v3696, %v3692
      %v3698 = vrot.slane %v3697, 4
      %v3700 = vshll.u32 %v3613, 16
      %v3702 = vrot.slane %v3700, 5
      %v3703 = vsel %vm801, %v3698, %v3702
      %v3705 = vshrl.u32 %v3614, 16
      %v3707 = vrot.slane %v3705, 4
      %v3708 = vshll.u32 %v3614, 16
      %v3710 = vrot.slane %v3708, 5
      %v3711 = vor.u32 %v3707, %v3710
      %v3712 = vrot.slane %v3711, 4
      %v3714 = vshll.u32 %v3615, 16
      %v3716 = vrot.slane %v3714, 5
      %v3717 = vsel %vm801, %v3712, %v3716
      %v3718 = vshrl.u32 %v3615, 16
      %v3720 = vrot.slane %v3718, 4
      %v3721 = vor.u32 %v3720, %v3716
      %v3722 = vrot.slane %v3721, 4
      %v3724 = vshll.u32 %v3616, 16
      %v3726 = vrot.slane %v3724, 5
      %v3727 = vsel %vm801, %v3722, %v3726
      %v3729 = vshrl.u32 %v3617, 16
      %v3731 = vrot.slane %v3729, 4
      %v3732 = vshll.u32 %v3617, 16
      %v3734 = vrot.slane %v3732, 5
      %v3735 = vor.u32 %v3731, %v3734
      %v3736 = vrot.slane %v3735, 4
      %v3738 = vshll.u32 %v3618, 16
      %v3740 = vrot.slane %v3738, 5
      %v3741 = vsel %vm801, %v3736, %v3740
      %v3742 = vshrl.u32 %v3618, 16
      %v3744 = vrot.slane %v3742, 4
      %v3745 = vor.u32 %v3744, %v3740
      %v3746 = vrot.slane %v3745, 4
      %v3748 = vshll.u32 %v3619, 16
      %v3750 = vrot.slane %v3748, 5
      %v3751 = vsel %vm801, %v3746, %v3750
      %v3753 = vshrl.u32 %v3620, 16
      %v3755 = vrot.slane %v3753, 4
      %v3756 = vshll.u32 %v3620, 16
      %v3758 = vrot.slane %v3756, 5
      %v3759 = vor.u32 %v3755, %v3758
      %v3760 = vrot.slane %v3759, 4
      %v3762 = vshll.u32 %v3621, 16
      %v3764 = vrot.slane %v3762, 5
      %v3765 = vsel %vm801, %v3760, %v3764
      %v3766 = vshrl.u32 %v3621, 16
      %v3768 = vrot.slane %v3766, 4
      %v3769 = vor.u32 %v3768, %v3764
      %v3770 = vrot.slane %v3769, 4
      %v3772 = vshll.u32 %v3622, 16
      %v3774 = vrot.slane %v3772, 5
      %v3775 = vsel %vm801, %v3770, %v3774
      %v3777 = vshrl.u32 %v3623, 16
      %v3779 = vrot.slane %v3777, 4
      %v3780 = vshll.u32 %v3623, 16
      %v3782 = vrot.slane %v3780, 5
      %v3783 = vor.u32 %v3779, %v3782
      %v3784 = vrot.slane %v3783, 4
      %v3786 = vshll.u32 %v3624, 16
      %v3788 = vrot.slane %v3786, 5
      %v3789 = vsel %vm801, %v3784, %v3788
      %v3790 = vshrl.u32 %v3624, 16
      %v3792 = vrot.slane %v3790, 4
      %v3793 = vor.u32 %v3792, %v3788
      %v3794 = vrot.slane %v3793, 4
      %v3796 = vshll.u32 %v3625, 16
      %v3798 = vrot.slane %v3796, 5
      %v3799 = vsel %vm801, %v3794, %v3798
      %v3801 = vshrl.u32 %v3626, 16
      %v3803 = vrot.slane %v3801, 4
      %v3804 = vshll.u32 %v3626, 16
      %v3806 = vrot.slane %v3804, 5
      %v3807 = vor.u32 %v3803, %v3806
      %v3808 = vrot.slane %v3807, 4
      %v3810 = vshll.u32 %v3627, 16
      %v3812 = vrot.slane %v3810, 5
      %v3813 = vsel %vm801, %v3808, %v3812
      %v3814 = vshrl.u32 %v3627, 16
      %v3816 = vrot.slane %v3814, 4
      %v3817 = vor.u32 %v3816, %v3812
      %v3818 = vrot.slane %v3817, 4
      %v3820 = vshll.u32 %v3628, 16
      %v3822 = vrot.slane %v3820, 5
      %v3823 = vsel %vm801, %v3818, %v3822
      %v3825 = vshrl.u32 %v3629, 16
      %v3827 = vrot.slane %v3825, 4
      %v3828 = vshll.u32 %v3629, 16
      %v3830 = vrot.slane %v3828, 5
      %v3831 = vor.u32 %v3827, %v3830
      %v3832 = vrot.slane %v3831, 4
      %v3834 = vshll.u32 %v3630, 16
      %v3836 = vrot.slane %v3834, 5
      %v3837 = vsel %vm801, %v3832, %v3836
      %v3838 = vshrl.u32 %v3630, 16
      %v3840 = vrot.slane %v3838, 4
      %v3841 = vor.u32 %v3840, %v3836
      %v3842 = vrot.slane %v3841, 4
      %v3844 = vshll.u32 %v3631, 16
      %v3846 = vrot.slane %v3844, 5
      %v3847 = vsel %vm801, %v3842, %v3846
      %v3849 = vshrl.u32 %v3632, 16
      %v3851 = vrot.slane %v3849, 4
      %v3852 = vshll.u32 %v3632, 16
      %v3854 = vrot.slane %v3852, 5
      %v3855 = vor.u32 %v3851, %v3854
      %v3856 = vrot.slane %v3855, 4
      %v3858 = vshll.u32 %v3633, 16
      %v3860 = vrot.slane %v3858, 5
      %v3861 = vsel %vm801, %v3856, %v3860
      %v3862 = vshrl.u32 %v3633, 16
      %v3864 = vrot.slane %v3862, 4
      %v3865 = vor.u32 %v3864, %v3860
      %v3866 = vrot.slane %v3865, 4
      %v3868 = vshll.u32 %v3634, 16
      %v3870 = vrot.slane %v3868, 5
      %v3871 = vsel %vm801, %v3866, %v3870
      %v3873 = vshrl.u32 %v3635, 16
      %v3875 = vrot.slane %v3873, 4
      %v3876 = vshll.u32 %v3635, 16
      %v3878 = vrot.slane %v3876, 5
      %v3879 = vor.u32 %v3875, %v3878
      %v3880 = vrot.slane %v3879, 4
      %v3882 = vshll.u32 %v3636, 16
      %v3884 = vrot.slane %v3882, 5
      %v3885 = vsel %vm801, %v3880, %v3884
      %v3886 = vshrl.u32 %v3636, 16
      %v3888 = vrot.slane %v3886, 4
      %v3889 = vor.u32 %v3888, %v3884
      %v3890 = vrot.slane %v3889, 4
      %v3892 = vshll.u32 %v3637, 16
      %v3894 = vrot.slane %v3892, 5
      %v3895 = vsel %vm801, %v3890, %v3894
      %v3897 = vshrl.u32 %v3638, 16
      %v3899 = vrot.slane %v3897, 4
      %v3900 = vshll.u32 %v3638, 16
      %v3902 = vrot.slane %v3900, 5
      %v3903 = vor.u32 %v3899, %v3902
      %v3904 = vrot.slane %v3903, 4
      %v3906 = vshll.u32 %v3639, 16
      %v3908 = vrot.slane %v3906, 5
      %v3909 = vsel %vm801, %v3904, %v3908
      %v3910 = vshrl.u32 %v3639, 16
      %v3912 = vrot.slane %v3910, 4
      %v3913 = vor.u32 %v3912, %v3908
      %v3914 = vrot.slane %v3913, 4
      %v3916 = vshll.u32 %v3640, 16
      %v3918 = vrot.slane %v3916, 5
      %v3919 = vsel %vm801, %v3914, %v3918
      %v3921 = vshrl.u32 %v3641, 16
      %v3923 = vrot.slane %v3921, 4
      %v3924 = vshll.u32 %v3641, 16
      %v3926 = vrot.slane %v3924, 5
      %v3927 = vor.u32 %v3923, %v3926
      %v3928 = vrot.slane %v3927, 4
      %v3930 = vshll.u32 %v3642, 16
      %v3932 = vrot.slane %v3930, 5
      %v3933 = vsel %vm801, %v3928, %v3932
      %v3934 = vshrl.u32 %v3642, 16
      %v3936 = vrot.slane %v3934, 4
      %v3937 = vor.u32 %v3936, %v3932
      %v3938 = vrot.slane %v3937, 4
      %v3940 = vshll.u32 %v3643, 16
      %v3942 = vrot.slane %v3940, 5
      %v3943 = vsel %vm801, %v3938, %v3942
      %v3945 = vshrl.u32 %v3644, 16
      %v3947 = vrot.slane %v3945, 4
      %v3948 = vshll.u32 %v3644, 16
      %v3950 = vrot.slane %v3948, 5
      %v3951 = vor.u32 %v3947, %v3950
      %v3952 = vrot.slane %v3951, 4
      %v3954 = vshll.u32 %v3645, 16
      %v3956 = vrot.slane %v3954, 5
      %v3957 = vsel %vm801, %v3952, %v3956
      %v3958 = vshrl.u32 %v3645, 16
      %v3960 = vrot.slane %v3958, 4
      %v3961 = vor.u32 %v3960, %v3956
      %v3962 = vrot.slane %v3961, 4
      %v3964 = vshll.u32 %v3646, 16
      %v3966 = vrot.slane %v3964, 5
      %v3967 = vsel %vm801, %v3962, %v3966
      %v3969 = vshrl.u32 %v3647, 16
      %v3971 = vrot.slane %v3969, 4
      %v3972 = vshll.u32 %v3647, 16
      %v3974 = vrot.slane %v3972, 5
      %v3975 = vor.u32 %v3971, %v3974
      %v3976 = vrot.slane %v3975, 4
      %v3978 = vshll.u32 %v3648, 16
      %v3980 = vrot.slane %v3978, 5
      %v3981 = vsel %vm801, %v3976, %v3980
      %v3982 = vshrl.u32 %v3648, 16
      %v3984 = vrot.slane %v3982, 4
      %v3985 = vor.u32 %v3984, %v3980
      %v3986 = vrot.slane %v3985, 4
      %v3988 = vshll.u32 %v3649, 16
      %v3990 = vrot.slane %v3988, 5
      %v3991 = vsel %vm801, %v3986, %v3990
      %v3993 = vshrl.u32 %v3650, 16
      %v3995 = vrot.slane %v3993, 4
      %v3996 = vshll.u32 %v3650, 16
      %v3998 = vrot.slane %v3996, 5
      %v3999 = vor.u32 %v3995, %v3998
      %v4000 = vrot.slane %v3999, 4
      %v4002 = vshll.u32 %v3651, 16
      %v4004 = vrot.slane %v4002, 5
      %v4005 = vsel %vm801, %v4000, %v4004
      %v4006 = vshrl.u32 %v3651, 16
      %v4008 = vrot.slane %v4006, 4
      %v4009 = vor.u32 %v4008, %v4004
      %v4010 = vrot.slane %v4009, 4
      %v4012 = vshll.u32 %v3652, 16
      %v4014 = vrot.slane %v4012, 5
      %v4015 = vsel %vm801, %v4010, %v4014
      %v4017 = vshrl.u32 %v3653, 16
      %v4019 = vrot.slane %v4017, 4
      %v4020 = vshll.u32 %v3653, 16
      %v4022 = vrot.slane %v4020, 5
      %v4023 = vor.u32 %v4019, %v4022
      %v4024 = vrot.slane %v4023, 4
      %v4026 = vshll.u32 %v3654, 16
      %v4028 = vrot.slane %v4026, 5
      %v4029 = vsel %vm801, %v4024, %v4028
      %v4030 = vshrl.u32 %v3654, 16
      %v4032 = vrot.slane %v4030, 4
      %v4033 = vor.u32 %v4032, %v4028
      %v4034 = vrot.slane %v4033, 4
      %v4036 = vshll.u32 %v3655, 16
      %v4038 = vrot.slane %v4036, 5
      %v4039 = vsel %vm801, %v4034, %v4038
      %s4040 = scalar_lea.vmem %s1, 14
      %v4041 = vld [vmem:[%s4040] sm:$0x3]
      %v4042 = vunpack.c.l.b16 %v3669
      %v4043 = vunpack.c.l.b16 %v3679
      %v4044 = vunpack.c.l.b16 %v3693
      %v4045 = vunpack.c.l.b16 %v3703
      %v4046 = vunpack.c.l.b16 %v3717
      %v4047 = vunpack.c.l.b16 %v3727
      %v4048 = vunpack.c.l.b16 %v3741
      %v4049 = vunpack.c.l.b16 %v3751
      %v4050 = vunpack.c.l.b16 %v3765
      %v4051 = vunpack.c.l.b16 %v3775
      %v4052 = vunpack.c.l.b16 %v3789
      %v4053 = vunpack.c.l.b16 %v3799
      %v4054 = vunpack.c.l.b16 %v3813
      %v4055 = vunpack.c.l.b16 %v3823
      %v4056 = vunpack.c.l.b16 %v3837
      %v4057 = vunpack.c.l.b16 %v3847
      %v4058 = vunpack.c.l.b16 %v3861
      %v4059 = vunpack.c.l.b16 %v3871
      %v4060 = vunpack.c.l.b16 %v3885
      %v4061 = vunpack.c.l.b16 %v3895
      %v4062 = vunpack.c.l.b16 %v3909
      %v4063 = vunpack.c.l.b16 %v3919
      %v4064 = vunpack.c.l.b16 %v3933
      %v4065 = vunpack.c.l.b16 %v3943
      %v4066 = vunpack.c.l.b16 %v3957
      %v4067 = vunpack.c.l.b16 %v3967
      %v4068 = vunpack.c.l.b16 %v3981
      %v4069 = vunpack.c.l.b16 %v3991
      %v4070 = vunpack.c.l.b16 %v4005
      %v4071 = vunpack.c.l.b16 %v4015
      %v4072 = vunpack.c.l.b16 %v4029
      %v4073 = vunpack.c.l.b16 %v4039
      %v4074 = vpack.c.b16 %v4043, %v4042
      %v4075 = vpack.c.b16 %v4045, %v4044
      %v4076 = vpack.c.b16 %v4047, %v4046
      %v4077 = vpack.c.b16 %v4049, %v4048
      %v4078 = vpack.c.b16 %v4051, %v4050
      %v4079 = vpack.c.b16 %v4053, %v4052
      %v4080 = vpack.c.b16 %v4055, %v4054
      %v4081 = vpack.c.b16 %v4057, %v4056
      %v4082 = vpack.c.b16 %v4059, %v4058
      %v4083 = vpack.c.b16 %v4061, %v4060
      %v4084 = vpack.c.b16 %v4063, %v4062
      %v4085 = vpack.c.b16 %v4065, %v4064
      %v4086 = vpack.c.b16 %v4067, %v4066
      %v4087 = vpack.c.b16 %v4069, %v4068
      %v4088 = vpack.c.b16 %v4071, %v4070
      %v4089 = vpack.c.b16 %v4073, %v4072
      %v4091 = vsel %vm1236, %v4074, 0
      %v4094 = vsel %vm1236, %v4075, 0
      %v4097 = vsel %vm1236, %v4076, 0
      %v4100 = vsel %vm1236, %v4077, 0
      %v4103 = vsel %vm1236, %v4078, 0
      %v4106 = vsel %vm1236, %v4079, 0
      %v4109 = vsel %vm1236, %v4080, 0
      %v4112 = vsel %vm1236, %v4081, 0
      %v4115 = vsel %vm1236, %v4082, 0
      %v4118 = vsel %vm1236, %v4083, 0
      %v4121 = vsel %vm1236, %v4084, 0
      %v4124 = vsel %vm1236, %v4085, 0
      %v4127 = vsel %vm1236, %v4086, 0
      %v4130 = vsel %vm1236, %v4087, 0
      %v4133 = vsel %vm1236, %v4088, 0
      %v4136 = vsel %vm1236, %v4089, 0
      %v4139 = vsel %vm1285, %v4041, 0
      %4141 = vmatpush.bf16.msra.mxu0 0
      %4142 = vmatpush.bf16.msra.mxu0 0
      %4143 = vmatpush.bf16.msra.mxu0 0
      %4144 = vmatpush.bf16.msra.mxu0 0
      %4145 = vmatpush.bf16.msra.mxu0 0
      %4146 = vmatpush.bf16.msra.mxu0 0
      %4147 = vmatpush.bf16.msra.mxu0 0
      %4148 = vmatpush.bf16.msra.mxu0 %v4139
      %4149 = vmatmul.bf16.gmra.mxu0 %v4091
      %v4150 = vpop.f32.mrf.mxu0
      %v4151 = vadd.f32 0.0, %v4150
      %v4152 = vpop.f32.mrf.mxu0
      %v4153 = vadd.f32 0.0, %v4152
      %4154 = vmatmul.bf16.gmra.mxu0 %v4094
      %v4155 = vpop.f32.mrf.mxu0
      %v4156 = vadd.f32 0.0, %v4155
      %v4157 = vpop.f32.mrf.mxu0
      %v4158 = vadd.f32 0.0, %v4157
      %4159 = vmatmul.bf16.gmra.mxu0 %v4097
      %v4160 = vpop.f32.mrf.mxu0
      %v4161 = vadd.f32 0.0, %v4160
      %v4162 = vpop.f32.mrf.mxu0
      %v4163 = vadd.f32 0.0, %v4162
      %4164 = vmatmul.bf16.gmra.mxu0 %v4100
      %v4165 = vpop.f32.mrf.mxu0
      %v4166 = vadd.f32 0.0, %v4165
      %v4167 = vpop.f32.mrf.mxu0
      %v4168 = vadd.f32 0.0, %v4167
      %4169 = vmatmul.bf16.gmra.mxu0 %v4103
      %v4170 = vpop.f32.mrf.mxu0
      %v4171 = vadd.f32 0.0, %v4170
      %v4172 = vpop.f32.mrf.mxu0
      %v4173 = vadd.f32 0.0, %v4172
      %4174 = vmatmul.bf16.gmra.mxu0 %v4106
      %v4175 = vpop.f32.mrf.mxu0
      %v4176 = vadd.f32 0.0, %v4175
      %v4177 = vpop.f32.mrf.mxu0
      %v4178 = vadd.f32 0.0, %v4177
      %4179 = vmatmul.bf16.gmra.mxu0 %v4109
      %v4180 = vpop.f32.mrf.mxu0
      %v4181 = vadd.f32 0.0, %v4180
      %v4182 = vpop.f32.mrf.mxu0
      %v4183 = vadd.f32 0.0, %v4182
      %4184 = vmatmul.bf16.gmra.mxu0 %v4112
      %v4185 = vpop.f32.mrf.mxu0
      %v4186 = vadd.f32 0.0, %v4185
      %v4187 = vpop.f32.mrf.mxu0
      %v4188 = vadd.f32 0.0, %v4187
      %4189 = vmatmul.bf16.gmra.mxu0 %v4115
      %v4190 = vpop.f32.mrf.mxu0
      %v4191 = vadd.f32 0.0, %v4190
      %v4192 = vpop.f32.mrf.mxu0
      %v4193 = vadd.f32 0.0, %v4192
      %4194 = vmatmul.bf16.gmra.mxu0 %v4118
      %v4195 = vpop.f32.mrf.mxu0
      %v4196 = vadd.f32 0.0, %v4195
      %v4197 = vpop.f32.mrf.mxu0
      %v4198 = vadd.f32 0.0, %v4197
      %4199 = vmatmul.bf16.gmra.mxu0 %v4121
      %v4200 = vpop.f32.mrf.mxu0
      %v4201 = vadd.f32 0.0, %v4200
      %v4202 = vpop.f32.mrf.mxu0
      %v4203 = vadd.f32 0.0, %v4202
      %4204 = vmatmul.bf16.gmra.mxu0 %v4124
      %v4205 = vpop.f32.mrf.mxu0
      %v4206 = vadd.f32 0.0, %v4205
      %v4207 = vpop.f32.mrf.mxu0
      %v4208 = vadd.f32 0.0, %v4207
      %4209 = vmatmul.bf16.gmra.mxu0 %v4127
      %v4210 = vpop.f32.mrf.mxu0
      %v4211 = vadd.f32 0.0, %v4210
      %v4212 = vpop.f32.mrf.mxu0
      %v4213 = vadd.f32 0.0, %v4212
      %4214 = vmatmul.bf16.gmra.mxu0 %v4130
      %v4215 = vpop.f32.mrf.mxu0
      %v4216 = vadd.f32 0.0, %v4215
      %v4217 = vpop.f32.mrf.mxu0
      %v4218 = vadd.f32 0.0, %v4217
      %4219 = vmatmul.bf16.gmra.mxu0 %v4133
      %v4220 = vpop.f32.mrf.mxu0
      %v4221 = vadd.f32 0.0, %v4220
      %v4222 = vpop.f32.mrf.mxu0
      %v4223 = vadd.f32 0.0, %v4222
      %4224 = vmatmul.bf16.gmra.mxu0 %v4136
      %v4225 = vpop.f32.mrf.mxu0
      %v4226 = vadd.f32 0.0, %v4225
      %v4227 = vpop.f32.mrf.mxu0
      %v4228 = vadd.f32 0.0, %v4227
      %4229 = vdwg.mxu0
      %v4230 = vadd.f32 %v3576, %v4151
      %v4231 = vadd.f32 %v3577, %v4153
      %v4232 = vadd.f32 %v3578, %v4156
      %v4233 = vadd.f32 %v3579, %v4158
      %v4234 = vadd.f32 %v3580, %v4161
      %v4235 = vadd.f32 %v3581, %v4163
      %v4236 = vadd.f32 %v3582, %v4166
      %v4237 = vadd.f32 %v3583, %v4168
      %v4238 = vadd.f32 %v3584, %v4171
      %v4239 = vadd.f32 %v3585, %v4173
      %v4240 = vadd.f32 %v3586, %v4176
      %v4241 = vadd.f32 %v3587, %v4178
      %v4242 = vadd.f32 %v3588, %v4181
      %v4243 = vadd.f32 %v3589, %v4183
      %v4244 = vadd.f32 %v3590, %v4186
      %v4245 = vadd.f32 %v3591, %v4188
      %v4246 = vadd.f32 %v3592, %v4191
      %v4247 = vadd.f32 %v3593, %v4193
      %v4248 = vadd.f32 %v3594, %v4196
      %v4249 = vadd.f32 %v3595, %v4198
      %v4250 = vadd.f32 %v3596, %v4201
      %v4251 = vadd.f32 %v3597, %v4203
      %v4252 = vadd.f32 %v3598, %v4206
      %v4253 = vadd.f32 %v3599, %v4208
      %v4254 = vadd.f32 %v3600, %v4211
      %v4255 = vadd.f32 %v3601, %v4213
      %v4256 = vadd.f32 %v3602, %v4216
      %v4257 = vadd.f32 %v3603, %v4218
      %v4258 = vadd.f32 %v3604, %v4221
      %v4259 = vadd.f32 %v3605, %v4223
      %v4260 = vadd.f32 %v3606, %v4226
      %v4261 = vadd.f32 %v3607, %v4228
      %v4262 = vld [vmem:[%s3321] sm:$0xe]
      %v4263 = vld [vmem:[%s3321 + $0xc] sm:$0xe]
      %v4264 = vld [vmem:[%s3321 + $0x18] sm:$0xe]
      %v4265 = vld [vmem:[%s3321 + $0x24] sm:$0xe]
      %v4266 = vld [vmem:[%s3321 + $0x30] sm:$0xe]
      %v4267 = vld [vmem:[%s3321 + $0x3c] sm:$0xe]
      %v4268 = vld [vmem:[%s3321 + $0x48] sm:$0xe]
      %v4269 = vld [vmem:[%s3321 + $0x54] sm:$0xe]
      %v4270 = vld [vmem:[%s3321 + $0x60] sm:$0xe]
      %v4271 = vld [vmem:[%s3321 + $0x6c] sm:$0xe]
      %v4272 = vld [vmem:[%s3321 + $0x78] sm:$0xe]
      %v4273 = vld [vmem:[%s3321 + $0x84] sm:$0xe]
      %v4274 = vld [vmem:[%s3321 + $0x90] sm:$0xe]
      %v4275 = vld [vmem:[%s3321 + $0x9c] sm:$0xe]
      %v4276 = vld [vmem:[%s3321 + $0xa8] sm:$0xe]
      %v4277 = vld [vmem:[%s3321 + $0xb4] sm:$0xe]
      %v4326 = vrot.slane %v4262, 5
      %v4327 = vrot.slane %v4326, 4
      %v4328 = vrot.slane %v3609, 5
      %v4329 = vsel %vm1648, %v4327, %v4328
      %v4330 = vrot.slane %v4328, 4
      %v4331 = vrot.slane %v3610, 5
      %v4332 = vsel %vm1648, %v4330, %v4331
      %v4333 = vrot.slane %v4263, 5
      %v4334 = vrot.slane %v4333, 4
      %v4335 = vrot.slane %v3612, 5
      %v4336 = vsel %vm1648, %v4334, %v4335
      %v4337 = vrot.slane %v4335, 4
      %v4338 = vrot.slane %v3613, 5
      %v4339 = vsel %vm1648, %v4337, %v4338
      %v4340 = vrot.slane %v4264, 5
      %v4341 = vrot.slane %v4340, 4
      %v4342 = vrot.slane %v3615, 5
      %v4343 = vsel %vm1648, %v4341, %v4342
      %v4344 = vrot.slane %v4342, 4
      %v4345 = vrot.slane %v3616, 5
      %v4346 = vsel %vm1648, %v4344, %v4345
      %v4347 = vrot.slane %v4265, 5
      %v4348 = vrot.slane %v4347, 4
      %v4349 = vrot.slane %v3618, 5
      %v4350 = vsel %vm1648, %v4348, %v4349
      %v4351 = vrot.slane %v4349, 4
      %v4352 = vrot.slane %v3619, 5
      %v4353 = vsel %vm1648, %v4351, %v4352
      %v4354 = vrot.slane %v4266, 5
      %v4355 = vrot.slane %v4354, 4
      %v4356 = vrot.slane %v3621, 5
      %v4357 = vsel %vm1648, %v4355, %v4356
      %v4358 = vrot.slane %v4356, 4
      %v4359 = vrot.slane %v3622, 5
      %v4360 = vsel %vm1648, %v4358, %v4359
      %v4361 = vrot.slane %v4267, 5
      %v4362 = vrot.slane %v4361, 4
      %v4363 = vrot.slane %v3624, 5
      %v4364 = vsel %vm1648, %v4362, %v4363
      %v4365 = vrot.slane %v4363, 4
      %v4366 = vrot.slane %v3625, 5
      %v4367 = vsel %vm1648, %v4365, %v4366
      %v4368 = vrot.slane %v4268, 5
      %v4369 = vrot.slane %v4368, 4
      %v4370 = vrot.slane %v3627, 5
      %v4371 = vsel %vm1648, %v4369, %v4370
      %v4372 = vrot.slane %v4370, 4
      %v4373 = vrot.slane %v3628, 5
      %v4374 = vsel %vm1648, %v4372, %v4373
      %v4375 = vrot.slane %v4269, 5
      %v4376 = vrot.slane %v4375, 4
      %v4377 = vrot.slane %v3630, 5
      %v4378 = vsel %vm1648, %v4376, %v4377
      %v4379 = vrot.slane %v4377, 4
      %v4380 = vrot.slane %v3631, 5
      %v4381 = vsel %vm1648, %v4379, %v4380
      %v4382 = vrot.slane %v4270, 5
      %v4383 = vrot.slane %v4382, 4
      %v4384 = vrot.slane %v3633, 5
      %v4385 = vsel %vm1648, %v4383, %v4384
      %v4386 = vrot.slane %v4384, 4
      %v4387 = vrot.slane %v3634, 5
      %v4388 = vsel %vm1648, %v4386, %v4387
      %v4389 = vrot.slane %v4271, 5
      %v4390 = vrot.slane %v4389, 4
      %v4391 = vrot.slane %v3636, 5
      %v4392 = vsel %vm1648, %v4390, %v4391
      %v4393 = vrot.slane %v4391, 4
      %v4394 = vrot.slane %v3637, 5
      %v4395 = vsel %vm1648, %v4393, %v4394
      %v4396 = vrot.slane %v4272, 5
      %v4397 = vrot.slane %v4396, 4
      %v4398 = vrot.slane %v3639, 5
      %v4399 = vsel %vm1648, %v4397, %v4398
      %v4400 = vrot.slane %v4398, 4
      %v4401 = vrot.slane %v3640, 5
      %v4402 = vsel %vm1648, %v4400, %v4401
      %v4403 = vrot.slane %v4273, 5
      %v4404 = vrot.slane %v4403, 4
      %v4405 = vrot.slane %v3642, 5
      %v4406 = vsel %vm1648, %v4404, %v4405
      %v4407 = vrot.slane %v4405, 4
      %v4408 = vrot.slane %v3643, 5
      %v4409 = vsel %vm1648, %v4407, %v4408
      %v4410 = vrot.slane %v4274, 5
      %v4411 = vrot.slane %v4410, 4
      %v4412 = vrot.slane %v3645, 5
      %v4413 = vsel %vm1648, %v4411, %v4412
      %v4414 = vrot.slane %v4412, 4
      %v4415 = vrot.slane %v3646, 5
      %v4416 = vsel %vm1648, %v4414, %v4415
      %v4417 = vrot.slane %v4275, 5
      %v4418 = vrot.slane %v4417, 4
      %v4419 = vrot.slane %v3648, 5
      %v4420 = vsel %vm1648, %v4418, %v4419
      %v4421 = vrot.slane %v4419, 4
      %v4422 = vrot.slane %v3649, 5
      %v4423 = vsel %vm1648, %v4421, %v4422
      %v4424 = vrot.slane %v4276, 5
      %v4425 = vrot.slane %v4424, 4
      %v4426 = vrot.slane %v3651, 5
      %v4427 = vsel %vm1648, %v4425, %v4426
      %v4428 = vrot.slane %v4426, 4
      %v4429 = vrot.slane %v3652, 5
      %v4430 = vsel %vm1648, %v4428, %v4429
      %v4431 = vrot.slane %v4277, 5
      %v4432 = vrot.slane %v4431, 4
      %v4433 = vrot.slane %v3654, 5
      %v4434 = vsel %vm1648, %v4432, %v4433
      %v4435 = vrot.slane %v4433, 4
      %v4436 = vrot.slane %v3655, 5
      %v4437 = vsel %vm1648, %v4435, %v4436
      %s4438 = scalar_lea.vmem %s1, 16
      %v4439 = vld [vmem:[%s4438] sm:$0x3]
      %v4440 = vunpack.c.l.b16 %v4329
      %v4441 = vunpack.c.l.b16 %v4332
      %v4442 = vunpack.c.l.b16 %v4336
      %v4443 = vunpack.c.l.b16 %v4339
      %v4444 = vunpack.c.l.b16 %v4343
      %v4445 = vunpack.c.l.b16 %v4346
      %v4446 = vunpack.c.l.b16 %v4350
      %v4447 = vunpack.c.l.b16 %v4353
      %v4448 = vunpack.c.l.b16 %v4357
      %v4449 = vunpack.c.l.b16 %v4360
      %v4450 = vunpack.c.l.b16 %v4364
      %v4451 = vunpack.c.l.b16 %v4367
      %v4452 = vunpack.c.l.b16 %v4371
      %v4453 = vunpack.c.l.b16 %v4374
      %v4454 = vunpack.c.l.b16 %v4378
      %v4455 = vunpack.c.l.b16 %v4381
      %v4456 = vunpack.c.l.b16 %v4385
      %v4457 = vunpack.c.l.b16 %v4388
      %v4458 = vunpack.c.l.b16 %v4392
      %v4459 = vunpack.c.l.b16 %v4395
      %v4460 = vunpack.c.l.b16 %v4399
      %v4461 = vunpack.c.l.b16 %v4402
      %v4462 = vunpack.c.l.b16 %v4406
      %v4463 = vunpack.c.l.b16 %v4409
      %v4464 = vunpack.c.l.b16 %v4413
      %v4465 = vunpack.c.l.b16 %v4416
      %v4466 = vunpack.c.l.b16 %v4420
      %v4467 = vunpack.c.l.b16 %v4423
      %v4468 = vunpack.c.l.b16 %v4427
      %v4469 = vunpack.c.l.b16 %v4430
      %v4470 = vunpack.c.l.b16 %v4434
      %v4471 = vunpack.c.l.b16 %v4437
      %v4472 = vpack.c.b16 %v4441, %v4440
      %v4473 = vpack.c.b16 %v4443, %v4442
      %v4474 = vpack.c.b16 %v4445, %v4444
      %v4475 = vpack.c.b16 %v4447, %v4446
      %v4476 = vpack.c.b16 %v4449, %v4448
      %v4477 = vpack.c.b16 %v4451, %v4450
      %v4478 = vpack.c.b16 %v4453, %v4452
      %v4479 = vpack.c.b16 %v4455, %v4454
      %v4480 = vpack.c.b16 %v4457, %v4456
      %v4481 = vpack.c.b16 %v4459, %v4458
      %v4482 = vpack.c.b16 %v4461, %v4460
      %v4483 = vpack.c.b16 %v4463, %v4462
      %v4484 = vpack.c.b16 %v4465, %v4464
      %v4485 = vpack.c.b16 %v4467, %v4466
      %v4486 = vpack.c.b16 %v4469, %v4468
      %v4487 = vpack.c.b16 %v4471, %v4470
      %v4489 = vsel %vm1236, %v4472, 0
      %v4492 = vsel %vm1236, %v4473, 0
      %v4495 = vsel %vm1236, %v4474, 0
      %v4498 = vsel %vm1236, %v4475, 0
      %v4501 = vsel %vm1236, %v4476, 0
      %v4504 = vsel %vm1236, %v4477, 0
      %v4507 = vsel %vm1236, %v4478, 0
      %v4510 = vsel %vm1236, %v4479, 0
      %v4513 = vsel %vm1236, %v4480, 0
      %v4516 = vsel %vm1236, %v4481, 0
      %v4519 = vsel %vm1236, %v4482, 0
      %v4522 = vsel %vm1236, %v4483, 0
      %v4525 = vsel %vm1236, %v4484, 0
      %v4528 = vsel %vm1236, %v4485, 0
      %v4531 = vsel %vm1236, %v4486, 0
      %v4534 = vsel %vm1236, %v4487, 0
      %v4537 = vsel %vm1285, %v4439, 0
      %4539 = vmatpush.bf16.msra.mxu0 0
      %4540 = vmatpush.bf16.msra.mxu0 0
      %4541 = vmatpush.bf16.msra.mxu0 0
      %4542 = vmatpush.bf16.msra.mxu0 0
      %4543 = vmatpush.bf16.msra.mxu0 0
      %4544 = vmatpush.bf16.msra.mxu0 0
      %4545 = vmatpush.bf16.msra.mxu0 0
      %4546 = vmatpush.bf16.msra.mxu0 %v4537
      %4547 = vmatmul.bf16.gmra.mxu0 %v4489
      %v4548 = vpop.f32.mrf.mxu0
      %v4549 = vadd.f32 0.0, %v4548
      %v4550 = vpop.f32.mrf.mxu0
      %v4551 = vadd.f32 0.0, %v4550
      %4552 = vmatmul.bf16.gmra.mxu0 %v4492
      %v4553 = vpop.f32.mrf.mxu0
      %v4554 = vadd.f32 0.0, %v4553
      %v4555 = vpop.f32.mrf.mxu0
      %v4556 = vadd.f32 0.0, %v4555
      %4557 = vmatmul.bf16.gmra.mxu0 %v4495
      %v4558 = vpop.f32.mrf.mxu0
      %v4559 = vadd.f32 0.0, %v4558
      %v4560 = vpop.f32.mrf.mxu0
      %v4561 = vadd.f32 0.0, %v4560
      %4562 = vmatmul.bf16.gmra.mxu0 %v4498
      %v4563 = vpop.f32.mrf.mxu0
      %v4564 = vadd.f32 0.0, %v4563
      %v4565 = vpop.f32.mrf.mxu0
      %v4566 = vadd.f32 0.0, %v4565
      %4567 = vmatmul.bf16.gmra.mxu0 %v4501
      %v4568 = vpop.f32.mrf.mxu0
      %v4569 = vadd.f32 0.0, %v4568
      %v4570 = vpop.f32.mrf.mxu0
      %v4571 = vadd.f32 0.0, %v4570
      %4572 = vmatmul.bf16.gmra.mxu0 %v4504
      %v4573 = vpop.f32.mrf.mxu0
      %v4574 = vadd.f32 0.0, %v4573
      %v4575 = vpop.f32.mrf.mxu0
      %v4576 = vadd.f32 0.0, %v4575
      %4577 = vmatmul.bf16.gmra.mxu0 %v4507
      %v4578 = vpop.f32.mrf.mxu0
      %v4579 = vadd.f32 0.0, %v4578
      %v4580 = vpop.f32.mrf.mxu0
      %v4581 = vadd.f32 0.0, %v4580
      %4582 = vmatmul.bf16.gmra.mxu0 %v4510
      %v4583 = vpop.f32.mrf.mxu0
      %v4584 = vadd.f32 0.0, %v4583
      %v4585 = vpop.f32.mrf.mxu0
      %v4586 = vadd.f32 0.0, %v4585
      %4587 = vmatmul.bf16.gmra.mxu0 %v4513
      %v4588 = vpop.f32.mrf.mxu0
      %v4589 = vadd.f32 0.0, %v4588
      %v4590 = vpop.f32.mrf.mxu0
      %v4591 = vadd.f32 0.0, %v4590
      %4592 = vmatmul.bf16.gmra.mxu0 %v4516
      %v4593 = vpop.f32.mrf.mxu0
      %v4594 = vadd.f32 0.0, %v4593
      %v4595 = vpop.f32.mrf.mxu0
      %v4596 = vadd.f32 0.0, %v4595
      %4597 = vmatmul.bf16.gmra.mxu0 %v4519
      %v4598 = vpop.f32.mrf.mxu0
      %v4599 = vadd.f32 0.0, %v4598
      %v4600 = vpop.f32.mrf.mxu0
      %v4601 = vadd.f32 0.0, %v4600
      %4602 = vmatmul.bf16.gmra.mxu0 %v4522
      %v4603 = vpop.f32.mrf.mxu0
      %v4604 = vadd.f32 0.0, %v4603
      %v4605 = vpop.f32.mrf.mxu0
      %v4606 = vadd.f32 0.0, %v4605
      %4607 = vmatmul.bf16.gmra.mxu0 %v4525
      %v4608 = vpop.f32.mrf.mxu0
      %v4609 = vadd.f32 0.0, %v4608
      %v4610 = vpop.f32.mrf.mxu0
      %v4611 = vadd.f32 0.0, %v4610
      %4612 = vmatmul.bf16.gmra.mxu0 %v4528
      %v4613 = vpop.f32.mrf.mxu0
      %v4614 = vadd.f32 0.0, %v4613
      %v4615 = vpop.f32.mrf.mxu0
      %v4616 = vadd.f32 0.0, %v4615
      %4617 = vmatmul.bf16.gmra.mxu0 %v4531
      %v4618 = vpop.f32.mrf.mxu0
      %v4619 = vadd.f32 0.0, %v4618
      %v4620 = vpop.f32.mrf.mxu0
      %v4621 = vadd.f32 0.0, %v4620
      %4622 = vmatmul.bf16.gmra.mxu0 %v4534
      %v4623 = vpop.f32.mrf.mxu0
      %v4624 = vadd.f32 0.0, %v4623
      %v4625 = vpop.f32.mrf.mxu0
      %v4626 = vadd.f32 0.0, %v4625
      %4627 = vdwg.mxu0
      %v4628 = vadd.f32 %v4230, %v4549
      %v4629 = vadd.f32 %v4231, %v4551
      %v4630 = vadd.f32 %v4232, %v4554
      %v4631 = vadd.f32 %v4233, %v4556
      %v4632 = vadd.f32 %v4234, %v4559
      %v4633 = vadd.f32 %v4235, %v4561
      %v4634 = vadd.f32 %v4236, %v4564
      %v4635 = vadd.f32 %v4237, %v4566
      %v4636 = vadd.f32 %v4238, %v4569
      %v4637 = vadd.f32 %v4239, %v4571
      %v4638 = vadd.f32 %v4240, %v4574
      %v4639 = vadd.f32 %v4241, %v4576
      %v4640 = vadd.f32 %v4242, %v4579
      %v4641 = vadd.f32 %v4243, %v4581
      %v4642 = vadd.f32 %v4244, %v4584
      %v4643 = vadd.f32 %v4245, %v4586
      %v4644 = vadd.f32 %v4246, %v4589
      %v4645 = vadd.f32 %v4247, %v4591
      %v4646 = vadd.f32 %v4248, %v4594
      %v4647 = vadd.f32 %v4249, %v4596
      %v4648 = vadd.f32 %v4250, %v4599
      %v4649 = vadd.f32 %v4251, %v4601
      %v4650 = vadd.f32 %v4252, %v4604
      %v4651 = vadd.f32 %v4253, %v4606
      %v4652 = vadd.f32 %v4254, %v4609
      %v4653 = vadd.f32 %v4255, %v4611
      %v4654 = vadd.f32 %v4256, %v4614
      %v4655 = vadd.f32 %v4257, %v4616
      %v4656 = vadd.f32 %v4258, %v4619
      %v4657 = vadd.f32 %v4259, %v4621
      %v4658 = vadd.f32 %v4260, %v4624
      %v4659 = vadd.f32 %v4261, %v4626
      %v4660 = vld [vmem:[%s2] sm:$0x1]
      %v4662 = vperm.slane %v4660, 0
      %v4664 = vadd.f32 %v4628, %v4662
      %v4665 = vadd.f32 %v4629, %v4662
      %v4666 = vadd.f32 %v4630, %v4662
      %v4667 = vadd.f32 %v4631, %v4662
      %v4668 = vadd.f32 %v4632, %v4662
      %v4669 = vadd.f32 %v4633, %v4662
      %v4670 = vadd.f32 %v4634, %v4662
      %v4671 = vadd.f32 %v4635, %v4662
      %v4672 = vadd.f32 %v4636, %v4662
      %v4673 = vadd.f32 %v4637, %v4662
      %v4674 = vadd.f32 %v4638, %v4662
      %v4675 = vadd.f32 %v4639, %v4662
      %v4676 = vadd.f32 %v4640, %v4662
      %v4677 = vadd.f32 %v4641, %v4662
      %v4678 = vadd.f32 %v4642, %v4662
      %v4679 = vadd.f32 %v4643, %v4662
      %v4680 = vadd.f32 %v4644, %v4662
      %v4681 = vadd.f32 %v4645, %v4662
      %v4682 = vadd.f32 %v4646, %v4662
      %v4683 = vadd.f32 %v4647, %v4662
      %v4684 = vadd.f32 %v4648, %v4662
      %v4685 = vadd.f32 %v4649, %v4662
      %v4686 = vadd.f32 %v4650, %v4662
      %v4687 = vadd.f32 %v4651, %v4662
      %v4688 = vadd.f32 %v4652, %v4662
      %v4689 = vadd.f32 %v4653, %v4662
      %v4690 = vadd.f32 %v4654, %v4662
      %v4691 = vadd.f32 %v4655, %v4662
      %v4692 = vadd.f32 %v4656, %v4662
      %v4693 = vadd.f32 %v4657, %v4662
      %v4694 = vadd.f32 %v4658, %v4662
      %v4695 = vadd.f32 %v4659, %v4662
      %v4696 = vmax.f32 %v4664, 0.0
      %v4697 = vmax.f32 %v4665, 0.0
      %v4698 = vmax.f32 %v4666, 0.0
      %v4699 = vmax.f32 %v4667, 0.0
      %v4700 = vmax.f32 %v4668, 0.0
      %v4701 = vmax.f32 %v4669, 0.0
      %v4702 = vmax.f32 %v4670, 0.0
      %v4703 = vmax.f32 %v4671, 0.0
      %v4704 = vmax.f32 %v4672, 0.0
      %v4705 = vmax.f32 %v4673, 0.0
      %v4706 = vmax.f32 %v4674, 0.0
      %v4707 = vmax.f32 %v4675, 0.0
      %v4708 = vmax.f32 %v4676, 0.0
      %v4709 = vmax.f32 %v4677, 0.0
      %v4710 = vmax.f32 %v4678, 0.0
      %v4711 = vmax.f32 %v4679, 0.0
      %v4712 = vmax.f32 %v4680, 0.0
      %v4713 = vmax.f32 %v4681, 0.0
      %v4714 = vmax.f32 %v4682, 0.0
      %v4715 = vmax.f32 %v4683, 0.0
      %v4716 = vmax.f32 %v4684, 0.0
      %v4717 = vmax.f32 %v4685, 0.0
      %v4718 = vmax.f32 %v4686, 0.0
      %v4719 = vmax.f32 %v4687, 0.0
      %v4720 = vmax.f32 %v4688, 0.0
      %v4721 = vmax.f32 %v4689, 0.0
      %v4722 = vmax.f32 %v4690, 0.0
      %v4723 = vmax.f32 %v4691, 0.0
      %v4724 = vmax.f32 %v4692, 0.0
      %v4725 = vmax.f32 %v4693, 0.0
      %v4726 = vmax.f32 %v4694, 0.0
      %v4727 = vmax.f32 %v4695, 0.0
      %v4760 = vrot.slane %v4696, 2
      %v4761 = vrot.slane %v4696, 4
      %v4762 = vrot.slane %v4696, 6
      %v4763 = vrot.slane %v4697, 2
      %v4764 = vrot.slane %v4697, 4
      %v4765 = vrot.slane %v4697, 6
      %v4766 = vrot.slane %v4698, 2
      %v4767 = vrot.slane %v4698, 4
      %v4768 = vrot.slane %v4698, 6
      %v4769 = vrot.slane %v4699, 2
      %v4770 = vrot.slane %v4699, 4
      %v4771 = vrot.slane %v4699, 6
      %v4772 = vrot.slane %v4700, 2
      %v4773 = vrot.slane %v4700, 4
      %v4774 = vrot.slane %v4700, 6
      %v4775 = vrot.slane %v4701, 2
      %v4776 = vrot.slane %v4701, 4
      %v4777 = vrot.slane %v4701, 6
      %v4778 = vrot.slane %v4702, 2
      %v4779 = vrot.slane %v4702, 4
      %v4780 = vrot.slane %v4702, 6
      %v4781 = vrot.slane %v4703, 2
      %v4782 = vrot.slane %v4703, 4
      %v4783 = vrot.slane %v4703, 6
      %v4784 = vrot.slane %v4704, 2
      %v4785 = vrot.slane %v4704, 4
      %v4786 = vrot.slane %v4704, 6
      %v4787 = vrot.slane %v4705, 2
      %v4788 = vrot.slane %v4705, 4
      %v4789 = vrot.slane %v4705, 6
      %v4790 = vrot.slane %v4706, 2
      %v4791 = vrot.slane %v4706, 4
      %v4792 = vrot.slane %v4706, 6
      %v4793 = vrot.slane %v4707, 2
      %v4794 = vrot.slane %v4707, 4
      %v4795 = vrot.slane %v4707, 6
      %v4796 = vrot.slane %v4708, 2
      %v4797 = vrot.slane %v4708, 4
      %v4798 = vrot.slane %v4708, 6
      %v4799 = vrot.slane %v4709, 2
      %v4800 = vrot.slane %v4709, 4
      %v4801 = vrot.slane %v4709, 6
      %v4802 = vrot.slane %v4710, 2
      %v4803 = vrot.slane %v4710, 4
      %v4804 = vrot.slane %v4710, 6
      %v4805 = vrot.slane %v4711, 2
      %v4806 = vrot.slane %v4711, 4
      %v4807 = vrot.slane %v4711, 6
      %v4808 = vrot.slane %v4712, 2
      %v4809 = vrot.slane %v4712, 4
      %v4810 = vrot.slane %v4712, 6
      %v4811 = vrot.slane %v4713, 2
      %v4812 = vrot.slane %v4713, 4
      %v4813 = vrot.slane %v4713, 6
      %v4814 = vrot.slane %v4714, 2
      %v4815 = vrot.slane %v4714, 4
      %v4816 = vrot.slane %v4714, 6
      %v4817 = vrot.slane %v4715, 2
      %v4818 = vrot.slane %v4715, 4
      %v4819 = vrot.slane %v4715, 6
      %v4820 = vrot.slane %v4716, 2
      %v4821 = vrot.slane %v4716, 4
      %v4822 = vrot.slane %v4716, 6
      %v4823 = vrot.slane %v4717, 2
      %v4824 = vrot.slane %v4717, 4
      %v4825 = vrot.slane %v4717, 6
      %v4826 = vrot.slane %v4718, 2
      %v4827 = vrot.slane %v4718, 4
      %v4828 = vrot.slane %v4718, 6
      %v4829 = vrot.slane %v4719, 2
      %v4830 = vrot.slane %v4719, 4
      %v4831 = vrot.slane %v4719, 6
      %v4832 = vrot.slane %v4720, 2
      %v4833 = vrot.slane %v4720, 4
      %v4834 = vrot.slane %v4720, 6
      %v4835 = vrot.slane %v4721, 2
      %v4836 = vrot.slane %v4721, 4
      %v4837 = vrot.slane %v4721, 6
      %v4838 = vrot.slane %v4722, 2
      %v4839 = vrot.slane %v4722, 4
      %v4840 = vrot.slane %v4722, 6
      %v4841 = vrot.slane %v4723, 2
      %v4842 = vrot.slane %v4723, 4
      %v4843 = vrot.slane %v4723, 6
      %v4844 = vrot.slane %v4724, 2
      %v4845 = vrot.slane %v4724, 4
      %v4846 = vrot.slane %v4724, 6
      %v4847 = vrot.slane %v4725, 2
      %v4848 = vrot.slane %v4725, 4
      %v4849 = vrot.slane %v4725, 6
      %v4850 = vrot.slane %v4726, 2
      %v4851 = vrot.slane %v4726, 4
      %v4852 = vrot.slane %v4726, 6
      %v4853 = vrot.slane %v4727, 2
      %v4854 = vrot.slane %v4727, 4
      %v4855 = vrot.slane %v4727, 6
      %v4952 = vsel %vm1285, %v4696, -inf
      %v4953 = vrot.slane %v4952, 4
      %v4954 = vmax.f32 %v4952, %v4953
      %v4955 = vrot.slane %v4954, 2
      %v4956 = vmax.f32 %v4954, %v4955
      %v4957 = vrot.slane %v4956, 1
      %v4958 = vmax.f32 %v4956, %v4957
      %v4959 = vsel %vm1285, %v4760, -inf
      %v4960 = vrot.slane %v4959, 4
      %v4961 = vmax.f32 %v4959, %v4960
      %v4962 = vrot.slane %v4961, 2
      %v4963 = vmax.f32 %v4961, %v4962
      %v4964 = vrot.slane %v4963, 1
      %v4965 = vmax.f32 %v4963, %v4964
      %v4966 = vsel %vm1285, %v4761, -inf
      %v4967 = vrot.slane %v4966, 4
      %v4968 = vmax.f32 %v4966, %v4967
      %v4969 = vrot.slane %v4968, 2
      %v4970 = vmax.f32 %v4968, %v4969
      %v4971 = vrot.slane %v4970, 1
      %v4972 = vmax.f32 %v4970, %v4971
      %v4973 = vsel %vm1285, %v4762, -inf
      %v4974 = vrot.slane %v4973, 4
      %v4975 = vmax.f32 %v4973, %v4974
      %v4976 = vrot.slane %v4975, 2
      %v4977 = vmax.f32 %v4975, %v4976
      %v4978 = vrot.slane %v4977, 1
      %v4979 = vmax.f32 %v4977, %v4978
      %v4980 = vsel %vm1285, %v4697, -inf
      %v4981 = vrot.slane %v4980, 4
      %v4982 = vmax.f32 %v4980, %v4981
      %v4983 = vrot.slane %v4982, 2
      %v4984 = vmax.f32 %v4982, %v4983
      %v4985 = vrot.slane %v4984, 1
      %v4986 = vmax.f32 %v4984, %v4985
      %v4987 = vsel %vm1285, %v4763, -inf
      %v4988 = vrot.slane %v4987, 4
      %v4989 = vmax.f32 %v4987, %v4988
      %v4990 = vrot.slane %v4989, 2
      %v4991 = vmax.f32 %v4989, %v4990
      %v4992 = vrot.slane %v4991, 1
      %v4993 = vmax.f32 %v4991, %v4992
      %v4994 = vsel %vm1285, %v4764, -inf
      %v4995 = vrot.slane %v4994, 4
      %v4996 = vmax.f32 %v4994, %v4995
      %v4997 = vrot.slane %v4996, 2
      %v4998 = vmax.f32 %v4996, %v4997
      %v4999 = vrot.slane %v4998, 1
      %v5000 = vmax.f32 %v4998, %v4999
      %v5001 = vsel %vm1285, %v4765, -inf
      %v5002 = vrot.slane %v5001, 4
      %v5003 = vmax.f32 %v5001, %v5002
      %v5004 = vrot.slane %v5003, 2
      %v5005 = vmax.f32 %v5003, %v5004
      %v5006 = vrot.slane %v5005, 1
      %v5007 = vmax.f32 %v5005, %v5006
      %v5008 = vsel %vm1285, %v4698, -inf
      %v5009 = vrot.slane %v5008, 4
      %v5010 = vmax.f32 %v5008, %v5009
      %v5011 = vrot.slane %v5010, 2
      %v5012 = vmax.f32 %v5010, %v5011
      %v5013 = vrot.slane %v5012, 1
      %v5014 = vmax.f32 %v5012, %v5013
      %v5015 = vsel %vm1285, %v4766, -inf
      %v5016 = vrot.slane %v5015, 4
      %v5017 = vmax.f32 %v5015, %v5016
      %v5018 = vrot.slane %v5017, 2
      %v5019 = vmax.f32 %v5017, %v5018
      %v5020 = vrot.slane %v5019, 1
      %v5021 = vmax.f32 %v5019, %v5020
      %v5022 = vsel %vm1285, %v4767, -inf
      %v5023 = vrot.slane %v5022, 4
      %v5024 = vmax.f32 %v5022, %v5023
      %v5025 = vrot.slane %v5024, 2
      %v5026 = vmax.f32 %v5024, %v5025
      %v5027 = vrot.slane %v5026, 1
      %v5028 = vmax.f32 %v5026, %v5027
      %v5029 = vsel %vm1285, %v4768, -inf
      %v5030 = vrot.slane %v5029, 4
      %v5031 = vmax.f32 %v5029, %v5030
      %v5032 = vrot.slane %v5031, 2
      %v5033 = vmax.f32 %v5031, %v5032
      %v5034 = vrot.slane %v5033, 1
      %v5035 = vmax.f32 %v5033, %v5034
      %v5036 = vsel %vm1285, %v4699, -inf
      %v5037 = vrot.slane %v5036, 4
      %v5038 = vmax.f32 %v5036, %v5037
      %v5039 = vrot.slane %v5038, 2
      %v5040 = vmax.f32 %v5038, %v5039
      %v5041 = vrot.slane %v5040, 1
      %v5042 = vmax.f32 %v5040, %v5041
      %v5043 = vsel %vm1285, %v4769, -inf
      %v5044 = vrot.slane %v5043, 4
      %v5045 = vmax.f32 %v5043, %v5044
      %v5046 = vrot.slane %v5045, 2
      %v5047 = vmax.f32 %v5045, %v5046
      %v5048 = vrot.slane %v5047, 1
      %v5049 = vmax.f32 %v5047, %v5048
      %v5050 = vsel %vm1285, %v4770, -inf
      %v5051 = vrot.slane %v5050, 4
      %v5052 = vmax.f32 %v5050, %v5051
      %v5053 = vrot.slane %v5052, 2
      %v5054 = vmax.f32 %v5052, %v5053
      %v5055 = vrot.slane %v5054, 1
      %v5056 = vmax.f32 %v5054, %v5055
      %v5057 = vsel %vm1285, %v4771, -inf
      %v5058 = vrot.slane %v5057, 4
      %v5059 = vmax.f32 %v5057, %v5058
      %v5060 = vrot.slane %v5059, 2
      %v5061 = vmax.f32 %v5059, %v5060
      %v5062 = vrot.slane %v5061, 1
      %v5063 = vmax.f32 %v5061, %v5062
      %v5064 = vsel %vm1285, %v4700, -inf
      %v5065 = vrot.slane %v5064, 4
      %v5066 = vmax.f32 %v5064, %v5065
      %v5067 = vrot.slane %v5066, 2
      %v5068 = vmax.f32 %v5066, %v5067
      %v5069 = vrot.slane %v5068, 1
      %v5070 = vmax.f32 %v5068, %v5069
      %v5071 = vsel %vm1285, %v4772, -inf
      %v5072 = vrot.slane %v5071, 4
      %v5073 = vmax.f32 %v5071, %v5072
      %v5074 = vrot.slane %v5073, 2
      %v5075 = vmax.f32 %v5073, %v5074
      %v5076 = vrot.slane %v5075, 1
      %v5077 = vmax.f32 %v5075, %v5076
      %v5078 = vsel %vm1285, %v4773, -inf
      %v5079 = vrot.slane %v5078, 4
      %v5080 = vmax.f32 %v5078, %v5079
      %v5081 = vrot.slane %v5080, 2
      %v5082 = vmax.f32 %v5080, %v5081
      %v5083 = vrot.slane %v5082, 1
      %v5084 = vmax.f32 %v5082, %v5083
      %v5085 = vsel %vm1285, %v4774, -inf
      %v5086 = vrot.slane %v5085, 4
      %v5087 = vmax.f32 %v5085, %v5086
      %v5088 = vrot.slane %v5087, 2
      %v5089 = vmax.f32 %v5087, %v5088
      %v5090 = vrot.slane %v5089, 1
      %v5091 = vmax.f32 %v5089, %v5090
      %v5092 = vsel %vm1285, %v4701, -inf
      %v5093 = vrot.slane %v5092, 4
      %v5094 = vmax.f32 %v5092, %v5093
      %v5095 = vrot.slane %v5094, 2
      %v5096 = vmax.f32 %v5094, %v5095
      %v5097 = vrot.slane %v5096, 1
      %v5098 = vmax.f32 %v5096, %v5097
      %v5099 = vsel %vm1285, %v4775, -inf
      %v5100 = vrot.slane %v5099, 4
      %v5101 = vmax.f32 %v5099, %v5100
      %v5102 = vrot.slane %v5101, 2
      %v5103 = vmax.f32 %v5101, %v5102
      %v5104 = vrot.slane %v5103, 1
      %v5105 = vmax.f32 %v5103, %v5104
      %v5106 = vsel %vm1285, %v4776, -inf
      %v5107 = vrot.slane %v5106, 4
      %v5108 = vmax.f32 %v5106, %v5107
      %v5109 = vrot.slane %v5108, 2
      %v5110 = vmax.f32 %v5108, %v5109
      %v5111 = vrot.slane %v5110, 1
      %v5112 = vmax.f32 %v5110, %v5111
      %v5113 = vsel %vm1285, %v4777, -inf
      %v5114 = vrot.slane %v5113, 4
      %v5115 = vmax.f32 %v5113, %v5114
      %v5116 = vrot.slane %v5115, 2
      %v5117 = vmax.f32 %v5115, %v5116
      %v5118 = vrot.slane %v5117, 1
      %v5119 = vmax.f32 %v5117, %v5118
      %v5120 = vsel %vm1285, %v4702, -inf
      %v5121 = vrot.slane %v5120, 4
      %v5122 = vmax.f32 %v5120, %v5121
      %v5123 = vrot.slane %v5122, 2
      %v5124 = vmax.f32 %v5122, %v5123
      %v5125 = vrot.slane %v5124, 1
      %v5126 = vmax.f32 %v5124, %v5125
      %v5127 = vsel %vm1285, %v4778, -inf
      %v5128 = vrot.slane %v5127, 4
      %v5129 = vmax.f32 %v5127, %v5128
      %v5130 = vrot.slane %v5129, 2
      %v5131 = vmax.f32 %v5129, %v5130
      %v5132 = vrot.slane %v5131, 1
      %v5133 = vmax.f32 %v5131, %v5132
      %v5134 = vsel %vm1285, %v4779, -inf
      %v5135 = vrot.slane %v5134, 4
      %v5136 = vmax.f32 %v5134, %v5135
      %v5137 = vrot.slane %v5136, 2
      %v5138 = vmax.f32 %v5136, %v5137
      %v5139 = vrot.slane %v5138, 1
      %v5140 = vmax.f32 %v5138, %v5139
      %v5141 = vsel %vm1285, %v4780, -inf
      %v5142 = vrot.slane %v5141, 4
      %v5143 = vmax.f32 %v5141, %v5142
      %v5144 = vrot.slane %v5143, 2
      %v5145 = vmax.f32 %v5143, %v5144
      %v5146 = vrot.slane %v5145, 1
      %v5147 = vmax.f32 %v5145, %v5146
      %v5148 = vsel %vm1285, %v4703, -inf
      %v5149 = vrot.slane %v5148, 4
      %v5150 = vmax.f32 %v5148, %v5149
      %v5151 = vrot.slane %v5150, 2
      %v5152 = vmax.f32 %v5150, %v5151
      %v5153 = vrot.slane %v5152, 1
      %v5154 = vmax.f32 %v5152, %v5153
      %v5155 = vsel %vm1285, %v4781, -inf
      %v5156 = vrot.slane %v5155, 4
      %v5157 = vmax.f32 %v5155, %v5156
      %v5158 = vrot.slane %v5157, 2
      %v5159 = vmax.f32 %v5157, %v5158
      %v5160 = vrot.slane %v5159, 1
      %v5161 = vmax.f32 %v5159, %v5160
      %v5162 = vsel %vm1285, %v4782, -inf
      %v5163 = vrot.slane %v5162, 4
      %v5164 = vmax.f32 %v5162, %v5163
      %v5165 = vrot.slane %v5164, 2
      %v5166 = vmax.f32 %v5164, %v5165
      %v5167 = vrot.slane %v5166, 1
      %v5168 = vmax.f32 %v5166, %v5167
      %v5169 = vsel %vm1285, %v4783, -inf
      %v5170 = vrot.slane %v5169, 4
      %v5171 = vmax.f32 %v5169, %v5170
      %v5172 = vrot.slane %v5171, 2
      %v5173 = vmax.f32 %v5171, %v5172
      %v5174 = vrot.slane %v5173, 1
      %v5175 = vmax.f32 %v5173, %v5174
      %v5176 = vsel %vm1285, %v4704, -inf
      %v5177 = vrot.slane %v5176, 4
      %v5178 = vmax.f32 %v5176, %v5177
      %v5179 = vrot.slane %v5178, 2
      %v5180 = vmax.f32 %v5178, %v5179
      %v5181 = vrot.slane %v5180, 1
      %v5182 = vmax.f32 %v5180, %v5181
      %v5183 = vsel %vm1285, %v4784, -inf
      %v5184 = vrot.slane %v5183, 4
      %v5185 = vmax.f32 %v5183, %v5184
      %v5186 = vrot.slane %v5185, 2
      %v5187 = vmax.f32 %v5185, %v5186
      %v5188 = vrot.slane %v5187, 1
      %v5189 = vmax.f32 %v5187, %v5188
      %v5190 = vsel %vm1285, %v4785, -inf
      %v5191 = vrot.slane %v5190, 4
      %v5192 = vmax.f32 %v5190, %v5191
      %v5193 = vrot.slane %v5192, 2
      %v5194 = vmax.f32 %v5192, %v5193
      %v5195 = vrot.slane %v5194, 1
      %v5196 = vmax.f32 %v5194, %v5195
      %v5197 = vsel %vm1285, %v4786, -inf
      %v5198 = vrot.slane %v5197, 4
      %v5199 = vmax.f32 %v5197, %v5198
      %v5200 = vrot.slane %v5199, 2
      %v5201 = vmax.f32 %v5199, %v5200
      %v5202 = vrot.slane %v5201, 1
      %v5203 = vmax.f32 %v5201, %v5202
      %v5204 = vsel %vm1285, %v4705, -inf
      %v5205 = vrot.slane %v5204, 4
      %v5206 = vmax.f32 %v5204, %v5205
      %v5207 = vrot.slane %v5206, 2
      %v5208 = vmax.f32 %v5206, %v5207
      %v5209 = vrot.slane %v5208, 1
      %v5210 = vmax.f32 %v5208, %v5209
      %v5211 = vsel %vm1285, %v4787, -inf
      %v5212 = vrot.slane %v5211, 4
      %v5213 = vmax.f32 %v5211, %v5212
      %v5214 = vrot.slane %v5213, 2
      %v5215 = vmax.f32 %v5213, %v5214
      %v5216 = vrot.slane %v5215, 1
      %v5217 = vmax.f32 %v5215, %v5216
      %v5218 = vsel %vm1285, %v4788, -inf
      %v5219 = vrot.slane %v5218, 4
      %v5220 = vmax.f32 %v5218, %v5219
      %v5221 = vrot.slane %v5220, 2
      %v5222 = vmax.f32 %v5220, %v5221
      %v5223 = vrot.slane %v5222, 1
      %v5224 = vmax.f32 %v5222, %v5223
      %v5225 = vsel %vm1285, %v4789, -inf
      %v5226 = vrot.slane %v5225, 4
      %v5227 = vmax.f32 %v5225, %v5226
      %v5228 = vrot.slane %v5227, 2
      %v5229 = vmax.f32 %v5227, %v5228
      %v5230 = vrot.slane %v5229, 1
      %v5231 = vmax.f32 %v5229, %v5230
      %v5232 = vsel %vm1285, %v4706, -inf
      %v5233 = vrot.slane %v5232, 4
      %v5234 = vmax.f32 %v5232, %v5233
      %v5235 = vrot.slane %v5234, 2
      %v5236 = vmax.f32 %v5234, %v5235
      %v5237 = vrot.slane %v5236, 1
      %v5238 = vmax.f32 %v5236, %v5237
      %v5239 = vsel %vm1285, %v4790, -inf
      %v5240 = vrot.slane %v5239, 4
      %v5241 = vmax.f32 %v5239, %v5240
      %v5242 = vrot.slane %v5241, 2
      %v5243 = vmax.f32 %v5241, %v5242
      %v5244 = vrot.slane %v5243, 1
      %v5245 = vmax.f32 %v5243, %v5244
      %v5246 = vsel %vm1285, %v4791, -inf
      %v5247 = vrot.slane %v5246, 4
      %v5248 = vmax.f32 %v5246, %v5247
      %v5249 = vrot.slane %v5248, 2
      %v5250 = vmax.f32 %v5248, %v5249
      %v5251 = vrot.slane %v5250, 1
      %v5252 = vmax.f32 %v5250, %v5251
      %v5253 = vsel %vm1285, %v4792, -inf
      %v5254 = vrot.slane %v5253, 4
      %v5255 = vmax.f32 %v5253, %v5254
      %v5256 = vrot.slane %v5255, 2
      %v5257 = vmax.f32 %v5255, %v5256
      %v5258 = vrot.slane %v5257, 1
      %v5259 = vmax.f32 %v5257, %v5258
      %v5260 = vsel %vm1285, %v4707, -inf
      %v5261 = vrot.slane %v5260, 4
      %v5262 = vmax.f32 %v5260, %v5261
      %v5263 = vrot.slane %v5262, 2
      %v5264 = vmax.f32 %v5262, %v5263
      %v5265 = vrot.slane %v5264, 1
      %v5266 = vmax.f32 %v5264, %v5265
      %v5267 = vsel %vm1285, %v4793, -inf
      %v5268 = vrot.slane %v5267, 4
      %v5269 = vmax.f32 %v5267, %v5268
      %v5270 = vrot.slane %v5269, 2
      %v5271 = vmax.f32 %v5269, %v5270
      %v5272 = vrot.slane %v5271, 1
      %v5273 = vmax.f32 %v5271, %v5272
      %v5274 = vsel %vm1285, %v4794, -inf
      %v5275 = vrot.slane %v5274, 4
      %v5276 = vmax.f32 %v5274, %v5275
      %v5277 = vrot.slane %v5276, 2
      %v5278 = vmax.f32 %v5276, %v5277
      %v5279 = vrot.slane %v5278, 1
      %v5280 = vmax.f32 %v5278, %v5279
      %v5281 = vsel %vm1285, %v4795, -inf
      %v5282 = vrot.slane %v5281, 4
      %v5283 = vmax.f32 %v5281, %v5282
      %v5284 = vrot.slane %v5283, 2
      %v5285 = vmax.f32 %v5283, %v5284
      %v5286 = vrot.slane %v5285, 1
      %v5287 = vmax.f32 %v5285, %v5286
      %v5288 = vsel %vm1285, %v4708, -inf
      %v5289 = vrot.slane %v5288, 4
      %v5290 = vmax.f32 %v5288, %v5289
      %v5291 = vrot.slane %v5290, 2
      %v5292 = vmax.f32 %v5290, %v5291
      %v5293 = vrot.slane %v5292, 1
      %v5294 = vmax.f32 %v5292, %v5293
      %v5295 = vsel %vm1285, %v4796, -inf
      %v5296 = vrot.slane %v5295, 4
      %v5297 = vmax.f32 %v5295, %v5296
      %v5298 = vrot.slane %v5297, 2
      %v5299 = vmax.f32 %v5297, %v5298
      %v5300 = vrot.slane %v5299, 1
      %v5301 = vmax.f32 %v5299, %v5300
      %v5302 = vsel %vm1285, %v4797, -inf
      %v5303 = vrot.slane %v5302, 4
      %v5304 = vmax.f32 %v5302, %v5303
      %v5305 = vrot.slane %v5304, 2
      %v5306 = vmax.f32 %v5304, %v5305
      %v5307 = vrot.slane %v5306, 1
      %v5308 = vmax.f32 %v5306, %v5307
      %v5309 = vsel %vm1285, %v4798, -inf
      %v5310 = vrot.slane %v5309, 4
      %v5311 = vmax.f32 %v5309, %v5310
      %v5312 = vrot.slane %v5311, 2
      %v5313 = vmax.f32 %v5311, %v5312
      %v5314 = vrot.slane %v5313, 1
      %v5315 = vmax.f32 %v5313, %v5314
      %v5316 = vsel %vm1285, %v4709, -inf
      %v5317 = vrot.slane %v5316, 4
      %v5318 = vmax.f32 %v5316, %v5317
      %v5319 = vrot.slane %v5318, 2
      %v5320 = vmax.f32 %v5318, %v5319
      %v5321 = vrot.slane %v5320, 1
      %v5322 = vmax.f32 %v5320, %v5321
      %v5323 = vsel %vm1285, %v4799, -inf
      %v5324 = vrot.slane %v5323, 4
      %v5325 = vmax.f32 %v5323, %v5324
      %v5326 = vrot.slane %v5325, 2
      %v5327 = vmax.f32 %v5325, %v5326
      %v5328 = vrot.slane %v5327, 1
      %v5329 = vmax.f32 %v5327, %v5328
      %v5330 = vsel %vm1285, %v4800, -inf
      %v5331 = vrot.slane %v5330, 4
      %v5332 = vmax.f32 %v5330, %v5331
      %v5333 = vrot.slane %v5332, 2
      %v5334 = vmax.f32 %v5332, %v5333
      %v5335 = vrot.slane %v5334, 1
      %v5336 = vmax.f32 %v5334, %v5335
      %v5337 = vsel %vm1285, %v4801, -inf
      %v5338 = vrot.slane %v5337, 4
      %v5339 = vmax.f32 %v5337, %v5338
      %v5340 = vrot.slane %v5339, 2
      %v5341 = vmax.f32 %v5339, %v5340
      %v5342 = vrot.slane %v5341, 1
      %v5343 = vmax.f32 %v5341, %v5342
      %v5344 = vsel %vm1285, %v4710, -inf
      %v5345 = vrot.slane %v5344, 4
      %v5346 = vmax.f32 %v5344, %v5345
      %v5347 = vrot.slane %v5346, 2
      %v5348 = vmax.f32 %v5346, %v5347
      %v5349 = vrot.slane %v5348, 1
      %v5350 = vmax.f32 %v5348, %v5349
      %v5351 = vsel %vm1285, %v4802, -inf
      %v5352 = vrot.slane %v5351, 4
      %v5353 = vmax.f32 %v5351, %v5352
      %v5354 = vrot.slane %v5353, 2
      %v5355 = vmax.f32 %v5353, %v5354
      %v5356 = vrot.slane %v5355, 1
      %v5357 = vmax.f32 %v5355, %v5356
      %v5358 = vsel %vm1285, %v4803, -inf
      %v5359 = vrot.slane %v5358, 4
      %v5360 = vmax.f32 %v5358, %v5359
      %v5361 = vrot.slane %v5360, 2
      %v5362 = vmax.f32 %v5360, %v5361
      %v5363 = vrot.slane %v5362, 1
      %v5364 = vmax.f32 %v5362, %v5363
      %v5365 = vsel %vm1285, %v4804, -inf
      %v5366 = vrot.slane %v5365, 4
      %v5367 = vmax.f32 %v5365, %v5366
      %v5368 = vrot.slane %v5367, 2
      %v5369 = vmax.f32 %v5367, %v5368
      %v5370 = vrot.slane %v5369, 1
      %v5371 = vmax.f32 %v5369, %v5370
      %v5372 = vsel %vm1285, %v4711, -inf
      %v5373 = vrot.slane %v5372, 4
      %v5374 = vmax.f32 %v5372, %v5373
      %v5375 = vrot.slane %v5374, 2
      %v5376 = vmax.f32 %v5374, %v5375
      %v5377 = vrot.slane %v5376, 1
      %v5378 = vmax.f32 %v5376, %v5377
      %v5379 = vsel %vm1285, %v4805, -inf
      %v5380 = vrot.slane %v5379, 4
      %v5381 = vmax.f32 %v5379, %v5380
      %v5382 = vrot.slane %v5381, 2
      %v5383 = vmax.f32 %v5381, %v5382
      %v5384 = vrot.slane %v5383, 1
      %v5385 = vmax.f32 %v5383, %v5384
      %v5386 = vsel %vm1285, %v4806, -inf
      %v5387 = vrot.slane %v5386, 4
      %v5388 = vmax.f32 %v5386, %v5387
      %v5389 = vrot.slane %v5388, 2
      %v5390 = vmax.f32 %v5388, %v5389
      %v5391 = vrot.slane %v5390, 1
      %v5392 = vmax.f32 %v5390, %v5391
      %v5393 = vsel %vm1285, %v4807, -inf
      %v5394 = vrot.slane %v5393, 4
      %v5395 = vmax.f32 %v5393, %v5394
      %v5396 = vrot.slane %v5395, 2
      %v5397 = vmax.f32 %v5395, %v5396
      %v5398 = vrot.slane %v5397, 1
      %v5399 = vmax.f32 %v5397, %v5398
      %v5400 = vsel %vm1285, %v4712, -inf
      %v5401 = vrot.slane %v5400, 4
      %v5402 = vmax.f32 %v5400, %v5401
      %v5403 = vrot.slane %v5402, 2
      %v5404 = vmax.f32 %v5402, %v5403
      %v5405 = vrot.slane %v5404, 1
      %v5406 = vmax.f32 %v5404, %v5405
      %v5407 = vsel %vm1285, %v4808, -inf
      %v5408 = vrot.slane %v5407, 4
      %v5409 = vmax.f32 %v5407, %v5408
      %v5410 = vrot.slane %v5409, 2
      %v5411 = vmax.f32 %v5409, %v5410
      %v5412 = vrot.slane %v5411, 1
      %v5413 = vmax.f32 %v5411, %v5412
      %v5414 = vsel %vm1285, %v4809, -inf
      %v5415 = vrot.slane %v5414, 4
      %v5416 = vmax.f32 %v5414, %v5415
      %v5417 = vrot.slane %v5416, 2
      %v5418 = vmax.f32 %v5416, %v5417
      %v5419 = vrot.slane %v5418, 1
      %v5420 = vmax.f32 %v5418, %v5419
      %v5421 = vsel %vm1285, %v4810, -inf
      %v5422 = vrot.slane %v5421, 4
      %v5423 = vmax.f32 %v5421, %v5422
      %v5424 = vrot.slane %v5423, 2
      %v5425 = vmax.f32 %v5423, %v5424
      %v5426 = vrot.slane %v5425, 1
      %v5427 = vmax.f32 %v5425, %v5426
      %v5428 = vsel %vm1285, %v4713, -inf
      %v5429 = vrot.slane %v5428, 4
      %v5430 = vmax.f32 %v5428, %v5429
      %v5431 = vrot.slane %v5430, 2
      %v5432 = vmax.f32 %v5430, %v5431
      %v5433 = vrot.slane %v5432, 1
      %v5434 = vmax.f32 %v5432, %v5433
      %v5435 = vsel %vm1285, %v4811, -inf
      %v5436 = vrot.slane %v5435, 4
      %v5437 = vmax.f32 %v5435, %v5436
      %v5438 = vrot.slane %v5437, 2
      %v5439 = vmax.f32 %v5437, %v5438
      %v5440 = vrot.slane %v5439, 1
      %v5441 = vmax.f32 %v5439, %v5440
      %v5442 = vsel %vm1285, %v4812, -inf
      %v5443 = vrot.slane %v5442, 4
      %v5444 = vmax.f32 %v5442, %v5443
      %v5445 = vrot.slane %v5444, 2
      %v5446 = vmax.f32 %v5444, %v5445
      %v5447 = vrot.slane %v5446, 1
      %v5448 = vmax.f32 %v5446, %v5447
      %v5449 = vsel %vm1285, %v4813, -inf
      %v5450 = vrot.slane %v5449, 4
      %v5451 = vmax.f32 %v5449, %v5450
      %v5452 = vrot.slane %v5451, 2
      %v5453 = vmax.f32 %v5451, %v5452
      %v5454 = vrot.slane %v5453, 1
      %v5455 = vmax.f32 %v5453, %v5454
      %v5456 = vsel %vm1285, %v4714, -inf
      %v5457 = vrot.slane %v5456, 4
      %v5458 = vmax.f32 %v5456, %v5457
      %v5459 = vrot.slane %v5458, 2
      %v5460 = vmax.f32 %v5458, %v5459
      %v5461 = vrot.slane %v5460, 1
      %v5462 = vmax.f32 %v5460, %v5461
      %v5463 = vsel %vm1285, %v4814, -inf
      %v5464 = vrot.slane %v5463, 4
      %v5465 = vmax.f32 %v5463, %v5464
      %v5466 = vrot.slane %v5465, 2
      %v5467 = vmax.f32 %v5465, %v5466
      %v5468 = vrot.slane %v5467, 1
      %v5469 = vmax.f32 %v5467, %v5468
      %v5470 = vsel %vm1285, %v4815, -inf
      %v5471 = vrot.slane %v5470, 4
      %v5472 = vmax.f32 %v5470, %v5471
      %v5473 = vrot.slane %v5472, 2
      %v5474 = vmax.f32 %v5472, %v5473
      %v5475 = vrot.slane %v5474, 1
      %v5476 = vmax.f32 %v5474, %v5475
      %v5477 = vsel %vm1285, %v4816, -inf
      %v5478 = vrot.slane %v5477, 4
      %v5479 = vmax.f32 %v5477, %v5478
      %v5480 = vrot.slane %v5479, 2
      %v5481 = vmax.f32 %v5479, %v5480
      %v5482 = vrot.slane %v5481, 1
      %v5483 = vmax.f32 %v5481, %v5482
      %v5484 = vsel %vm1285, %v4715, -inf
      %v5485 = vrot.slane %v5484, 4
      %v5486 = vmax.f32 %v5484, %v5485
      %v5487 = vrot.slane %v5486, 2
      %v5488 = vmax.f32 %v5486, %v5487
      %v5489 = vrot.slane %v5488, 1
      %v5490 = vmax.f32 %v5488, %v5489
      %v5491 = vsel %vm1285, %v4817, -inf
      %v5492 = vrot.slane %v5491, 4
      %v5493 = vmax.f32 %v5491, %v5492
      %v5494 = vrot.slane %v5493, 2
      %v5495 = vmax.f32 %v5493, %v5494
      %v5496 = vrot.slane %v5495, 1
      %v5497 = vmax.f32 %v5495, %v5496
      %v5498 = vsel %vm1285, %v4818, -inf
      %v5499 = vrot.slane %v5498, 4
      %v5500 = vmax.f32 %v5498, %v5499
      %v5501 = vrot.slane %v5500, 2
      %v5502 = vmax.f32 %v5500, %v5501
      %v5503 = vrot.slane %v5502, 1
      %v5504 = vmax.f32 %v5502, %v5503
      %v5505 = vsel %vm1285, %v4819, -inf
      %v5506 = vrot.slane %v5505, 4
      %v5507 = vmax.f32 %v5505, %v5506
      %v5508 = vrot.slane %v5507, 2
      %v5509 = vmax.f32 %v5507, %v5508
      %v5510 = vrot.slane %v5509, 1
      %v5511 = vmax.f32 %v5509, %v5510
      %v5512 = vsel %vm1285, %v4716, -inf
      %v5513 = vrot.slane %v5512, 4
      %v5514 = vmax.f32 %v5512, %v5513
      %v5515 = vrot.slane %v5514, 2
      %v5516 = vmax.f32 %v5514, %v5515
      %v5517 = vrot.slane %v5516, 1
      %v5518 = vmax.f32 %v5516, %v5517
      %v5519 = vsel %vm1285, %v4820, -inf
      %v5520 = vrot.slane %v5519, 4
      %v5521 = vmax.f32 %v5519, %v5520
      %v5522 = vrot.slane %v5521, 2
      %v5523 = vmax.f32 %v5521, %v5522
      %v5524 = vrot.slane %v5523, 1
      %v5525 = vmax.f32 %v5523, %v5524
      %v5526 = vsel %vm1285, %v4821, -inf
      %v5527 = vrot.slane %v5526, 4
      %v5528 = vmax.f32 %v5526, %v5527
      %v5529 = vrot.slane %v5528, 2
      %v5530 = vmax.f32 %v5528, %v5529
      %v5531 = vrot.slane %v5530, 1
      %v5532 = vmax.f32 %v5530, %v5531
      %v5533 = vsel %vm1285, %v4822, -inf
      %v5534 = vrot.slane %v5533, 4
      %v5535 = vmax.f32 %v5533, %v5534
      %v5536 = vrot.slane %v5535, 2
      %v5537 = vmax.f32 %v5535, %v5536
      %v5538 = vrot.slane %v5537, 1
      %v5539 = vmax.f32 %v5537, %v5538
      %v5540 = vsel %vm1285, %v4717, -inf
      %v5541 = vrot.slane %v5540, 4
      %v5542 = vmax.f32 %v5540, %v5541
      %v5543 = vrot.slane %v5542, 2
      %v5544 = vmax.f32 %v5542, %v5543
      %v5545 = vrot.slane %v5544, 1
      %v5546 = vmax.f32 %v5544, %v5545
      %v5547 = vsel %vm1285, %v4823, -inf
      %v5548 = vrot.slane %v5547, 4
      %v5549 = vmax.f32 %v5547, %v5548
      %v5550 = vrot.slane %v5549, 2
      %v5551 = vmax.f32 %v5549, %v5550
      %v5552 = vrot.slane %v5551, 1
      %v5553 = vmax.f32 %v5551, %v5552
      %v5554 = vsel %vm1285, %v4824, -inf
      %v5555 = vrot.slane %v5554, 4
      %v5556 = vmax.f32 %v5554, %v5555
      %v5557 = vrot.slane %v5556, 2
      %v5558 = vmax.f32 %v5556, %v5557
      %v5559 = vrot.slane %v5558, 1
      %v5560 = vmax.f32 %v5558, %v5559
      %v5561 = vsel %vm1285, %v4825, -inf
      %v5562 = vrot.slane %v5561, 4
      %v5563 = vmax.f32 %v5561, %v5562
      %v5564 = vrot.slane %v5563, 2
      %v5565 = vmax.f32 %v5563, %v5564
      %v5566 = vrot.slane %v5565, 1
      %v5567 = vmax.f32 %v5565, %v5566
      %v5568 = vsel %vm1285, %v4718, -inf
      %v5569 = vrot.slane %v5568, 4
      %v5570 = vmax.f32 %v5568, %v5569
      %v5571 = vrot.slane %v5570, 2
      %v5572 = vmax.f32 %v5570, %v5571
      %v5573 = vrot.slane %v5572, 1
      %v5574 = vmax.f32 %v5572, %v5573
      %v5575 = vsel %vm1285, %v4826, -inf
      %v5576 = vrot.slane %v5575, 4
      %v5577 = vmax.f32 %v5575, %v5576
      %v5578 = vrot.slane %v5577, 2
      %v5579 = vmax.f32 %v5577, %v5578
      %v5580 = vrot.slane %v5579, 1
      %v5581 = vmax.f32 %v5579, %v5580
      %v5582 = vsel %vm1285, %v4827, -inf
      %v5583 = vrot.slane %v5582, 4
      %v5584 = vmax.f32 %v5582, %v5583
      %v5585 = vrot.slane %v5584, 2
      %v5586 = vmax.f32 %v5584, %v5585
      %v5587 = vrot.slane %v5586, 1
      %v5588 = vmax.f32 %v5586, %v5587
      %v5589 = vsel %vm1285, %v4828, -inf
      %v5590 = vrot.slane %v5589, 4
      %v5591 = vmax.f32 %v5589, %v5590
      %v5592 = vrot.slane %v5591, 2
      %v5593 = vmax.f32 %v5591, %v5592
      %v5594 = vrot.slane %v5593, 1
      %v5595 = vmax.f32 %v5593, %v5594
      %v5596 = vsel %vm1285, %v4719, -inf
      %v5597 = vrot.slane %v5596, 4
      %v5598 = vmax.f32 %v5596, %v5597
      %v5599 = vrot.slane %v5598, 2
      %v5600 = vmax.f32 %v5598, %v5599
      %v5601 = vrot.slane %v5600, 1
      %v5602 = vmax.f32 %v5600, %v5601
      %v5603 = vsel %vm1285, %v4829, -inf
      %v5604 = vrot.slane %v5603, 4
      %v5605 = vmax.f32 %v5603, %v5604
      %v5606 = vrot.slane %v5605, 2
      %v5607 = vmax.f32 %v5605, %v5606
      %v5608 = vrot.slane %v5607, 1
      %v5609 = vmax.f32 %v5607, %v5608
      %v5610 = vsel %vm1285, %v4830, -inf
      %v5611 = vrot.slane %v5610, 4
      %v5612 = vmax.f32 %v5610, %v5611
      %v5613 = vrot.slane %v5612, 2
      %v5614 = vmax.f32 %v5612, %v5613
      %v5615 = vrot.slane %v5614, 1
      %v5616 = vmax.f32 %v5614, %v5615
      %v5617 = vsel %vm1285, %v4831, -inf
      %v5618 = vrot.slane %v5617, 4
      %v5619 = vmax.f32 %v5617, %v5618
      %v5620 = vrot.slane %v5619, 2
      %v5621 = vmax.f32 %v5619, %v5620
      %v5622 = vrot.slane %v5621, 1
      %v5623 = vmax.f32 %v5621, %v5622
      %v5624 = vsel %vm1285, %v4720, -inf
      %v5625 = vrot.slane %v5624, 4
      %v5626 = vmax.f32 %v5624, %v5625
      %v5627 = vrot.slane %v5626, 2
      %v5628 = vmax.f32 %v5626, %v5627
      %v5629 = vrot.slane %v5628, 1
      %v5630 = vmax.f32 %v5628, %v5629
      %v5631 = vsel %vm1285, %v4832, -inf
      %v5632 = vrot.slane %v5631, 4
      %v5633 = vmax.f32 %v5631, %v5632
      %v5634 = vrot.slane %v5633, 2
      %v5635 = vmax.f32 %v5633, %v5634
      %v5636 = vrot.slane %v5635, 1
      %v5637 = vmax.f32 %v5635, %v5636
      %v5638 = vsel %vm1285, %v4833, -inf
      %v5639 = vrot.slane %v5638, 4
      %v5640 = vmax.f32 %v5638, %v5639
      %v5641 = vrot.slane %v5640, 2
      %v5642 = vmax.f32 %v5640, %v5641
      %v5643 = vrot.slane %v5642, 1
      %v5644 = vmax.f32 %v5642, %v5643
      %v5645 = vsel %vm1285, %v4834, -inf
      %v5646 = vrot.slane %v5645, 4
      %v5647 = vmax.f32 %v5645, %v5646
      %v5648 = vrot.slane %v5647, 2
      %v5649 = vmax.f32 %v5647, %v5648
      %v5650 = vrot.slane %v5649, 1
      %v5651 = vmax.f32 %v5649, %v5650
      %v5652 = vsel %vm1285, %v4721, -inf
      %v5653 = vrot.slane %v5652, 4
      %v5654 = vmax.f32 %v5652, %v5653
      %v5655 = vrot.slane %v5654, 2
      %v5656 = vmax.f32 %v5654, %v5655
      %v5657 = vrot.slane %v5656, 1
      %v5658 = vmax.f32 %v5656, %v5657
      %v5659 = vsel %vm1285, %v4835, -inf
      %v5660 = vrot.slane %v5659, 4
      %v5661 = vmax.f32 %v5659, %v5660
      %v5662 = vrot.slane %v5661, 2
      %v5663 = vmax.f32 %v5661, %v5662
      %v5664 = vrot.slane %v5663, 1
      %v5665 = vmax.f32 %v5663, %v5664
      %v5666 = vsel %vm1285, %v4836, -inf
      %v5667 = vrot.slane %v5666, 4
      %v5668 = vmax.f32 %v5666, %v5667
      %v5669 = vrot.slane %v5668, 2
      %v5670 = vmax.f32 %v5668, %v5669
      %v5671 = vrot.slane %v5670, 1
      %v5672 = vmax.f32 %v5670, %v5671
      %v5673 = vsel %vm1285, %v4837, -inf
      %v5674 = vrot.slane %v5673, 4
      %v5675 = vmax.f32 %v5673, %v5674
      %v5676 = vrot.slane %v5675, 2
      %v5677 = vmax.f32 %v5675, %v5676
      %v5678 = vrot.slane %v5677, 1
      %v5679 = vmax.f32 %v5677, %v5678
      %v5680 = vsel %vm1285, %v4722, -inf
      %v5681 = vrot.slane %v5680, 4
      %v5682 = vmax.f32 %v5680, %v5681
      %v5683 = vrot.slane %v5682, 2
      %v5684 = vmax.f32 %v5682, %v5683
      %v5685 = vrot.slane %v5684, 1
      %v5686 = vmax.f32 %v5684, %v5685
      %v5687 = vsel %vm1285, %v4838, -inf
      %v5688 = vrot.slane %v5687, 4
      %v5689 = vmax.f32 %v5687, %v5688
      %v5690 = vrot.slane %v5689, 2
      %v5691 = vmax.f32 %v5689, %v5690
      %v5692 = vrot.slane %v5691, 1
      %v5693 = vmax.f32 %v5691, %v5692
      %v5694 = vsel %vm1285, %v4839, -inf
      %v5695 = vrot.slane %v5694, 4
      %v5696 = vmax.f32 %v5694, %v5695
      %v5697 = vrot.slane %v5696, 2
      %v5698 = vmax.f32 %v5696, %v5697
      %v5699 = vrot.slane %v5698, 1
      %v5700 = vmax.f32 %v5698, %v5699
      %v5701 = vsel %vm1285, %v4840, -inf
      %v5702 = vrot.slane %v5701, 4
      %v5703 = vmax.f32 %v5701, %v5702
      %v5704 = vrot.slane %v5703, 2
      %v5705 = vmax.f32 %v5703, %v5704
      %v5706 = vrot.slane %v5705, 1
      %v5707 = vmax.f32 %v5705, %v5706
      %v5708 = vsel %vm1285, %v4723, -inf
      %v5709 = vrot.slane %v5708, 4
      %v5710 = vmax.f32 %v5708, %v5709
      %v5711 = vrot.slane %v5710, 2
      %v5712 = vmax.f32 %v5710, %v5711
      %v5713 = vrot.slane %v5712, 1
      %v5714 = vmax.f32 %v5712, %v5713
      %v5715 = vsel %vm1285, %v4841, -inf
      %v5716 = vrot.slane %v5715, 4
      %v5717 = vmax.f32 %v5715, %v5716
      %v5718 = vrot.slane %v5717, 2
      %v5719 = vmax.f32 %v5717, %v5718
      %v5720 = vrot.slane %v5719, 1
      %v5721 = vmax.f32 %v5719, %v5720
      %v5722 = vsel %vm1285, %v4842, -inf
      %v5723 = vrot.slane %v5722, 4
      %v5724 = vmax.f32 %v5722, %v5723
      %v5725 = vrot.slane %v5724, 2
      %v5726 = vmax.f32 %v5724, %v5725
      %v5727 = vrot.slane %v5726, 1
      %v5728 = vmax.f32 %v5726, %v5727
      %v5729 = vsel %vm1285, %v4843, -inf
      %v5730 = vrot.slane %v5729, 4
      %v5731 = vmax.f32 %v5729, %v5730
      %v5732 = vrot.slane %v5731, 2
      %v5733 = vmax.f32 %v5731, %v5732
      %v5734 = vrot.slane %v5733, 1
      %v5735 = vmax.f32 %v5733, %v5734
      %v5736 = vsel %vm1285, %v4724, -inf
      %v5737 = vrot.slane %v5736, 4
      %v5738 = vmax.f32 %v5736, %v5737
      %v5739 = vrot.slane %v5738, 2
      %v5740 = vmax.f32 %v5738, %v5739
      %v5741 = vrot.slane %v5740, 1
      %v5742 = vmax.f32 %v5740, %v5741
      %v5743 = vsel %vm1285, %v4844, -inf
      %v5744 = vrot.slane %v5743, 4
      %v5745 = vmax.f32 %v5743, %v5744
      %v5746 = vrot.slane %v5745, 2
      %v5747 = vmax.f32 %v5745, %v5746
      %v5748 = vrot.slane %v5747, 1
      %v5749 = vmax.f32 %v5747, %v5748
      %v5750 = vsel %vm1285, %v4845, -inf
      %v5751 = vrot.slane %v5750, 4
      %v5752 = vmax.f32 %v5750, %v5751
      %v5753 = vrot.slane %v5752, 2
      %v5754 = vmax.f32 %v5752, %v5753
      %v5755 = vrot.slane %v5754, 1
      %v5756 = vmax.f32 %v5754, %v5755
      %v5757 = vsel %vm1285, %v4846, -inf
      %v5758 = vrot.slane %v5757, 4
      %v5759 = vmax.f32 %v5757, %v5758
      %v5760 = vrot.slane %v5759, 2
      %v5761 = vmax.f32 %v5759, %v5760
      %v5762 = vrot.slane %v5761, 1
      %v5763 = vmax.f32 %v5761, %v5762
      %v5764 = vsel %vm1285, %v4725, -inf
      %v5765 = vrot.slane %v5764, 4
      %v5766 = vmax.f32 %v5764, %v5765
      %v5767 = vrot.slane %v5766, 2
      %v5768 = vmax.f32 %v5766, %v5767
      %v5769 = vrot.slane %v5768, 1
      %v5770 = vmax.f32 %v5768, %v5769
      %v5771 = vsel %vm1285, %v4847, -inf
      %v5772 = vrot.slane %v5771, 4
      %v5773 = vmax.f32 %v5771, %v5772
      %v5774 = vrot.slane %v5773, 2
      %v5775 = vmax.f32 %v5773, %v5774
      %v5776 = vrot.slane %v5775, 1
      %v5777 = vmax.f32 %v5775, %v5776
      %v5778 = vsel %vm1285, %v4848, -inf
      %v5779 = vrot.slane %v5778, 4
      %v5780 = vmax.f32 %v5778, %v5779
      %v5781 = vrot.slane %v5780, 2
      %v5782 = vmax.f32 %v5780, %v5781
      %v5783 = vrot.slane %v5782, 1
      %v5784 = vmax.f32 %v5782, %v5783
      %v5785 = vsel %vm1285, %v4849, -inf
      %v5786 = vrot.slane %v5785, 4
      %v5787 = vmax.f32 %v5785, %v5786
      %v5788 = vrot.slane %v5787, 2
      %v5789 = vmax.f32 %v5787, %v5788
      %v5790 = vrot.slane %v5789, 1
      %v5791 = vmax.f32 %v5789, %v5790
      %v5792 = vsel %vm1285, %v4726, -inf
      %v5793 = vrot.slane %v5792, 4
      %v5794 = vmax.f32 %v5792, %v5793
      %v5795 = vrot.slane %v5794, 2
      %v5796 = vmax.f32 %v5794, %v5795
      %v5797 = vrot.slane %v5796, 1
      %v5798 = vmax.f32 %v5796, %v5797
      %v5799 = vsel %vm1285, %v4850, -inf
      %v5800 = vrot.slane %v5799, 4
      %v5801 = vmax.f32 %v5799, %v5800
      %v5802 = vrot.slane %v5801, 2
      %v5803 = vmax.f32 %v5801, %v5802
      %v5804 = vrot.slane %v5803, 1
      %v5805 = vmax.f32 %v5803, %v5804
      %v5806 = vsel %vm1285, %v4851, -inf
      %v5807 = vrot.slane %v5806, 4
      %v5808 = vmax.f32 %v5806, %v5807
      %v5809 = vrot.slane %v5808, 2
      %v5810 = vmax.f32 %v5808, %v5809
      %v5811 = vrot.slane %v5810, 1
      %v5812 = vmax.f32 %v5810, %v5811
      %v5813 = vsel %vm1285, %v4852, -inf
      %v5814 = vrot.slane %v5813, 4
      %v5815 = vmax.f32 %v5813, %v5814
      %v5816 = vrot.slane %v5815, 2
      %v5817 = vmax.f32 %v5815, %v5816
      %v5818 = vrot.slane %v5817, 1
      %v5819 = vmax.f32 %v5817, %v5818
      %v5820 = vsel %vm1285, %v4727, -inf
      %v5821 = vrot.slane %v5820, 4
      %v5822 = vmax.f32 %v5820, %v5821
      %v5823 = vrot.slane %v5822, 2
      %v5824 = vmax.f32 %v5822, %v5823
      %v5825 = vrot.slane %v5824, 1
      %v5826 = vmax.f32 %v5824, %v5825
      %v5827 = vsel %vm1285, %v4853, -inf
      %v5828 = vrot.slane %v5827, 4
      %v5829 = vmax.f32 %v5827, %v5828
      %v5830 = vrot.slane %v5829, 2
      %v5831 = vmax.f32 %v5829, %v5830
      %v5832 = vrot.slane %v5831, 1
      %v5833 = vmax.f32 %v5831, %v5832
      %v5834 = vsel %vm1285, %v4854, -inf
      %v5835 = vrot.slane %v5834, 4
      %v5836 = vmax.f32 %v5834, %v5835
      %v5837 = vrot.slane %v5836, 2
      %v5838 = vmax.f32 %v5836, %v5837
      %v5839 = vrot.slane %v5838, 1
      %v5840 = vmax.f32 %v5838, %v5839
      %v5841 = vsel %vm1285, %v4855, -inf
      %v5842 = vrot.slane %v5841, 4
      %v5843 = vmax.f32 %v5841, %v5842
      %v5844 = vrot.slane %v5843, 2
      %v5845 = vmax.f32 %v5843, %v5844
      %v5846 = vrot.slane %v5845, 1
      %v5847 = vmax.f32 %v5845, %v5846
      %v5848 = vmax.f32 %v4958, %v5014
      %v5849 = vmax.f32 %v4965, %v5021
      %v5850 = vmax.f32 %v4972, %v5028
      %v5851 = vmax.f32 %v4979, %v5035
      %v5852 = vmax.f32 %v4986, %v5042
      %v5853 = vmax.f32 %v4993, %v5049
      %v5854 = vmax.f32 %v5000, %v5056
      %v5855 = vmax.f32 %v5007, %v5063
      %v5856 = vmax.f32 %v5070, %v5126
      %v5857 = vmax.f32 %v5077, %v5133
      %v5858 = vmax.f32 %v5084, %v5140
      %v5859 = vmax.f32 %v5091, %v5147
      %v5860 = vmax.f32 %v5098, %v5154
      %v5861 = vmax.f32 %v5105, %v5161
      %v5862 = vmax.f32 %v5112, %v5168
      %v5863 = vmax.f32 %v5119, %v5175
      %v5864 = vmax.f32 %v5182, %v5238
      %v5865 = vmax.f32 %v5189, %v5245
      %v5866 = vmax.f32 %v5196, %v5252
      %v5867 = vmax.f32 %v5203, %v5259
      %v5868 = vmax.f32 %v5210, %v5266
      %v5869 = vmax.f32 %v5217, %v5273
      %v5870 = vmax.f32 %v5224, %v5280
      %v5871 = vmax.f32 %v5231, %v5287
      %v5872 = vmax.f32 %v5294, %v5350
      %v5873 = vmax.f32 %v5301, %v5357
      %v5874 = vmax.f32 %v5308, %v5364
      %v5875 = vmax.f32 %v5315, %v5371
      %v5876 = vmax.f32 %v5322, %v5378
      %v5877 = vmax.f32 %v5329, %v5385
      %v5878 = vmax.f32 %v5336, %v5392
      %v5879 = vmax.f32 %v5343, %v5399
      %v5880 = vmax.f32 %v5406, %v5462
      %v5881 = vmax.f32 %v5413, %v5469
      %v5882 = vmax.f32 %v5420, %v5476
      %v5883 = vmax.f32 %v5427, %v5483
      %v5884 = vmax.f32 %v5434, %v5490
      %v5885 = vmax.f32 %v5441, %v5497
      %v5886 = vmax.f32 %v5448, %v5504
      %v5887 = vmax.f32 %v5455, %v5511
      %v5888 = vmax.f32 %v5518, %v5574
      %v5889 = vmax.f32 %v5525, %v5581
      %v5890 = vmax.f32 %v5532, %v5588
      %v5891 = vmax.f32 %v5539, %v5595
      %v5892 = vmax.f32 %v5546, %v5602
      %v5893 = vmax.f32 %v5553, %v5609
      %v5894 = vmax.f32 %v5560, %v5616
      %v5895 = vmax.f32 %v5567, %v5623
      %v5896 = vmax.f32 %v5630, %v5686
      %v5897 = vmax.f32 %v5637, %v5693
      %v5898 = vmax.f32 %v5644, %v5700
      %v5899 = vmax.f32 %v5651, %v5707
      %v5900 = vmax.f32 %v5658, %v5714
      %v5901 = vmax.f32 %v5665, %v5721
      %v5902 = vmax.f32 %v5672, %v5728
      %v5903 = vmax.f32 %v5679, %v5735
      %v5904 = vmax.f32 %v5742, %v5798
      %v5905 = vmax.f32 %v5749, %v5805
      %v5906 = vmax.f32 %v5756, %v5812
      %v5907 = vmax.f32 %v5763, %v5819
      %v5908 = vmax.f32 %v5770, %v5826
      %v5909 = vmax.f32 %v5777, %v5833
      %v5910 = vmax.f32 %v5784, %v5840
      %v5911 = vmax.f32 %v5791, %v5847
      %vm5976 = vcmask 1041409
      %v5977 = vsel %vm5976, %v5849, %v5848
      %vm5978 = vcmask 1042434
      %v5979 = vsel %vm5978, %v5850, %v5977
      %vm5980 = vcmask 1043459
      %v5981 = vsel %vm5980, %v5851, %v5979
      %vm5982 = vcmask 1044484
      %v5983 = vsel %vm5982, %v5852, %v5981
      %vm5984 = vcmask 1045509
      %v5985 = vsel %vm5984, %v5853, %v5983
      %vm5986 = vcmask 1046534
      %v5987 = vsel %vm5986, %v5854, %v5985
      %vm5988 = vcmask 1047559
      %v5989 = vsel %vm5988, %v5855, %v5987
      %v5990 = vsel %vm5976, %v5857, %v5856
      %v5991 = vsel %vm5978, %v5858, %v5990
      %v5992 = vsel %vm5980, %v5859, %v5991
      %v5993 = vsel %vm5982, %v5860, %v5992
      %v5994 = vsel %vm5984, %v5861, %v5993
      %v5995 = vsel %vm5986, %v5862, %v5994
      %v5996 = vsel %vm5988, %v5863, %v5995
      %v5997 = vsel %vm5976, %v5865, %v5864
      %v5998 = vsel %vm5978, %v5866, %v5997
      %v5999 = vsel %vm5980, %v5867, %v5998
      %v6000 = vsel %vm5982, %v5868, %v5999
      %v6001 = vsel %vm5984, %v5869, %v6000
      %v6002 = vsel %vm5986, %v5870, %v6001
      %v6003 = vsel %vm5988, %v5871, %v6002
      %v6004 = vsel %vm5976, %v5873, %v5872
      %v6005 = vsel %vm5978, %v5874, %v6004
      %v6006 = vsel %vm5980, %v5875, %v6005
      %v6007 = vsel %vm5982, %v5876, %v6006
      %v6008 = vsel %vm5984, %v5877, %v6007
      %v6009 = vsel %vm5986, %v5878, %v6008
      %v6010 = vsel %vm5988, %v5879, %v6009
      %v6011 = vsel %vm5976, %v5881, %v5880
      %v6012 = vsel %vm5978, %v5882, %v6011
      %v6013 = vsel %vm5980, %v5883, %v6012
      %v6014 = vsel %vm5982, %v5884, %v6013
      %v6015 = vsel %vm5984, %v5885, %v6014
      %v6016 = vsel %vm5986, %v5886, %v6015
      %v6017 = vsel %vm5988, %v5887, %v6016
      %v6018 = vsel %vm5976, %v5889, %v5888
      %v6019 = vsel %vm5978, %v5890, %v6018
      %v6020 = vsel %vm5980, %v5891, %v6019
      %v6021 = vsel %vm5982, %v5892, %v6020
      %v6022 = vsel %vm5984, %v5893, %v6021
      %v6023 = vsel %vm5986, %v5894, %v6022
      %v6024 = vsel %vm5988, %v5895, %v6023
      %v6025 = vsel %vm5976, %v5897, %v5896
      %v6026 = vsel %vm5978, %v5898, %v6025
      %v6027 = vsel %vm5980, %v5899, %v6026
      %v6028 = vsel %vm5982, %v5900, %v6027
      %v6029 = vsel %vm5984, %v5901, %v6028
      %v6030 = vsel %vm5986, %v5902, %v6029
      %v6031 = vsel %vm5988, %v5903, %v6030
      %v6032 = vsel %vm5976, %v5905, %v5904
      %v6033 = vsel %vm5978, %v5906, %v6032
      %v6034 = vsel %vm5980, %v5907, %v6033
      %v6035 = vsel %vm5982, %v5908, %v6034
      %v6036 = vsel %vm5984, %v5909, %v6035
      %v6037 = vsel %vm5986, %v5910, %v6036
      %v6038 = vsel %vm5988, %v5911, %v6037
      %6047 = vst [vmem:[%s170] sm:$0xff] %v5989
      %6048 = vst [vmem:[%s170 + $0x8] sm:$0xff] %v5996
      %6049 = vst [vmem:[%s170 + $0x10] sm:$0xff] %v6003
      %6050 = vst [vmem:[%s170 + $0x18] sm:$0xff] %v6010
      %6051 = vst [vmem:[%s170 + $0x20] sm:$0xff] %v6017
      %6052 = vst [vmem:[%s170 + $0x28] sm:$0xff] %v6024
      %6053 = vst [vmem:[%s170 + $0x30] sm:$0xff] %v6031
      %6054 = vst [vmem:[%s170 + $0x38] sm:$0xff] %v6038
      %p6055 = scmp.lt.s32.totalorder %s14, 1
      %s6056 = scalar_select %p6055, %s14, 1
      %s6057 = smul.addr %s6056, 8
      %s6058 = smul.addr %s6057, 8
      %s6059 = scalar_lea.vmem %s3, %s6058
      // Predicated region
      $region33: #{conv_block_forward.1} parent=31 // pred_check
        %p6060 = pneg %p100
      $region34: #{conv_block_forward.1} parent=31 // pred_check_branch
        %6062 = sbr.rel (%p6060) target = $region36
      $region35: #{conv_block_forward.1} parent=31 // pred_region
        _
      $region36: #{conv_block_forward.1} parent=31 // pred_fallthru
        _
    $region32: #{conv_block_forward.1} parent=5 // pred_fallthru
      _
    %p6063 = scmp.le.s32.totalorder 2, %s9
    // Predicated region
    $region37: #{conv_block_forward.1} parent=5 // pred_check
      %p6064 = pneg %p6063
    $region38: #{conv_block_forward.1} parent=5 // pred_check_branch
      %6066 = sbr.rel (%p6064) target = $region40
    $region39: #{conv_block_forward.1} parent=5 // pred_region
      %s6067 = ssub.s32 %s9, 2
      // Predicated region
      $region41: #{conv_block_forward.1} parent=39 // pred_check
        %p6068 = pneg %p106
      $region42: #{conv_block_forward.1} parent=39 // pred_check_branch
        %6070 = sbr.rel (%p6068) target = $region44
      $region43: #{conv_block_forward.1} parent=39 // pred_region
        %p6071 = scmp.lt.s32.totalorder %s15, 1
        %s6072 = scalar_select %p6071, %s15, 1
        %s6073 = smul.addr %s6072, 8
        %s6074 = smul.addr %s6073, 8
        %s6075 = scalar_lea.vmem %s3, %s6074
      $region44: #{conv_block_forward.1} parent=39 // pred_fallthru
        _
    $region40: #{conv_block_forward.1} parent=5 // pred_fallthru
      _
  $region6: #{conv_block_forward.1} parent=0 // loop_footer
    %s13 = sadd.s32 1, %s9
  $region7: #{conv_block_forward.1} parent=0 // loop_footer_branch
    %8 = sbr.rel target = $region3
  $region8: #{conv_block_forward.1} parent=0 // loop_exit
    _

</llo_original>
